<compile_context>
chip_gen: v7x
topology: tpu7x:2x2x1
jax: 0.10.0
libtpu: 0.0.40
codegen_flags: <defaults>
</compile_context>

<pallas_src>
import math
from functools import partial

import jax
import jax.numpy as jnp
from jax import lax
from jax.experimental import pallas as pl
from jax.experimental.pallas import tpu as pltpu

# ---------------- config ----------------
VOCAB = 128
HIDDEN = 32
N_HEADS = 2
HEAD_DIM = HIDDEN // N_HEADS
INTERMEDIATE = 64
N_LAYERS = 2
MAX_POS = 16
TYPE_VOCAB = 2
LN_EPS = 1e-12
NEG_INF = -1e9

_VMEM = pl.BlockSpec(memory_space=pltpu.MemorySpace.VMEM)
_SMEM = pl.BlockSpec(memory_space=pltpu.MemorySpace.SMEM)

# vecs-slab row layout: emb_ln_g, emb_ln_b, per-layer 9 rows, pool_b
_EMB_LN_G = 0
_EMB_LN_B = 1
_PER_LAYER_VECS = 9          # ln1_g, ln1_b, ln2_g, ln2_b, qb, kb, vb, ao_b, fo_b
_POOL_B = 2 + N_LAYERS * _PER_LAYER_VECS
_N_VECS = _POOL_B + 1


# ---------------- the fused kernel ----------------
def _ehr_bert_kernel(
    int_in_ref,        # [N, 3]  i32 : input_ids, token_type_ids, masked_lm_labels
    nsp_lab_ref,       # [B, 1]  i32
    pos_ref,           # [N, H]  f32 : positional embedding rows (tiled over batch)
    attn_bias_ref,     # [P, P]  f32 : block-diagonal + key-padding additive mask
    emb_tab_ref,       # [VOCAB + TYPE_VOCAB, H] f32 : word + type embedding tables
    vecs_ref,          # [_N_VECS, H] f32 : all LayerNorm params and H-sized biases
    qkvh_w_ref,        # [L*3*nH, H, dh] f32 : per-(layer, kind, head) projections
    sq_w_ref,          # [L+1, H, H] f32 : attention-output weights per layer + pooler
    fi_w_ref,          # [L, H, I] f32
    fi_b_ref,          # [L, 1, I] f32
    fo_w_ref,          # [L, I, H] f32
    head_w_ref,        # [2, H, 128] f32 : mlm_w, nsp_w (lane-padded)
    head_b_ref,        # [2, 1, 128] f32 : mlm_b, nsp_b (pad lanes at -1e9)
    lm_logits_ref,     # [N, VOCAB] out
    nsp_logits_ref,    # [B, 128]   out (wrapper slices [:, :2])
    loss_ref,          # [1, 1]     out (SMEM)
    *, batch, seq,
):
    B, S = batch, seq
    H, nH, dh = HIDDEN, N_HEADS, HEAD_DIM
    N = B * S
    scale = 1.0 / math.sqrt(dh)
    f32 = jnp.float32

    def vrow(i):
        return vecs_ref[i:i + 1, :]                                   # [1, H]

    def layernorm(x, g, b):
        mu = jnp.mean(x, axis=-1, keepdims=True)
        d = x - mu
        var = jnp.mean(d * d, axis=-1, keepdims=True)
        return d * lax.rsqrt(var + LN_EPS) * g + b

    def gelu(x):
        # TODO(synk): HF BERT uses erf-GELU; the tanh approximation is used here.
        c = math.sqrt(2.0 / math.pi)
        return 0.5 * x * (1.0 + jnp.tanh(c * (x + 0.044715 * x * x * x)))

    def softmax_rows(s):
        s = s - jnp.max(s, axis=-1, keepdims=True)
        p = jnp.exp(s)
        return p / jnp.sum(p, axis=-1, keepdims=True)

    # ---- embeddings: word one-hot matmul + type select + position rows ----
    ints = int_in_ref[...]
    ids = ints[:, 0:1]
    tt = ints[:, 1:2].astype(f32)
    lm_labels = ints[:, 2:3]

    vocab_iota = lax.broadcasted_iota(jnp.int32, (N, VOCAB), 1)
    onehot = (vocab_iota == ids).astype(f32)                          # [N, 128] lane-dense
    word = jnp.dot(onehot, emb_tab_ref[0:VOCAB, :], preferred_element_type=f32)
    type0 = emb_tab_ref[VOCAB:VOCAB + 1, :]
    type1 = emb_tab_ref[VOCAB + 1:VOCAB + 2, :]
    type_vec = type0 + (type1 - type0) * tt
    h = layernorm(word + type_vec + pos_ref[...], vrow(_EMB_LN_G), vrow(_EMB_LN_B))

    attn_bias = attn_bias_ref[...]                                    # [P, P]

    # ---- transformer encoder (unrolled; h stays resident in vregs/VMEM) ----
    for l in range(N_LAYERS):
        base = 2 + l * _PER_LAYER_VECS
        ln1_g, ln1_b = vrow(base + 0), vrow(base + 1)
        ln2_g, ln2_b = vrow(base + 2), vrow(base + 3)
        qb, kb, vb = vrow(base + 4), vrow(base + 5), vrow(base + 6)
        ao_b, fo_b = vrow(base + 7), vrow(base + 8)

        def packed_proj(kind, bias):
            # rows ordered (head, batch, seq): no lane sub-slicing of activations,
            # no transposes — just per-head dots stacked on the sublane axis.
            blocks = []
            for hd in range(nH):
                w = qkvh_w_ref[(l * 3 + kind) * nH + hd]              # [H, dh]
                b = bias[:, hd * dh:(hd + 1) * dh]                    # [1, dh]
                blocks.append(jnp.dot(h, w, preferred_element_type=f32) + b)
            return jnp.concatenate(blocks, axis=0)                    # [P, dh]

        qp = packed_proj(0, qb)
        kp = packed_proj(1, kb)
        vp = packed_proj(2, vb)

        # ONE packed score matmul (contract last dims: no materialized k^T),
        # block-diagonal + key-padding mask folded into a single additive bias.
        s = lax.dot_general(qp, kp, (((1,), (1,)), ((), ())),
                            preferred_element_type=f32) * scale + attn_bias
        p = softmax_rows(s)
        ctxp = jnp.dot(p, vp, preferred_element_type=f32)             # [P, dh]
        # single relayout back to [N, H] (heads back onto the lane axis)
        ctx = jnp.concatenate([ctxp[hd * N:(hd + 1) * N, :] for hd in range(nH)],
                              axis=1)

        attn_out = jnp.dot(ctx, sq_w_ref[l], preferred_element_type=f32) + ao_b
        h = layernorm(attn_out + h, ln1_g, ln1_b)

        inter = gelu(jnp.dot(h, fi_w_ref[l], preferred_element_type=f32) + fi_b_ref[l])
        ffn_out = jnp.dot(inter, fo_w_ref[l], preferred_element_type=f32) + fo_b
        h = layernorm(ffn_out + h, ln2_g, ln2_b)

    # ---- pooler: CLS rows selected with a tiny one-hot matmul (no gathers) ----
    sel = (lax.broadcasted_iota(jnp.int32, (B, N), 1)
           == lax.broadcasted_iota(jnp.int32, (B, N), 0) * S).astype(f32)
    cls = jnp.dot(sel, h, preferred_element_type=f32)                 # [B, H]
    pooled = jnp.tanh(jnp.dot(cls, sq_w_ref[N_LAYERS], preferred_element_type=f32)
                      + vrow(_POOL_B))

    # ---- heads (both lane-dense: 128 output lanes) ----
    lm_logits = jnp.dot(h, head_w_ref[0], preferred_element_type=f32) + head_b_ref[0]
    nsp_logits = jnp.dot(pooled, head_w_ref[1], preferred_element_type=f32) + head_b_ref[1]
    lm_logits_ref[...] = lm_logits
    nsp_logits_ref[...] = nsp_logits

    # ---- fused cross-entropy (labels as VMEM int columns; ignore negative labels) ----
    def ce_mean(logits, labels_col):
        m = jnp.max(logits, axis=-1, keepdims=True)
        lse = jnp.log(jnp.sum(jnp.exp(logits - m), axis=-1, keepdims=True)) + m
        lane = lax.broadcasted_iota(jnp.int32, logits.shape, 1)
        true_logit = jnp.sum(jnp.where(lane == labels_col, logits, 0.0),
                             axis=-1, keepdims=True)
        valid = (labels_col >= 0).astype(f32)        # ignore_index (-100 / -1) excluded
        per = (lse - true_logit) * valid
        return jnp.sum(per) / jnp.maximum(jnp.sum(valid), 1.0)

    lm_loss = ce_mean(lm_logits, lm_labels)
    nsp_loss = ce_mean(nsp_logits, nsp_lab_ref[...])
    loss_ref[0, 0] = lm_loss + nsp_loss


# ---------------- parameters (packed slabs) ----------------
def init_params(key):
    keys = iter(jax.random.split(key, 32))

    def w(shape):
        return 0.02 * jax.random.normal(next(keys), shape, dtype=jnp.float32)

    L, H, I, nH, dh = N_LAYERS, HIDDEN, INTERMEDIATE, N_HEADS, HEAD_DIM

    word_emb = w((VOCAB, H))
    type_emb = w((TYPE_VOCAB, H))
    pos_emb = w((MAX_POS, H))
    emb_tables = jnp.concatenate([word_emb, type_emb], axis=0)        # [VOCAB+2, H]

    wq, wk, wv = w((L, H, H)), w((L, H, H)), w((L, H, H))

    def per_head(x):                                                  # [L,H,H] -> [L,nH,H,dh]
        return x.reshape(L, H, nH, dh).transpose(0, 2, 1, 3)

    qkvh_w = jnp.stack([per_head(wq), per_head(wk), per_head(wv)], axis=1)
    qkvh_w = qkvh_w.reshape(L * 3 * nH, H, dh)                        # [(l*3+kind)*nH+hd, H, dh]

    ao_w = w((L, H, H))
    pool_w = w((H, H))
    sq_w = jnp.concatenate([ao_w, pool_w[None]], axis=0)              # [L+1, H, H]

    fi_w = w((L, H, I))
    fi_b = jnp.zeros((L, 1, I), jnp.float32)
    fo_w = w((L, I, H))

    mlm_w = w((H, VOCAB))
    mlm_b = jnp.zeros((1, VOCAB), jnp.float32)
    nsp_w = w((H, 2))
    nsp_b = jnp.zeros((1, 2), jnp.float32)
    nsp_w_pad = jnp.zeros((H, VOCAB), jnp.float32).at[:, :2].set(nsp_w)
    nsp_b_pad = jnp.full((1, VOCAB), NEG_INF, jnp.float32).at[:, :2].set(nsp_b)
    head_w = jnp.stack([mlm_w, nsp_w_pad], axis=0)                    # [2, H, 128]
    head_b = jnp.stack([mlm_b, nsp_b_pad], axis=0)                    # [2, 1, 128]

    ones_row = jnp.ones((1, H), jnp.float32)
    zeros_row = jnp.zeros((1, H), jnp.float32)
    rows = [ones_row, zeros_row]                                      # emb LN gamma / beta
    for _ in range(L):
        rows += [ones_row, zeros_row, ones_row, zeros_row]            # ln1_g, ln1_b, ln2_g, ln2_b
        rows += [zeros_row] * 5                                       # qb, kb, vb, ao_b, fo_b
    rows += [zeros_row]                                               # pool_b
    vecs = jnp.concatenate(rows, axis=0)
    assert vecs.shape[0] == _N_VECS

    return {"pos_emb": pos_emb, "emb_tables": emb_tables, "vecs": vecs,
            "qkvh_w": qkvh_w, "sq_w": sq_w, "fi_w": fi_w, "fi_b": fi_b,
            "fo_w": fo_w, "head_w": head_w, "head_b": head_b}


# ---------------- forward pass (mirrors EHRBERTPretrain.forward) ----------------
def ehr_bert_pretrain(params, input_ids, attention_mask, token_type_ids,
                      masked_lm_labels, next_sentence_labels):
    B, S = input_ids.shape
    N = B * S
    P = N_HEADS * N

    # pack ids / type / lm labels into one int slab; nsp labels as a tiny column
    int_in = jnp.stack([input_ids.reshape(-1), token_type_ids.reshape(-1),
                        masked_lm_labels.reshape(-1)], axis=1).astype(jnp.int32)
    nsp_lab = next_sentence_labels.reshape(B, 1).astype(jnp.int32)

    # positional rows (static slice, tiled over batch — no gather)
    pos_bias = jnp.tile(params["pos_emb"][:S], (B, 1))                # [N, H]

    # block-diagonal (per batch & head) + key-padding additive attention bias,
    # rows/cols ordered (head, batch, seq) to match the in-kernel packing
    grp = jnp.arange(P, dtype=jnp.int32) // S
    same = grp[:, None] == grp[None, :]
    key_ok = jnp.tile(attention_mask.reshape(1, N), (1, N_HEADS)) > 0
    attn_bias = jnp.where(same & key_ok, 0.0, NEG_INF).astype(jnp.float32)   # [P, P]

    lm_logits, nsp_pad, loss = pl.pallas_call(
        partial(_ehr_bert_kernel, batch=B, seq=S),
        out_shape=(
            jax.ShapeDtypeStruct((N, VOCAB), jnp.float32),
            jax.ShapeDtypeStruct((B, VOCAB), jnp.float32),
            jax.ShapeDtypeStruct((1, 1), jnp.float32),
        ),
        in_specs=[_VMEM] * 13,
        out_specs=(_VMEM, _VMEM, _SMEM),
    )(
        int_in, nsp_lab, pos_bias, attn_bias,
        params["emb_tables"], params["vecs"],
        params["qkvh_w"], params["sq_w"],
        params["fi_w"], params["fi_b"], params["fo_w"],
        params["head_w"], params["head_b"],
    )

    nsp_logits = nsp_pad[:, :2]
    return loss[0, 0], lm_logits.reshape(B, S, VOCAB), nsp_logits


# ---------------- main ----------------
if __name__ == "__main__":
    key = jax.random.PRNGKey(0)
    k_ids, k_lbl, k_nsp, k_param = jax.random.split(key, 4)

    B, S = 2, 8
    input_ids = jax.random.randint(k_ids, (B, S), 0, VOCAB, dtype=jnp.int32)
    attention_mask = jnp.ones((B, S), dtype=jnp.int32).at[:, -2:].set(0)
    token_type_ids = jnp.concatenate(
        [jnp.zeros((B, S // 2), jnp.int32), jnp.ones((B, S // 2), jnp.int32)], axis=1)
    masked_lm_labels = jax.random.randint(k_lbl, (B, S), 0, VOCAB, dtype=jnp.int32)
    next_sentence_labels = jax.random.randint(k_nsp, (B,), 0, 2, dtype=jnp.int32)

    params = init_params(k_param)

    fwd = jax.jit(ehr_bert_pretrain)
    loss, lm_logits, nsp_logits = fwd(params, input_ids, attention_mask,
                                      token_type_ids, masked_lm_labels,
                                      next_sentence_labels)
    jax.block_until_ready((loss, lm_logits, nsp_logits))

    assert lm_logits.shape == (B, S, VOCAB)
    assert nsp_logits.shape == (B, 2)
    assert bool(jnp.isfinite(loss))
    print("KERNEL_OK")
</pallas_src>

<mosaic_0001>
module attributes {stable_mosaic.version = 11 : i64} {
  func.func @_ehr_bert_kernel(%arg0: memref<16x3xi32, #tpu.memory_space<vmem>>, %arg1: memref<2x1xi32, #tpu.memory_space<vmem>>, %arg2: memref<16x32xf32, #tpu.memory_space<vmem>>, %arg3: memref<32x32xf32, #tpu.memory_space<vmem>>, %arg4: memref<130x32xf32, #tpu.memory_space<vmem>>, %arg5: memref<21x32xf32, #tpu.memory_space<vmem>>, %arg6: memref<12x32x16xf32, #tpu.memory_space<vmem>>, %arg7: memref<3x32x32xf32, #tpu.memory_space<vmem>>, %arg8: memref<2x32x64xf32, #tpu.memory_space<vmem>>, %arg9: memref<2x1x64xf32, #tpu.memory_space<vmem>>, %arg10: memref<2x64x32xf32, #tpu.memory_space<vmem>>, %arg11: memref<2x32x128xf32, #tpu.memory_space<vmem>>, %arg12: memref<2x1x128xf32, #tpu.memory_space<vmem>>, %arg13: memref<16x128xf32, #tpu.memory_space<vmem>>, %arg14: memref<2x128xf32, #tpu.memory_space<vmem>>, %arg15: memref<1x1xf32, #tpu.memory_space<smem>>) attributes {dimension_semantics = [], scalar_prefetch = 0 : i64, scratch_operands = 0 : i64, tpu.core_type = #tpu.core_type<tc>} {
    %c0 = arith.constant 0 : index
    %c0_0 = arith.constant 0 : index
    %0 = vector.load %arg0[%c0, %c0_0] : memref<16x3xi32, #tpu.memory_space<vmem>>, vector<16x3xi32>
    %1 = vector.extract_strided_slice %0 {offsets = [0, 0], sizes = [16, 1], strides = [1, 1]} : vector<16x3xi32> to vector<16x1xi32>
    %2 = vector.extract_strided_slice %0 {offsets = [0, 1], sizes = [16, 1], strides = [1, 1]} : vector<16x3xi32> to vector<16x1xi32>
    %3 = arith.sitofp %2 : vector<16x1xi32> to vector<16x1xf32>
    %4 = vector.extract_strided_slice %0 {offsets = [0, 2], sizes = [16, 1], strides = [1, 1]} : vector<16x3xi32> to vector<16x1xi32>
    %5 = tpu.iota {dimensions = array<i32: 1>} : vector<16x128xi32>
    %6 = vector.broadcast %1 : vector<16x1xi32> to vector<16x128xi32>
    %7 = arith.cmpi eq, %5, %6 : vector<16x128xi32>
    %8 = arith.extui %7 : vector<16x128xi1> to vector<16x128xi32>
    %9 = arith.sitofp %8 : vector<16x128xi32> to vector<16x128xf32>
    %c0_1 = arith.constant 0 : index
    %c0_2 = arith.constant 0 : index
    %10 = vector.load %arg4[%c0_1, %c0_2] : memref<130x32xf32, #tpu.memory_space<vmem>>, vector<128x32xf32>
    %cst = arith.constant dense<0.000000e+00> : vector<16x32xf32>
    %11 = tpu.matmul %9, %10, %cst {dimension_numbers = #tpu.dot_dimension_numbers<[1], [0], [0], [1], [0, 0, 1, 1], [], []>} : vector<16x128xf32>, vector<128x32xf32>, vector<16x32xf32> -> vector<16x32xf32>
    %c128 = arith.constant 128 : index
    %c0_3 = arith.constant 0 : index
    %12 = vector.load %arg4[%c128, %c0_3] : memref<130x32xf32, #tpu.memory_space<vmem>>, vector<1x32xf32>
    %c129 = arith.constant 129 : index
    %c0_4 = arith.constant 0 : index
    %13 = vector.load %arg4[%c129, %c0_4] : memref<130x32xf32, #tpu.memory_space<vmem>>, vector<1x32xf32>
    %14 = arith.subf %13, %12 : vector<1x32xf32>
    %15 = vector.broadcast %14 : vector<1x32xf32> to vector<16x32xf32>
    %16 = vector.broadcast %3 : vector<16x1xf32> to vector<16x32xf32>
    %17 = arith.mulf %15, %16 : vector<16x32xf32>
    %18 = vector.broadcast %12 : vector<1x32xf32> to vector<16x32xf32>
    %19 = arith.addf %18, %17 : vector<16x32xf32>
    %20 = arith.addf %11, %19 : vector<16x32xf32>
    %c0_5 = arith.constant 0 : index
    %c0_6 = arith.constant 0 : index
    %21 = vector.load %arg2[%c0_5, %c0_6] : memref<16x32xf32, #tpu.memory_space<vmem>>, vector<16x32xf32>
    %22 = arith.addf %20, %21 : vector<16x32xf32>
    %c0_7 = arith.constant 0 : index
    %c0_8 = arith.constant 0 : index
    %23 = vector.load %arg5[%c0_7, %c0_8] : memref<21x32xf32, #tpu.memory_space<vmem>>, vector<1x32xf32>
    %c1 = arith.constant 1 : index
    %c0_9 = arith.constant 0 : index
    %24 = vector.load %arg5[%c1, %c0_9] : memref<21x32xf32, #tpu.memory_space<vmem>>, vector<1x32xf32>
    %cst_10 = arith.constant dense<0.000000e+00> : vector<16xf32>
    %25 = vector.multi_reduction <add>, %22, %cst_10 [1] : vector<16x32xf32> to vector<16xf32>
    %26 = vector.shape_cast %25 : vector<16xf32> to vector<16x1xf32>
    %cst_11 = arith.constant 3.200000e+01 : f32
    %27 = vector.broadcast %cst_11 : f32 to vector<16x1xf32>
    %28 = arith.divf %26, %27 : vector<16x1xf32>
    %29 = vector.broadcast %28 : vector<16x1xf32> to vector<16x32xf32>
    %30 = arith.subf %22, %29 : vector<16x32xf32>
    %31 = arith.mulf %30, %30 : vector<16x32xf32>
    %cst_12 = arith.constant dense<0.000000e+00> : vector<16xf32>
    %32 = vector.multi_reduction <add>, %31, %cst_12 [1] : vector<16x32xf32> to vector<16xf32>
    %33 = vector.shape_cast %32 : vector<16xf32> to vector<16x1xf32>
    %cst_13 = arith.constant 3.200000e+01 : f32
    %34 = vector.broadcast %cst_13 : f32 to vector<16x1xf32>
    %35 = arith.divf %33, %34 : vector<16x1xf32>
    %cst_14 = arith.constant 9.99999996E-13 : f32
    %36 = vector.broadcast %cst_14 : f32 to vector<16x1xf32>
    %37 = arith.addf %35, %36 : vector<16x1xf32>
    %38 = math.rsqrt %37 : vector<16x1xf32>
    %39 = vector.broadcast %38 : vector<16x1xf32> to vector<16x32xf32>
    %40 = arith.mulf %30, %39 : vector<16x32xf32>
    %41 = vector.broadcast %23 : vector<1x32xf32> to vector<16x32xf32>
    %42 = arith.mulf %40, %41 : vector<16x32xf32>
    %43 = vector.broadcast %24 : vector<1x32xf32> to vector<16x32xf32>
    %44 = arith.addf %42, %43 : vector<16x32xf32>
    %c0_15 = arith.constant 0 : index
    %c0_16 = arith.constant 0 : index
    %45 = vector.load %arg3[%c0_15, %c0_16] : memref<32x32xf32, #tpu.memory_space<vmem>>, vector<32x32xf32>
    %c2 = arith.constant 2 : index
    %c0_17 = arith.constant 0 : index
    %46 = vector.load %arg5[%c2, %c0_17] : memref<21x32xf32, #tpu.memory_space<vmem>>, vector<1x32xf32>
    %c3 = arith.constant 3 : index
    %c0_18 = arith.constant 0 : index
    %47 = vector.load %arg5[%c3, %c0_18] : memref<21x32xf32, #tpu.memory_space<vmem>>, vector<1x32xf32>
    %c4 = arith.constant 4 : index
    %c0_19 = arith.constant 0 : index
    %48 = vector.load %arg5[%c4, %c0_19] : memref<21x32xf32, #tpu.memory_space<vmem>>, vector<1x32xf32>
    %c5 = arith.constant 5 : index
    %c0_20 = arith.constant 0 : index
    %49 = vector.load %arg5[%c5, %c0_20] : memref<21x32xf32, #tpu.memory_space<vmem>>, vector<1x32xf32>
    %c6 = arith.constant 6 : index
    %c0_21 = arith.constant 0 : index
    %50 = vector.load %arg5[%c6, %c0_21] : memref<21x32xf32, #tpu.memory_space<vmem>>, vector<1x32xf32>
    %c7 = arith.constant 7 : index
    %c0_22 = arith.constant 0 : index
    %51 = vector.load %arg5[%c7, %c0_22] : memref<21x32xf32, #tpu.memory_space<vmem>>, vector<1x32xf32>
    %c8 = arith.constant 8 : index
    %c0_23 = arith.constant 0 : index
    %52 = vector.load %arg5[%c8, %c0_23] : memref<21x32xf32, #tpu.memory_space<vmem>>, vector<1x32xf32>
    %c9 = arith.constant 9 : index
    %c0_24 = arith.constant 0 : index
    %53 = vector.load %arg5[%c9, %c0_24] : memref<21x32xf32, #tpu.memory_space<vmem>>, vector<1x32xf32>
    %c10 = arith.constant 10 : index
    %c0_25 = arith.constant 0 : index
    %54 = vector.load %arg5[%c10, %c0_25] : memref<21x32xf32, #tpu.memory_space<vmem>>, vector<1x32xf32>
    %c0_26 = arith.constant 0 : index
    %c0_27 = arith.constant 0 : index
    %c0_28 = arith.constant 0 : index
    %55 = vector.load %arg6[%c0_26, %c0_27, %c0_28] : memref<12x32x16xf32, #tpu.memory_space<vmem>>, vector<1x32x16xf32>
    %56 = vector.shape_cast %55 : vector<1x32x16xf32> to vector<32x16xf32>
    %57 = vector.extract_strided_slice %50 {offsets = [0, 0], sizes = [1, 16], strides = [1, 1]} : vector<1x32xf32> to vector<1x16xf32>
    %cst_29 = arith.constant dense<0.000000e+00> : vector<16x16xf32>
    %58 = tpu.matmul %44, %56, %cst_29 {dimension_numbers = #tpu.dot_dimension_numbers<[1], [0], [0], [1], [0, 0, 1, 1], [], []>} : vector<16x32xf32>, vector<32x16xf32>, vector<16x16xf32> -> vector<16x16xf32>
    %59 = vector.broadcast %57 : vector<1x16xf32> to vector<16x16xf32>
    %60 = arith.addf %58, %59 : vector<16x16xf32>
    %c1_30 = arith.constant 1 : index
    %c0_31 = arith.constant 0 : index
    %c0_32 = arith.constant 0 : index
    %61 = vector.load %arg6[%c1_30, %c0_31, %c0_32] : memref<12x32x16xf32, #tpu.memory_space<vmem>>, vector<1x32x16xf32>
    %62 = vector.shape_cast %61 : vector<1x32x16xf32> to vector<32x16xf32>
    %63 = vector.extract_strided_slice %50 {offsets = [0, 16], sizes = [1, 16], strides = [1, 1]} : vector<1x32xf32> to vector<1x16xf32>
    %cst_33 = arith.constant dense<0.000000e+00> : vector<16x16xf32>
    %64 = tpu.matmul %44, %62, %cst_33 {dimension_numbers = #tpu.dot_dimension_numbers<[1], [0], [0], [1], [0, 0, 1, 1], [], []>} : vector<16x32xf32>, vector<32x16xf32>, vector<16x16xf32> -> vector<16x16xf32>
    %65 = vector.broadcast %63 : vector<1x16xf32> to vector<16x16xf32>
    %66 = arith.addf %64, %65 : vector<16x16xf32>
    %67 = tpu.concatenate %60, %66 in 0 : vector<16x16xf32>, vector<16x16xf32> -> vector<32x16xf32>
    %c2_34 = arith.constant 2 : index
    %c0_35 = arith.constant 0 : index
    %c0_36 = arith.constant 0 : index
    %68 = vector.load %arg6[%c2_34, %c0_35, %c0_36] : memref<12x32x16xf32, #tpu.memory_space<vmem>>, vector<1x32x16xf32>
    %69 = vector.shape_cast %68 : vector<1x32x16xf32> to vector<32x16xf32>
    %70 = vector.extract_strided_slice %51 {offsets = [0, 0], sizes = [1, 16], strides = [1, 1]} : vector<1x32xf32> to vector<1x16xf32>
    %cst_37 = arith.constant dense<0.000000e+00> : vector<16x16xf32>
    %71 = tpu.matmul %44, %69, %cst_37 {dimension_numbers = #tpu.dot_dimension_numbers<[1], [0], [0], [1], [0, 0, 1, 1], [], []>} : vector<16x32xf32>, vector<32x16xf32>, vector<16x16xf32> -> vector<16x16xf32>
    %72 = vector.broadcast %70 : vector<1x16xf32> to vector<16x16xf32>
    %73 = arith.addf %71, %72 : vector<16x16xf32>
    %c3_38 = arith.constant 3 : index
    %c0_39 = arith.constant 0 : index
    %c0_40 = arith.constant 0 : index
    %74 = vector.load %arg6[%c3_38, %c0_39, %c0_40] : memref<12x32x16xf32, #tpu.memory_space<vmem>>, vector<1x32x16xf32>
    %75 = vector.shape_cast %74 : vector<1x32x16xf32> to vector<32x16xf32>
    %76 = vector.extract_strided_slice %51 {offsets = [0, 16], sizes = [1, 16], strides = [1, 1]} : vector<1x32xf32> to vector<1x16xf32>
    %cst_41 = arith.constant dense<0.000000e+00> : vector<16x16xf32>
    %77 = tpu.matmul %44, %75, %cst_41 {dimension_numbers = #tpu.dot_dimension_numbers<[1], [0], [0], [1], [0, 0, 1, 1], [], []>} : vector<16x32xf32>, vector<32x16xf32>, vector<16x16xf32> -> vector<16x16xf32>
    %78 = vector.broadcast %76 : vector<1x16xf32> to vector<16x16xf32>
    %79 = arith.addf %77, %78 : vector<16x16xf32>
    %80 = tpu.concatenate %73, %79 in 0 : vector<16x16xf32>, vector<16x16xf32> -> vector<32x16xf32>
    %c4_42 = arith.constant 4 : index
    %c0_43 = arith.constant 0 : index
    %c0_44 = arith.constant 0 : index
    %81 = vector.load %arg6[%c4_42, %c0_43, %c0_44] : memref<12x32x16xf32, #tpu.memory_space<vmem>>, vector<1x32x16xf32>
    %82 = vector.shape_cast %81 : vector<1x32x16xf32> to vector<32x16xf32>
    %83 = vector.extract_strided_slice %52 {offsets = [0, 0], sizes = [1, 16], strides = [1, 1]} : vector<1x32xf32> to vector<1x16xf32>
    %cst_45 = arith.constant dense<0.000000e+00> : vector<16x16xf32>
    %84 = tpu.matmul %44, %82, %cst_45 {dimension_numbers = #tpu.dot_dimension_numbers<[1], [0], [0], [1], [0, 0, 1, 1], [], []>} : vector<16x32xf32>, vector<32x16xf32>, vector<16x16xf32> -> vector<16x16xf32>
    %85 = vector.broadcast %83 : vector<1x16xf32> to vector<16x16xf32>
    %86 = arith.addf %84, %85 : vector<16x16xf32>
    %c5_46 = arith.constant 5 : index
    %c0_47 = arith.constant 0 : index
    %c0_48 = arith.constant 0 : index
    %87 = vector.load %arg6[%c5_46, %c0_47, %c0_48] : memref<12x32x16xf32, #tpu.memory_space<vmem>>, vector<1x32x16xf32>
    %88 = vector.shape_cast %87 : vector<1x32x16xf32> to vector<32x16xf32>
    %89 = vector.extract_strided_slice %52 {offsets = [0, 16], sizes = [1, 16], strides = [1, 1]} : vector<1x32xf32> to vector<1x16xf32>
    %cst_49 = arith.constant dense<0.000000e+00> : vector<16x16xf32>
    %90 = tpu.matmul %44, %88, %cst_49 {dimension_numbers = #tpu.dot_dimension_numbers<[1], [0], [0], [1], [0, 0, 1, 1], [], []>} : vector<16x32xf32>, vector<32x16xf32>, vector<16x16xf32> -> vector<16x16xf32>
    %91 = vector.broadcast %89 : vector<1x16xf32> to vector<16x16xf32>
    %92 = arith.addf %90, %91 : vector<16x16xf32>
    %93 = tpu.concatenate %86, %92 in 0 : vector<16x16xf32>, vector<16x16xf32> -> vector<32x16xf32>
    %cst_50 = arith.constant dense<0.000000e+00> : vector<32x32xf32>
    %94 = tpu.matmul %67, %80, %cst_50 {dimension_numbers = #tpu.dot_dimension_numbers<[1], [1], [0], [0], [0, 0, 1, 0], [], []>} : vector<32x16xf32>, vector<32x16xf32>, vector<32x32xf32> -> vector<32x32xf32>
    %cst_51 = arith.constant 2.500000e-01 : f32
    %95 = vector.broadcast %cst_51 : f32 to vector<32x32xf32>
    %96 = arith.mulf %94, %95 : vector<32x32xf32>
    %97 = arith.addf %96, %45 : vector<32x32xf32>
    %cst_52 = arith.constant dense<0xFF800000> : vector<32xf32>
    %98 = vector.multi_reduction <maximumf>, %97, %cst_52 [1] : vector<32x32xf32> to vector<32xf32>
    %99 = vector.shape_cast %98 : vector<32xf32> to vector<32x1xf32>
    %100 = vector.broadcast %99 : vector<32x1xf32> to vector<32x32xf32>
    %101 = arith.subf %97, %100 : vector<32x32xf32>
    %102 = math.exp %101 : vector<32x32xf32>
    %cst_53 = arith.constant dense<0.000000e+00> : vector<32xf32>
    %103 = vector.multi_reduction <add>, %102, %cst_53 [1] : vector<32x32xf32> to vector<32xf32>
    %104 = vector.shape_cast %103 : vector<32xf32> to vector<32x1xf32>
    %105 = vector.broadcast %104 : vector<32x1xf32> to vector<32x32xf32>
    %106 = arith.divf %102, %105 : vector<32x32xf32>
    %cst_54 = arith.constant dense<0.000000e+00> : vector<32x16xf32>
    %107 = tpu.matmul %106, %93, %cst_54 {dimension_numbers = #tpu.dot_dimension_numbers<[1], [0], [0], [1], [0, 0, 1, 1], [], []>} : vector<32x32xf32>, vector<32x16xf32>, vector<32x16xf32> -> vector<32x16xf32>
    %108 = vector.extract_strided_slice %107 {offsets = [0, 0], sizes = [16, 16], strides = [1, 1]} : vector<32x16xf32> to vector<16x16xf32>
    %109 = vector.extract_strided_slice %107 {offsets = [16, 0], sizes = [16, 16], strides = [1, 1]} : vector<32x16xf32> to vector<16x16xf32>
    %110 = tpu.concatenate %108, %109 in 1 : vector<16x16xf32>, vector<16x16xf32> -> vector<16x32xf32>
    %c0_55 = arith.constant 0 : index
    %c0_56 = arith.constant 0 : index
    %c0_57 = arith.constant 0 : index
    %111 = vector.load %arg7[%c0_55, %c0_56, %c0_57] : memref<3x32x32xf32, #tpu.memory_space<vmem>>, vector<1x32x32xf32>
    %112 = vector.shape_cast %111 : vector<1x32x32xf32> to vector<32x32xf32>
    %cst_58 = arith.constant dense<0.000000e+00> : vector<16x32xf32>
    %113 = tpu.matmul %110, %112, %cst_58 {dimension_numbers = #tpu.dot_dimension_numbers<[1], [0], [0], [1], [0, 0, 1, 1], [], []>} : vector<16x32xf32>, vector<32x32xf32>, vector<16x32xf32> -> vector<16x32xf32>
    %114 = vector.broadcast %53 : vector<1x32xf32> to vector<16x32xf32>
    %115 = arith.addf %113, %114 : vector<16x32xf32>
    %116 = arith.addf %115, %44 : vector<16x32xf32>
    %cst_59 = arith.constant dense<0.000000e+00> : vector<16xf32>
    %117 = vector.multi_reduction <add>, %116, %cst_59 [1] : vector<16x32xf32> to vector<16xf32>
    %118 = vector.shape_cast %117 : vector<16xf32> to vector<16x1xf32>
    %cst_60 = arith.constant 3.200000e+01 : f32
    %119 = vector.broadcast %cst_60 : f32 to vector<16x1xf32>
    %120 = arith.divf %118, %119 : vector<16x1xf32>
    %121 = vector.broadcast %120 : vector<16x1xf32> to vector<16x32xf32>
    %122 = arith.subf %116, %121 : vector<16x32xf32>
    %123 = arith.mulf %122, %122 : vector<16x32xf32>
    %cst_61 = arith.constant dense<0.000000e+00> : vector<16xf32>
    %124 = vector.multi_reduction <add>, %123, %cst_61 [1] : vector<16x32xf32> to vector<16xf32>
    %125 = vector.shape_cast %124 : vector<16xf32> to vector<16x1xf32>
    %cst_62 = arith.constant 3.200000e+01 : f32
    %126 = vector.broadcast %cst_62 : f32 to vector<16x1xf32>
    %127 = arith.divf %125, %126 : vector<16x1xf32>
    %cst_63 = arith.constant 9.99999996E-13 : f32
    %128 = vector.broadcast %cst_63 : f32 to vector<16x1xf32>
    %129 = arith.addf %127, %128 : vector<16x1xf32>
    %130 = math.rsqrt %129 : vector<16x1xf32>
    %131 = vector.broadcast %130 : vector<16x1xf32> to vector<16x32xf32>
    %132 = arith.mulf %122, %131 : vector<16x32xf32>
    %133 = vector.broadcast %46 : vector<1x32xf32> to vector<16x32xf32>
    %134 = arith.mulf %132, %133 : vector<16x32xf32>
    %135 = vector.broadcast %47 : vector<1x32xf32> to vector<16x32xf32>
    %136 = arith.addf %134, %135 : vector<16x32xf32>
    %c0_64 = arith.constant 0 : index
    %c0_65 = arith.constant 0 : index
    %c0_66 = arith.constant 0 : index
    %137 = vector.load %arg8[%c0_64, %c0_65, %c0_66] : memref<2x32x64xf32, #tpu.memory_space<vmem>>, vector<1x32x64xf32>
    %138 = vector.shape_cast %137 : vector<1x32x64xf32> to vector<32x64xf32>
    %cst_67 = arith.constant dense<0.000000e+00> : vector<16x64xf32>
    %139 = tpu.matmul %136, %138, %cst_67 {dimension_numbers = #tpu.dot_dimension_numbers<[1], [0], [0], [1], [0, 0, 1, 1], [], []>} : vector<16x32xf32>, vector<32x64xf32>, vector<16x64xf32> -> vector<16x64xf32>
    %c0_68 = arith.constant 0 : index
    %c0_69 = arith.constant 0 : index
    %c0_70 = arith.constant 0 : index
    %140 = vector.load %arg9[%c0_68, %c0_69, %c0_70] : memref<2x1x64xf32, #tpu.memory_space<vmem>>, vector<1x1x64xf32>
    %141 = vector.shape_cast %140 : vector<1x1x64xf32> to vector<1x64xf32>
    %142 = vector.broadcast %141 : vector<1x64xf32> to vector<16x64xf32>
    %143 = arith.addf %139, %142 : vector<16x64xf32>
    %cst_71 = arith.constant 5.000000e-01 : f32
    %144 = vector.broadcast %cst_71 : f32 to vector<16x64xf32>
    %145 = arith.mulf %144, %143 : vector<16x64xf32>
    %cst_72 = arith.constant 4.471500e-02 : f32
    %146 = vector.broadcast %cst_72 : f32 to vector<16x64xf32>
    %147 = arith.mulf %146, %143 : vector<16x64xf32>
    %148 = arith.mulf %147, %143 : vector<16x64xf32>
    %149 = arith.mulf %148, %143 : vector<16x64xf32>
    %150 = arith.addf %143, %149 : vector<16x64xf32>
    %cst_73 = arith.constant 0.797884583 : f32
    %151 = vector.broadcast %cst_73 : f32 to vector<16x64xf32>
    %152 = arith.mulf %151, %150 : vector<16x64xf32>
    %153 = math.tanh %152 : vector<16x64xf32>
    %cst_74 = arith.constant 1.000000e+00 : f32
    %154 = vector.broadcast %cst_74 : f32 to vector<16x64xf32>
    %155 = arith.addf %154, %153 : vector<16x64xf32>
    %156 = arith.mulf %145, %155 : vector<16x64xf32>
    %c0_75 = arith.constant 0 : index
    %c0_76 = arith.constant 0 : index
    %c0_77 = arith.constant 0 : index
    %157 = vector.load %arg10[%c0_75, %c0_76, %c0_77] : memref<2x64x32xf32, #tpu.memory_space<vmem>>, vector<1x64x32xf32>
    %158 = vector.shape_cast %157 : vector<1x64x32xf32> to vector<64x32xf32>
    %cst_78 = arith.constant dense<0.000000e+00> : vector<16x32xf32>
    %159 = tpu.matmul %156, %158, %cst_78 {dimension_numbers = #tpu.dot_dimension_numbers<[1], [0], [0], [1], [0, 0, 1, 1], [], []>} : vector<16x64xf32>, vector<64x32xf32>, vector<16x32xf32> -> vector<16x32xf32>
    %160 = vector.broadcast %54 : vector<1x32xf32> to vector<16x32xf32>
    %161 = arith.addf %159, %160 : vector<16x32xf32>
    %162 = arith.addf %161, %136 : vector<16x32xf32>
    %cst_79 = arith.constant dense<0.000000e+00> : vector<16xf32>
    %163 = vector.multi_reduction <add>, %162, %cst_79 [1] : vector<16x32xf32> to vector<16xf32>
    %164 = vector.shape_cast %163 : vector<16xf32> to vector<16x1xf32>
    %cst_80 = arith.constant 3.200000e+01 : f32
    %165 = vector.broadcast %cst_80 : f32 to vector<16x1xf32>
    %166 = arith.divf %164, %165 : vector<16x1xf32>
    %167 = vector.broadcast %166 : vector<16x1xf32> to vector<16x32xf32>
    %168 = arith.subf %162, %167 : vector<16x32xf32>
    %169 = arith.mulf %168, %168 : vector<16x32xf32>
    %cst_81 = arith.constant dense<0.000000e+00> : vector<16xf32>
    %170 = vector.multi_reduction <add>, %169, %cst_81 [1] : vector<16x32xf32> to vector<16xf32>
    %171 = vector.shape_cast %170 : vector<16xf32> to vector<16x1xf32>
    %cst_82 = arith.constant 3.200000e+01 : f32
    %172 = vector.broadcast %cst_82 : f32 to vector<16x1xf32>
    %173 = arith.divf %171, %172 : vector<16x1xf32>
    %cst_83 = arith.constant 9.99999996E-13 : f32
    %174 = vector.broadcast %cst_83 : f32 to vector<16x1xf32>
    %175 = arith.addf %173, %174 : vector<16x1xf32>
    %176 = math.rsqrt %175 : vector<16x1xf32>
    %177 = vector.broadcast %176 : vector<16x1xf32> to vector<16x32xf32>
    %178 = arith.mulf %168, %177 : vector<16x32xf32>
    %179 = vector.broadcast %48 : vector<1x32xf32> to vector<16x32xf32>
    %180 = arith.mulf %178, %179 : vector<16x32xf32>
    %181 = vector.broadcast %49 : vector<1x32xf32> to vector<16x32xf32>
    %182 = arith.addf %180, %181 : vector<16x32xf32>
    %c11 = arith.constant 11 : index
    %c0_84 = arith.constant 0 : index
    %183 = vector.load %arg5[%c11, %c0_84] : memref<21x32xf32, #tpu.memory_space<vmem>>, vector<1x32xf32>
    %c12 = arith.constant 12 : index
    %c0_85 = arith.constant 0 : index
    %184 = vector.load %arg5[%c12, %c0_85] : memref<21x32xf32, #tpu.memory_space<vmem>>, vector<1x32xf32>
    %c13 = arith.constant 13 : index
    %c0_86 = arith.constant 0 : index
    %185 = vector.load %arg5[%c13, %c0_86] : memref<21x32xf32, #tpu.memory_space<vmem>>, vector<1x32xf32>
    %c14 = arith.constant 14 : index
    %c0_87 = arith.constant 0 : index
    %186 = vector.load %arg5[%c14, %c0_87] : memref<21x32xf32, #tpu.memory_space<vmem>>, vector<1x32xf32>
    %c15 = arith.constant 15 : index
    %c0_88 = arith.constant 0 : index
    %187 = vector.load %arg5[%c15, %c0_88] : memref<21x32xf32, #tpu.memory_space<vmem>>, vector<1x32xf32>
    %c16 = arith.constant 16 : index
    %c0_89 = arith.constant 0 : index
    %188 = vector.load %arg5[%c16, %c0_89] : memref<21x32xf32, #tpu.memory_space<vmem>>, vector<1x32xf32>
    %c17 = arith.constant 17 : index
    %c0_90 = arith.constant 0 : index
    %189 = vector.load %arg5[%c17, %c0_90] : memref<21x32xf32, #tpu.memory_space<vmem>>, vector<1x32xf32>
    %c18 = arith.constant 18 : index
    %c0_91 = arith.constant 0 : index
    %190 = vector.load %arg5[%c18, %c0_91] : memref<21x32xf32, #tpu.memory_space<vmem>>, vector<1x32xf32>
    %c19 = arith.constant 19 : index
    %c0_92 = arith.constant 0 : index
    %191 = vector.load %arg5[%c19, %c0_92] : memref<21x32xf32, #tpu.memory_space<vmem>>, vector<1x32xf32>
    %c6_93 = arith.constant 6 : index
    %c0_94 = arith.constant 0 : index
    %c0_95 = arith.constant 0 : index
    %192 = vector.load %arg6[%c6_93, %c0_94, %c0_95] : memref<12x32x16xf32, #tpu.memory_space<vmem>>, vector<1x32x16xf32>
    %193 = vector.shape_cast %192 : vector<1x32x16xf32> to vector<32x16xf32>
    %194 = vector.extract_strided_slice %187 {offsets = [0, 0], sizes = [1, 16], strides = [1, 1]} : vector<1x32xf32> to vector<1x16xf32>
    %cst_96 = arith.constant dense<0.000000e+00> : vector<16x16xf32>
    %195 = tpu.matmul %182, %193, %cst_96 {dimension_numbers = #tpu.dot_dimension_numbers<[1], [0], [0], [1], [0, 0, 1, 1], [], []>} : vector<16x32xf32>, vector<32x16xf32>, vector<16x16xf32> -> vector<16x16xf32>
    %196 = vector.broadcast %194 : vector<1x16xf32> to vector<16x16xf32>
    %197 = arith.addf %195, %196 : vector<16x16xf32>
    %c7_97 = arith.constant 7 : index
    %c0_98 = arith.constant 0 : index
    %c0_99 = arith.constant 0 : index
    %198 = vector.load %arg6[%c7_97, %c0_98, %c0_99] : memref<12x32x16xf32, #tpu.memory_space<vmem>>, vector<1x32x16xf32>
    %199 = vector.shape_cast %198 : vector<1x32x16xf32> to vector<32x16xf32>
    %200 = vector.extract_strided_slice %187 {offsets = [0, 16], sizes = [1, 16], strides = [1, 1]} : vector<1x32xf32> to vector<1x16xf32>
    %cst_100 = arith.constant dense<0.000000e+00> : vector<16x16xf32>
    %201 = tpu.matmul %182, %199, %cst_100 {dimension_numbers = #tpu.dot_dimension_numbers<[1], [0], [0], [1], [0, 0, 1, 1], [], []>} : vector<16x32xf32>, vector<32x16xf32>, vector<16x16xf32> -> vector<16x16xf32>
    %202 = vector.broadcast %200 : vector<1x16xf32> to vector<16x16xf32>
    %203 = arith.addf %201, %202 : vector<16x16xf32>
    %204 = tpu.concatenate %197, %203 in 0 : vector<16x16xf32>, vector<16x16xf32> -> vector<32x16xf32>
    %c8_101 = arith.constant 8 : index
    %c0_102 = arith.constant 0 : index
    %c0_103 = arith.constant 0 : index
    %205 = vector.load %arg6[%c8_101, %c0_102, %c0_103] : memref<12x32x16xf32, #tpu.memory_space<vmem>>, vector<1x32x16xf32>
    %206 = vector.shape_cast %205 : vector<1x32x16xf32> to vector<32x16xf32>
    %207 = vector.extract_strided_slice %188 {offsets = [0, 0], sizes = [1, 16], strides = [1, 1]} : vector<1x32xf32> to vector<1x16xf32>
    %cst_104 = arith.constant dense<0.000000e+00> : vector<16x16xf32>
    %208 = tpu.matmul %182, %206, %cst_104 {dimension_numbers = #tpu.dot_dimension_numbers<[1], [0], [0], [1], [0, 0, 1, 1], [], []>} : vector<16x32xf32>, vector<32x16xf32>, vector<16x16xf32> -> vector<16x16xf32>
    %209 = vector.broadcast %207 : vector<1x16xf32> to vector<16x16xf32>
    %210 = arith.addf %208, %209 : vector<16x16xf32>
    %c9_105 = arith.constant 9 : index
    %c0_106 = arith.constant 0 : index
    %c0_107 = arith.constant 0 : index
    %211 = vector.load %arg6[%c9_105, %c0_106, %c0_107] : memref<12x32x16xf32, #tpu.memory_space<vmem>>, vector<1x32x16xf32>
    %212 = vector.shape_cast %211 : vector<1x32x16xf32> to vector<32x16xf32>
    %213 = vector.extract_strided_slice %188 {offsets = [0, 16], sizes = [1, 16], strides = [1, 1]} : vector<1x32xf32> to vector<1x16xf32>
    %cst_108 = arith.constant dense<0.000000e+00> : vector<16x16xf32>
    %214 = tpu.matmul %182, %212, %cst_108 {dimension_numbers = #tpu.dot_dimension_numbers<[1], [0], [0], [1], [0, 0, 1, 1], [], []>} : vector<16x32xf32>, vector<32x16xf32>, vector<16x16xf32> -> vector<16x16xf32>
    %215 = vector.broadcast %213 : vector<1x16xf32> to vector<16x16xf32>
    %216 = arith.addf %214, %215 : vector<16x16xf32>
    %217 = tpu.concatenate %210, %216 in 0 : vector<16x16xf32>, vector<16x16xf32> -> vector<32x16xf32>
    %c10_109 = arith.constant 10 : index
    %c0_110 = arith.constant 0 : index
    %c0_111 = arith.constant 0 : index
    %218 = vector.load %arg6[%c10_109, %c0_110, %c0_111] : memref<12x32x16xf32, #tpu.memory_space<vmem>>, vector<1x32x16xf32>
    %219 = vector.shape_cast %218 : vector<1x32x16xf32> to vector<32x16xf32>
    %220 = vector.extract_strided_slice %189 {offsets = [0, 0], sizes = [1, 16], strides = [1, 1]} : vector<1x32xf32> to vector<1x16xf32>
    %cst_112 = arith.constant dense<0.000000e+00> : vector<16x16xf32>
    %221 = tpu.matmul %182, %219, %cst_112 {dimension_numbers = #tpu.dot_dimension_numbers<[1], [0], [0], [1], [0, 0, 1, 1], [], []>} : vector<16x32xf32>, vector<32x16xf32>, vector<16x16xf32> -> vector<16x16xf32>
    %222 = vector.broadcast %220 : vector<1x16xf32> to vector<16x16xf32>
    %223 = arith.addf %221, %222 : vector<16x16xf32>
    %c11_113 = arith.constant 11 : index
    %c0_114 = arith.constant 0 : index
    %c0_115 = arith.constant 0 : index
    %224 = vector.load %arg6[%c11_113, %c0_114, %c0_115] : memref<12x32x16xf32, #tpu.memory_space<vmem>>, vector<1x32x16xf32>
    %225 = vector.shape_cast %224 : vector<1x32x16xf32> to vector<32x16xf32>
    %226 = vector.extract_strided_slice %189 {offsets = [0, 16], sizes = [1, 16], strides = [1, 1]} : vector<1x32xf32> to vector<1x16xf32>
    %cst_116 = arith.constant dense<0.000000e+00> : vector<16x16xf32>
    %227 = tpu.matmul %182, %225, %cst_116 {dimension_numbers = #tpu.dot_dimension_numbers<[1], [0], [0], [1], [0, 0, 1, 1], [], []>} : vector<16x32xf32>, vector<32x16xf32>, vector<16x16xf32> -> vector<16x16xf32>
    %228 = vector.broadcast %226 : vector<1x16xf32> to vector<16x16xf32>
    %229 = arith.addf %227, %228 : vector<16x16xf32>
    %230 = tpu.concatenate %223, %229 in 0 : vector<16x16xf32>, vector<16x16xf32> -> vector<32x16xf32>
    %cst_117 = arith.constant dense<0.000000e+00> : vector<32x32xf32>
    %231 = tpu.matmul %204, %217, %cst_117 {dimension_numbers = #tpu.dot_dimension_numbers<[1], [1], [0], [0], [0, 0, 1, 0], [], []>} : vector<32x16xf32>, vector<32x16xf32>, vector<32x32xf32> -> vector<32x32xf32>
    %cst_118 = arith.constant 2.500000e-01 : f32
    %232 = vector.broadcast %cst_118 : f32 to vector<32x32xf32>
    %233 = arith.mulf %231, %232 : vector<32x32xf32>
    %234 = arith.addf %233, %45 : vector<32x32xf32>
    %cst_119 = arith.constant dense<0xFF800000> : vector<32xf32>
    %235 = vector.multi_reduction <maximumf>, %234, %cst_119 [1] : vector<32x32xf32> to vector<32xf32>
    %236 = vector.shape_cast %235 : vector<32xf32> to vector<32x1xf32>
    %237 = vector.broadcast %236 : vector<32x1xf32> to vector<32x32xf32>
    %238 = arith.subf %234, %237 : vector<32x32xf32>
    %239 = math.exp %238 : vector<32x32xf32>
    %cst_120 = arith.constant dense<0.000000e+00> : vector<32xf32>
    %240 = vector.multi_reduction <add>, %239, %cst_120 [1] : vector<32x32xf32> to vector<32xf32>
    %241 = vector.shape_cast %240 : vector<32xf32> to vector<32x1xf32>
    %242 = vector.broadcast %241 : vector<32x1xf32> to vector<32x32xf32>
    %243 = arith.divf %239, %242 : vector<32x32xf32>
    %cst_121 = arith.constant dense<0.000000e+00> : vector<32x16xf32>
    %244 = tpu.matmul %243, %230, %cst_121 {dimension_numbers = #tpu.dot_dimension_numbers<[1], [0], [0], [1], [0, 0, 1, 1], [], []>} : vector<32x32xf32>, vector<32x16xf32>, vector<32x16xf32> -> vector<32x16xf32>
    %245 = vector.extract_strided_slice %244 {offsets = [0, 0], sizes = [16, 16], strides = [1, 1]} : vector<32x16xf32> to vector<16x16xf32>
    %246 = vector.extract_strided_slice %244 {offsets = [16, 0], sizes = [16, 16], strides = [1, 1]} : vector<32x16xf32> to vector<16x16xf32>
    %247 = tpu.concatenate %245, %246 in 1 : vector<16x16xf32>, vector<16x16xf32> -> vector<16x32xf32>
    %c1_122 = arith.constant 1 : index
    %c0_123 = arith.constant 0 : index
    %c0_124 = arith.constant 0 : index
    %248 = vector.load %arg7[%c1_122, %c0_123, %c0_124] : memref<3x32x32xf32, #tpu.memory_space<vmem>>, vector<1x32x32xf32>
    %249 = vector.shape_cast %248 : vector<1x32x32xf32> to vector<32x32xf32>
    %cst_125 = arith.constant dense<0.000000e+00> : vector<16x32xf32>
    %250 = tpu.matmul %247, %249, %cst_125 {dimension_numbers = #tpu.dot_dimension_numbers<[1], [0], [0], [1], [0, 0, 1, 1], [], []>} : vector<16x32xf32>, vector<32x32xf32>, vector<16x32xf32> -> vector<16x32xf32>
    %251 = vector.broadcast %190 : vector<1x32xf32> to vector<16x32xf32>
    %252 = arith.addf %250, %251 : vector<16x32xf32>
    %253 = arith.addf %252, %182 : vector<16x32xf32>
    %cst_126 = arith.constant dense<0.000000e+00> : vector<16xf32>
    %254 = vector.multi_reduction <add>, %253, %cst_126 [1] : vector<16x32xf32> to vector<16xf32>
    %255 = vector.shape_cast %254 : vector<16xf32> to vector<16x1xf32>
    %cst_127 = arith.constant 3.200000e+01 : f32
    %256 = vector.broadcast %cst_127 : f32 to vector<16x1xf32>
    %257 = arith.divf %255, %256 : vector<16x1xf32>
    %258 = vector.broadcast %257 : vector<16x1xf32> to vector<16x32xf32>
    %259 = arith.subf %253, %258 : vector<16x32xf32>
    %260 = arith.mulf %259, %259 : vector<16x32xf32>
    %cst_128 = arith.constant dense<0.000000e+00> : vector<16xf32>
    %261 = vector.multi_reduction <add>, %260, %cst_128 [1] : vector<16x32xf32> to vector<16xf32>
    %262 = vector.shape_cast %261 : vector<16xf32> to vector<16x1xf32>
    %cst_129 = arith.constant 3.200000e+01 : f32
    %263 = vector.broadcast %cst_129 : f32 to vector<16x1xf32>
    %264 = arith.divf %262, %263 : vector<16x1xf32>
    %cst_130 = arith.constant 9.99999996E-13 : f32
    %265 = vector.broadcast %cst_130 : f32 to vector<16x1xf32>
    %266 = arith.addf %264, %265 : vector<16x1xf32>
    %267 = math.rsqrt %266 : vector<16x1xf32>
    %268 = vector.broadcast %267 : vector<16x1xf32> to vector<16x32xf32>
    %269 = arith.mulf %259, %268 : vector<16x32xf32>
    %270 = vector.broadcast %183 : vector<1x32xf32> to vector<16x32xf32>
    %271 = arith.mulf %269, %270 : vector<16x32xf32>
    %272 = vector.broadcast %184 : vector<1x32xf32> to vector<16x32xf32>
    %273 = arith.addf %271, %272 : vector<16x32xf32>
    %c1_131 = arith.constant 1 : index
    %c0_132 = arith.constant 0 : index
    %c0_133 = arith.constant 0 : index
    %274 = vector.load %arg8[%c1_131, %c0_132, %c0_133] : memref<2x32x64xf32, #tpu.memory_space<vmem>>, vector<1x32x64xf32>
    %275 = vector.shape_cast %274 : vector<1x32x64xf32> to vector<32x64xf32>
    %cst_134 = arith.constant dense<0.000000e+00> : vector<16x64xf32>
    %276 = tpu.matmul %273, %275, %cst_134 {dimension_numbers = #tpu.dot_dimension_numbers<[1], [0], [0], [1], [0, 0, 1, 1], [], []>} : vector<16x32xf32>, vector<32x64xf32>, vector<16x64xf32> -> vector<16x64xf32>
    %c1_135 = arith.constant 1 : index
    %c0_136 = arith.constant 0 : index
    %c0_137 = arith.constant 0 : index
    %277 = vector.load %arg9[%c1_135, %c0_136, %c0_137] : memref<2x1x64xf32, #tpu.memory_space<vmem>>, vector<1x1x64xf32>
    %278 = vector.shape_cast %277 : vector<1x1x64xf32> to vector<1x64xf32>
    %279 = vector.broadcast %278 : vector<1x64xf32> to vector<16x64xf32>
    %280 = arith.addf %276, %279 : vector<16x64xf32>
    %cst_138 = arith.constant 5.000000e-01 : f32
    %281 = vector.broadcast %cst_138 : f32 to vector<16x64xf32>
    %282 = arith.mulf %281, %280 : vector<16x64xf32>
    %cst_139 = arith.constant 4.471500e-02 : f32
    %283 = vector.broadcast %cst_139 : f32 to vector<16x64xf32>
    %284 = arith.mulf %283, %280 : vector<16x64xf32>
    %285 = arith.mulf %284, %280 : vector<16x64xf32>
    %286 = arith.mulf %285, %280 : vector<16x64xf32>
    %287 = arith.addf %280, %286 : vector<16x64xf32>
    %cst_140 = arith.constant 0.797884583 : f32
    %288 = vector.broadcast %cst_140 : f32 to vector<16x64xf32>
    %289 = arith.mulf %288, %287 : vector<16x64xf32>
    %290 = math.tanh %289 : vector<16x64xf32>
    %cst_141 = arith.constant 1.000000e+00 : f32
    %291 = vector.broadcast %cst_141 : f32 to vector<16x64xf32>
    %292 = arith.addf %291, %290 : vector<16x64xf32>
    %293 = arith.mulf %282, %292 : vector<16x64xf32>
    %c1_142 = arith.constant 1 : index
    %c0_143 = arith.constant 0 : index
    %c0_144 = arith.constant 0 : index
    %294 = vector.load %arg10[%c1_142, %c0_143, %c0_144] : memref<2x64x32xf32, #tpu.memory_space<vmem>>, vector<1x64x32xf32>
    %295 = vector.shape_cast %294 : vector<1x64x32xf32> to vector<64x32xf32>
    %cst_145 = arith.constant dense<0.000000e+00> : vector<16x32xf32>
    %296 = tpu.matmul %293, %295, %cst_145 {dimension_numbers = #tpu.dot_dimension_numbers<[1], [0], [0], [1], [0, 0, 1, 1], [], []>} : vector<16x64xf32>, vector<64x32xf32>, vector<16x32xf32> -> vector<16x32xf32>
    %297 = vector.broadcast %191 : vector<1x32xf32> to vector<16x32xf32>
    %298 = arith.addf %296, %297 : vector<16x32xf32>
    %299 = arith.addf %298, %273 : vector<16x32xf32>
    %cst_146 = arith.constant dense<0.000000e+00> : vector<16xf32>
    %300 = vector.multi_reduction <add>, %299, %cst_146 [1] : vector<16x32xf32> to vector<16xf32>
    %301 = vector.shape_cast %300 : vector<16xf32> to vector<16x1xf32>
    %cst_147 = arith.constant 3.200000e+01 : f32
    %302 = vector.broadcast %cst_147 : f32 to vector<16x1xf32>
    %303 = arith.divf %301, %302 : vector<16x1xf32>
    %304 = vector.broadcast %303 : vector<16x1xf32> to vector<16x32xf32>
    %305 = arith.subf %299, %304 : vector<16x32xf32>
    %306 = arith.mulf %305, %305 : vector<16x32xf32>
    %cst_148 = arith.constant dense<0.000000e+00> : vector<16xf32>
    %307 = vector.multi_reduction <add>, %306, %cst_148 [1] : vector<16x32xf32> to vector<16xf32>
    %308 = vector.shape_cast %307 : vector<16xf32> to vector<16x1xf32>
    %cst_149 = arith.constant 3.200000e+01 : f32
    %309 = vector.broadcast %cst_149 : f32 to vector<16x1xf32>
    %310 = arith.divf %308, %309 : vector<16x1xf32>
    %cst_150 = arith.constant 9.99999996E-13 : f32
    %311 = vector.broadcast %cst_150 : f32 to vector<16x1xf32>
    %312 = arith.addf %310, %311 : vector<16x1xf32>
    %313 = math.rsqrt %312 : vector<16x1xf32>
    %314 = vector.broadcast %313 : vector<16x1xf32> to vector<16x32xf32>
    %315 = arith.mulf %305, %314 : vector<16x32xf32>
    %316 = vector.broadcast %185 : vector<1x32xf32> to vector<16x32xf32>
    %317 = arith.mulf %315, %316 : vector<16x32xf32>
    %318 = vector.broadcast %186 : vector<1x32xf32> to vector<16x32xf32>
    %319 = arith.addf %317, %318 : vector<16x32xf32>
    %320 = tpu.iota {dimensions = array<i32: 1>} : vector<2x16xi32>
    %321 = tpu.iota {dimensions = array<i32: 0>} : vector<2x16xi32>
    %c8_i32 = arith.constant 8 : i32
    %322 = vector.broadcast %c8_i32 : i32 to vector<2x16xi32>
    %323 = arith.muli %321, %322 : vector<2x16xi32>
    %324 = arith.cmpi eq, %320, %323 : vector<2x16xi32>
    %325 = arith.extui %324 : vector<2x16xi1> to vector<2x16xi32>
    %326 = arith.sitofp %325 : vector<2x16xi32> to vector<2x16xf32>
    %cst_151 = arith.constant dense<0.000000e+00> : vector<2x32xf32>
    %327 = tpu.matmul %326, %319, %cst_151 {dimension_numbers = #tpu.dot_dimension_numbers<[1], [0], [0], [1], [0, 0, 1, 1], [], []>} : vector<2x16xf32>, vector<16x32xf32>, vector<2x32xf32> -> vector<2x32xf32>
    %c2_152 = arith.constant 2 : index
    %c0_153 = arith.constant 0 : index
    %c0_154 = arith.constant 0 : index
    %328 = vector.load %arg7[%c2_152, %c0_153, %c0_154] : memref<3x32x32xf32, #tpu.memory_space<vmem>>, vector<1x32x32xf32>
    %329 = vector.shape_cast %328 : vector<1x32x32xf32> to vector<32x32xf32>
    %cst_155 = arith.constant dense<0.000000e+00> : vector<2x32xf32>
    %330 = tpu.matmul %327, %329, %cst_155 {dimension_numbers = #tpu.dot_dimension_numbers<[1], [0], [0], [1], [0, 0, 1, 1], [], []>} : vector<2x32xf32>, vector<32x32xf32>, vector<2x32xf32> -> vector<2x32xf32>
    %c20 = arith.constant 20 : index
    %c0_156 = arith.constant 0 : index
    %331 = vector.load %arg5[%c20, %c0_156] : memref<21x32xf32, #tpu.memory_space<vmem>>, vector<1x32xf32>
    %332 = vector.broadcast %331 : vector<1x32xf32> to vector<2x32xf32>
    %333 = arith.addf %330, %332 : vector<2x32xf32>
    %334 = math.tanh %333 : vector<2x32xf32>
    %c0_157 = arith.constant 0 : index
    %c0_158 = arith.constant 0 : index
    %c0_159 = arith.constant 0 : index
    %335 = vector.load %arg11[%c0_157, %c0_158, %c0_159] : memref<2x32x128xf32, #tpu.memory_space<vmem>>, vector<1x32x128xf32>
    %336 = vector.shape_cast %335 : vector<1x32x128xf32> to vector<32x128xf32>
    %cst_160 = arith.constant dense<0.000000e+00> : vector<16x128xf32>
    %337 = tpu.matmul %319, %336, %cst_160 {dimension_numbers = #tpu.dot_dimension_numbers<[1], [0], [0], [1], [0, 0, 1, 1], [], []>} : vector<16x32xf32>, vector<32x128xf32>, vector<16x128xf32> -> vector<16x128xf32>
    %c0_161 = arith.constant 0 : index
    %c0_162 = arith.constant 0 : index
    %c0_163 = arith.constant 0 : index
    %338 = vector.load %arg12[%c0_161, %c0_162, %c0_163] : memref<2x1x128xf32, #tpu.memory_space<vmem>>, vector<1x1x128xf32>
    %339 = vector.shape_cast %338 : vector<1x1x128xf32> to vector<1x128xf32>
    %340 = vector.broadcast %339 : vector<1x128xf32> to vector<16x128xf32>
    %341 = arith.addf %337, %340 : vector<16x128xf32>
    %c1_164 = arith.constant 1 : index
    %c0_165 = arith.constant 0 : index
    %c0_166 = arith.constant 0 : index
    %342 = vector.load %arg11[%c1_164, %c0_165, %c0_166] : memref<2x32x128xf32, #tpu.memory_space<vmem>>, vector<1x32x128xf32>
    %343 = vector.shape_cast %342 : vector<1x32x128xf32> to vector<32x128xf32>
    %cst_167 = arith.constant dense<0.000000e+00> : vector<2x128xf32>
    %344 = tpu.matmul %334, %343, %cst_167 {dimension_numbers = #tpu.dot_dimension_numbers<[1], [0], [0], [1], [0, 0, 1, 1], [], []>} : vector<2x32xf32>, vector<32x128xf32>, vector<2x128xf32> -> vector<2x128xf32>
    %c1_168 = arith.constant 1 : index
    %c0_169 = arith.constant 0 : index
    %c0_170 = arith.constant 0 : index
    %345 = vector.load %arg12[%c1_168, %c0_169, %c0_170] : memref<2x1x128xf32, #tpu.memory_space<vmem>>, vector<1x1x128xf32>
    %346 = vector.shape_cast %345 : vector<1x1x128xf32> to vector<1x128xf32>
    %347 = vector.broadcast %346 : vector<1x128xf32> to vector<2x128xf32>
    %348 = arith.addf %344, %347 : vector<2x128xf32>
    %c0_171 = arith.constant 0 : index
    %c0_172 = arith.constant 0 : index
    %349 = vector.load %arg13[%c0_171, %c0_172] : memref<16x128xf32, #tpu.memory_space<vmem>>, vector<16x128xf32>
    tpu.vector_store %arg13[%c0_171, %c0_172], %341 {strides = array<i32>} : memref<16x128xf32, #tpu.memory_space<vmem>>, vector<16x128xf32>,
    %c0_173 = arith.constant 0 : index
    %c0_174 = arith.constant 0 : index
    %350 = vector.load %arg14[%c0_173, %c0_174] : memref<2x128xf32, #tpu.memory_space<vmem>>, vector<2x128xf32>
    tpu.vector_store %arg14[%c0_173, %c0_174], %348 {strides = array<i32>} : memref<2x128xf32, #tpu.memory_space<vmem>>, vector<2x128xf32>,
    %cst_175 = arith.constant dense<0xFF800000> : vector<16xf32>
    %351 = vector.multi_reduction <maximumf>, %341, %cst_175 [1] : vector<16x128xf32> to vector<16xf32>
    %352 = vector.shape_cast %351 : vector<16xf32> to vector<16x1xf32>
    %353 = vector.broadcast %352 : vector<16x1xf32> to vector<16x128xf32>
    %354 = arith.subf %341, %353 : vector<16x128xf32>
    %355 = math.exp %354 : vector<16x128xf32>
    %cst_176 = arith.constant dense<0.000000e+00> : vector<16xf32>
    %356 = vector.multi_reduction <add>, %355, %cst_176 [1] : vector<16x128xf32> to vector<16xf32>
    %357 = vector.shape_cast %356 : vector<16xf32> to vector<16x1xf32>
    %358 = math.log %357 : vector<16x1xf32>
    %359 = arith.addf %358, %352 : vector<16x1xf32>
    %360 = tpu.iota {dimensions = array<i32: 1>} : vector<16x128xi32>
    %361 = vector.broadcast %4 : vector<16x1xi32> to vector<16x128xi32>
    %362 = arith.cmpi eq, %360, %361 : vector<16x128xi32>
    %cst_177 = arith.constant 0.000000e+00 : f32
    %363 = vector.broadcast %cst_177 : f32 to vector<16x128xf32>
    %364 = arith.select %362, %341, %363 : vector<16x128xi1>, vector<16x128xf32>
    %cst_178 = arith.constant dense<0.000000e+00> : vector<16xf32>
    %365 = vector.multi_reduction <add>, %364, %cst_178 [1] : vector<16x128xf32> to vector<16xf32>
    %366 = vector.shape_cast %365 : vector<16xf32> to vector<16x1xf32>
    %c0_i32 = arith.constant 0 : i32
    %367 = vector.broadcast %c0_i32 : i32 to vector<16x1xi32>
    %368 = arith.cmpi sge, %4, %367 : vector<16x1xi32>
    %369 = arith.extui %368 : vector<16x1xi1> to vector<16x1xi32>
    %370 = arith.sitofp %369 : vector<16x1xi32> to vector<16x1xf32>
    %371 = arith.subf %359, %366 : vector<16x1xf32>
    %372 = arith.mulf %371, %370 : vector<16x1xf32>
    %373 = vector.shape_cast %372 : vector<16x1xf32> to vector<1x16x1xf32>
    %cst_179 = arith.constant dense<0.000000e+00> : vector<1xf32>
    %374 = vector.multi_reduction <add>, %373, %cst_179 [1, 2] : vector<1x16x1xf32> to vector<1xf32>
    %375 = vector.shape_cast %374 : vector<1xf32> to vector<1x1x1xf32>
    %376 = vector.extract %375[0, 0, 0] : f32 from vector<1x1x1xf32>
    %377 = vector.shape_cast %370 : vector<16x1xf32> to vector<1x16x1xf32>
    %cst_180 = arith.constant dense<0.000000e+00> : vector<1xf32>
    %378 = vector.multi_reduction <add>, %377, %cst_180 [1, 2] : vector<1x16x1xf32> to vector<1xf32>
    %379 = vector.shape_cast %378 : vector<1xf32> to vector<1x1x1xf32>
    %380 = vector.extract %379[0, 0, 0] : f32 from vector<1x1x1xf32>
    %cst_181 = arith.constant 1.000000e+00 : f32
    %381 = arith.maximumf %380, %cst_181 : f32
    %382 = arith.divf %376, %381 : f32
    %c0_182 = arith.constant 0 : index
    %c0_183 = arith.constant 0 : index
    %383 = vector.load %arg1[%c0_182, %c0_183] : memref<2x1xi32, #tpu.memory_space<vmem>>, vector<2x1xi32>
    %cst_184 = arith.constant dense<0xFF800000> : vector<2xf32>
    %384 = vector.multi_reduction <maximumf>, %348, %cst_184 [1] : vector<2x128xf32> to vector<2xf32>
    %385 = vector.shape_cast %384 : vector<2xf32> to vector<2x1xf32>
    %386 = vector.broadcast %385 : vector<2x1xf32> to vector<2x128xf32>
    %387 = arith.subf %348, %386 : vector<2x128xf32>
    %388 = math.exp %387 : vector<2x128xf32>
    %cst_185 = arith.constant dense<0.000000e+00> : vector<2xf32>
    %389 = vector.multi_reduction <add>, %388, %cst_185 [1] : vector<2x128xf32> to vector<2xf32>
    %390 = vector.shape_cast %389 : vector<2xf32> to vector<2x1xf32>
    %391 = math.log %390 : vector<2x1xf32>
    %392 = arith.addf %391, %385 : vector<2x1xf32>
    %393 = tpu.iota {dimensions = array<i32: 1>} : vector<2x128xi32>
    %394 = vector.broadcast %383 : vector<2x1xi32> to vector<2x128xi32>
    %395 = arith.cmpi eq, %393, %394 : vector<2x128xi32>
    %cst_186 = arith.constant 0.000000e+00 : f32
    %396 = vector.broadcast %cst_186 : f32 to vector<2x128xf32>
    %397 = arith.select %395, %348, %396 : vector<2x128xi1>, vector<2x128xf32>
    %cst_187 = arith.constant dense<0.000000e+00> : vector<2xf32>
    %398 = vector.multi_reduction <add>, %397, %cst_187 [1] : vector<2x128xf32> to vector<2xf32>
    %399 = vector.shape_cast %398 : vector<2xf32> to vector<2x1xf32>
    %c0_i32_188 = arith.constant 0 : i32
    %400 = vector.broadcast %c0_i32_188 : i32 to vector<2x1xi32>
    %401 = arith.cmpi sge, %383, %400 : vector<2x1xi32>
    %402 = arith.extui %401 : vector<2x1xi1> to vector<2x1xi32>
    %403 = arith.sitofp %402 : vector<2x1xi32> to vector<2x1xf32>
    %404 = arith.subf %392, %399 : vector<2x1xf32>
    %405 = arith.mulf %404, %403 : vector<2x1xf32>
    %406 = vector.shape_cast %405 : vector<2x1xf32> to vector<1x2x1xf32>
    %cst_189 = arith.constant dense<0.000000e+00> : vector<1xf32>
    %407 = vector.multi_reduction <add>, %406, %cst_189 [1, 2] : vector<1x2x1xf32> to vector<1xf32>
    %408 = vector.shape_cast %407 : vector<1xf32> to vector<1x1x1xf32>
    %409 = vector.extract %408[0, 0, 0] : f32 from vector<1x1x1xf32>
    %410 = vector.shape_cast %403 : vector<2x1xf32> to vector<1x2x1xf32>
    %cst_190 = arith.constant dense<0.000000e+00> : vector<1xf32>
    %411 = vector.multi_reduction <add>, %410, %cst_190 [1, 2] : vector<1x2x1xf32> to vector<1xf32>
    %412 = vector.shape_cast %411 : vector<1xf32> to vector<1x1x1xf32>
    %413 = vector.extract %412[0, 0, 0] : f32 from vector<1x1x1xf32>
    %cst_191 = arith.constant 1.000000e+00 : f32
    %414 = arith.maximumf %413, %cst_191 : f32
    %415 = arith.divf %409, %414 : f32
    %416 = arith.addf %382, %415 : f32
    %c0_192 = arith.constant 0 : index
    %c0_193 = arith.constant 0 : index
    %417 = memref.load %arg15[%c0_192, %c0_193] : memref<1x1xf32, #tpu.memory_space<smem>>
    memref.store %416, %arg15[%c0_192, %c0_193] : memref<1x1xf32, #tpu.memory_space<smem>>
    return
  }
}

</mosaic_0001>

<llo_original>
// kernel: ehr_bert_pretrain.1
$region0: #{ehr_bert_pretrain.1}
  #allocation0 [shape = 'u32[]', space=smem, size = 0x4, offset = 0x4, fixed_abs, tag = 'smem constant byte address 0x4 - core index']
  #allocation1 [shape = 'u32[144,128]{1,0:T(1,128)}', space=vmem, size = 0x12000, scoped, tag = 'internal scratch']
  %s0 = inlined_call_operand.vmem [shape: s32[16,3], index: 0, kind: input, shape index: {}]
  %s1 = inlined_call_operand.vmem [shape: s32[2,1], index: 1, kind: input, shape index: {}]
  %s2 = inlined_call_operand.vmem [shape: f32[16,32], index: 2, kind: input, shape index: {}]
  %s3 = inlined_call_operand.vmem [shape: f32[32,32], index: 3, kind: input, shape index: {}]
  %s4 = inlined_call_operand.vmem [shape: f32[130,32], index: 4, kind: input, shape index: {}]
  %s5 = inlined_call_operand.vmem [shape: f32[21,32], index: 5, kind: input, shape index: {}]
  %s6 = inlined_call_operand.vmem [shape: f32[12,32,16], index: 6, kind: input, shape index: {}]
  %s7 = inlined_call_operand.vmem [shape: f32[3,32,32], index: 7, kind: input, shape index: {}]
  %s8 = inlined_call_operand.vmem [shape: f32[2,32,64], index: 8, kind: input, shape index: {}]
  %s9 = inlined_call_operand.vmem [shape: f32[2,1,64], index: 9, kind: input, shape index: {}]
  %s10 = inlined_call_operand.vmem [shape: f32[2,64,32], index: 10, kind: input, shape index: {}]
  %s11 = inlined_call_operand.vmem [shape: f32[2,32,128], index: 11, kind: input, shape index: {}]
  %s12 = inlined_call_operand.vmem [shape: f32[2,1,128], index: 12, kind: input, shape index: {}]
  %s13 = inlined_call_operand.hbm [shape: f32[16,128], index: 13, kind: output, shape index: {0}]
  %s14 = inlined_call_operand.hbm [shape: f32[2,128], index: 14, kind: output, shape index: {1}]
  %s15 = inlined_call_operand.hbm [shape: f32[1,1], index: 15, kind: output, shape index: {2}]
  %16 = xla_tuple %s13, %s14, %s15
  %s17 = sld [smem:[#allocation0]]
  $region78: #{ehr_bert_pretrain.1} parent=0
    _
  %s19 = ssub.s32 1, %s17
  %s20 = scalar_select 0, %s19, %s17
  $region1: #{ehr_bert_pretrain.1} parent=0
    #allocation2 [shape = 'u8[8192]{0}', space=vmem, size = 0x2000, scoped, tag = 'output window, operand 0, single buffered']
    #allocation3 [shape = 's32[1]{0}', space=sflag, size = 0x4, scoped, tag = 'scoped memory for ehr_bert_pretrain.1']
    #allocation4 [shape = 's32[1]{0}', space=sflag, size = 0x4, scoped, tag = 'scoped memory for ehr_bert_pretrain.1']
    #allocation5 [shape = 'u8[1024]{0}', space=vmem, size = 0x400, scoped, tag = 'output window, operand 1, single buffered']
    #allocation6 [shape = 's32[1]{0}', space=sflag, size = 0x4, scoped, tag = 'scoped memory for ehr_bert_pretrain.1']
    #allocation7 [shape = 'u8[512]{0}', space=smem, size = 0x200, scoped, tag = 'output window, operand 2, single buffered']
    %21 = vsyncpa [#allocation3], 0
    %22 = vsyncpa [#allocation6], 0
    %23 = vsyncpa [#allocation4], 0
    // Predicated region
    $region2: #{ehr_bert_pretrain.1} parent=1 // pred_check
      _
    $region3: #{ehr_bert_pretrain.1} parent=1 // pred_check_branch
      %25 = sbr.rel (0) target = $region5
    $region4: #{ehr_bert_pretrain.1} parent=1 // pred_region
      _
    $region5: #{ehr_bert_pretrain.1} parent=1 // pred_fallthru
      _
    // Predicated region
    $region6: #{ehr_bert_pretrain.1} parent=1 // pred_check
      _
    $region7: #{ehr_bert_pretrain.1} parent=1 // pred_check_branch
      %27 = sbr.rel (0) target = $region9
    $region8: #{ehr_bert_pretrain.1} parent=1 // pred_region
      _
    $region9: #{ehr_bert_pretrain.1} parent=1 // pred_fallthru
      _
    // Predicated region
    $region10: #{ehr_bert_pretrain.1} parent=1 // pred_check
      _
    $region11: #{ehr_bert_pretrain.1} parent=1 // pred_check_branch
      %29 = sbr.rel (0) target = $region13
    $region12: #{ehr_bert_pretrain.1} parent=1 // pred_region
      _
    $region13: #{ehr_bert_pretrain.1} parent=1 // pred_fallthru
      _
    // Predicated region
    $region14: #{ehr_bert_pretrain.1} parent=1 // pred_check
      _
    $region15: #{ehr_bert_pretrain.1} parent=1 // pred_check_branch
      %31 = sbr.rel (0) target = $region17
    $region16: #{ehr_bert_pretrain.1} parent=1 // pred_region
      _
    $region17: #{ehr_bert_pretrain.1} parent=1 // pred_fallthru
      _
    // Predicated region
    $region18: #{ehr_bert_pretrain.1} parent=1 // pred_check
      _
    $region19: #{ehr_bert_pretrain.1} parent=1 // pred_check_branch
      %33 = sbr.rel (0) target = $region21
    $region20: #{ehr_bert_pretrain.1} parent=1 // pred_region
      _
    $region21: #{ehr_bert_pretrain.1} parent=1 // pred_fallthru
      _
    // Predicated region
    $region22: #{ehr_bert_pretrain.1} parent=1 // pred_check
      _
    $region23: #{ehr_bert_pretrain.1} parent=1 // pred_check_branch
      %35 = sbr.rel (0) target = $region25
    $region24: #{ehr_bert_pretrain.1} parent=1 // pred_region
      _
    $region25: #{ehr_bert_pretrain.1} parent=1 // pred_fallthru
      _
    // Predicated region
    $region26: #{ehr_bert_pretrain.1} parent=1 // pred_check
      _
    $region27: #{ehr_bert_pretrain.1} parent=1 // pred_check_branch
      %37 = sbr.rel (0) target = $region29
    $region28: #{ehr_bert_pretrain.1} parent=1 // pred_region
      _
    $region29: #{ehr_bert_pretrain.1} parent=1 // pred_fallthru
      _
    // Predicated region
    $region30: #{ehr_bert_pretrain.1} parent=1 // pred_check
      _
    $region31: #{ehr_bert_pretrain.1} parent=1 // pred_check_branch
      %39 = sbr.rel (0) target = $region33
    $region32: #{ehr_bert_pretrain.1} parent=1 // pred_region
      _
    $region33: #{ehr_bert_pretrain.1} parent=1 // pred_fallthru
      _
    // Predicated region
    $region34: #{ehr_bert_pretrain.1} parent=1 // pred_check
      _
    $region35: #{ehr_bert_pretrain.1} parent=1 // pred_check_branch
      %41 = sbr.rel (0) target = $region37
    $region36: #{ehr_bert_pretrain.1} parent=1 // pred_region
      _
    $region37: #{ehr_bert_pretrain.1} parent=1 // pred_fallthru
      _
    // Predicated region
    $region38: #{ehr_bert_pretrain.1} parent=1 // pred_check
      _
    $region39: #{ehr_bert_pretrain.1} parent=1 // pred_check_branch
      %43 = sbr.rel (0) target = $region41
    $region40: #{ehr_bert_pretrain.1} parent=1 // pred_region
      _
    $region41: #{ehr_bert_pretrain.1} parent=1 // pred_fallthru
      _
    // Predicated region
    $region42: #{ehr_bert_pretrain.1} parent=1 // pred_check
      _
    $region43: #{ehr_bert_pretrain.1} parent=1 // pred_check_branch
      %45 = sbr.rel (0) target = $region45
    $region44: #{ehr_bert_pretrain.1} parent=1 // pred_region
      _
    $region45: #{ehr_bert_pretrain.1} parent=1 // pred_fallthru
      _
    // Predicated region
    $region46: #{ehr_bert_pretrain.1} parent=1 // pred_check
      _
    $region47: #{ehr_bert_pretrain.1} parent=1 // pred_check_branch
      %47 = sbr.rel (0) target = $region49
    $region48: #{ehr_bert_pretrain.1} parent=1 // pred_region
      _
    $region49: #{ehr_bert_pretrain.1} parent=1 // pred_fallthru
      _
    // Predicated region
    $region50: #{ehr_bert_pretrain.1} parent=1 // pred_check
      _
    $region51: #{ehr_bert_pretrain.1} parent=1 // pred_check_branch
      %49 = sbr.rel (0) target = $region53
    $region52: #{ehr_bert_pretrain.1} parent=1 // pred_region
      _
    $region53: #{ehr_bert_pretrain.1} parent=1 // pred_fallthru
      _
    %v50 = vld [vmem:[%s0] sm:$0xff]
    %v51 = vld [vmem:[%s0 + $0x8] sm:$0xff]
    %v52 = vcvt.s32.f32 %v50
    %v53 = vcvt.s32.f32 %v51
    %v54 = vlaneseq
    %v55 = vand.u32 %v54, 127
    %56 = vset.pattern.permute.xlu0 0
    %57 = vperm.xlu0 %56, %v50
    %v58 = vpop.permute.xlu0 %57
    %59 = vset.pattern.permute.xlu0 0
    %60 = vperm.xlu0 %59, %v51
    %v61 = vpop.permute.xlu0 %60
    %vm62 = vcmp.eq.s32.totalorder %v55, %v58
    %vm63 = vcmp.eq.s32.totalorder %v55, %v61
    %v64 = vsel %vm62, 1, 0
    %v65 = vsel %vm63, 1, 0
    %v66 = vcvt.s32.f32 %v64
    %v67 = vcvt.s32.f32 %v65
    %v68 = vld [vmem:[%s4] sm:$0xff]
    %v69 = vld [vmem:[%s4 + $0x8] sm:$0xff]
    %v70 = vld [vmem:[%s4 + $0x10] sm:$0xff]
    %v71 = vld [vmem:[%s4 + $0x18] sm:$0xff]
    %v72 = vld [vmem:[%s4 + $0x20] sm:$0xff]
    %v73 = vld [vmem:[%s4 + $0x28] sm:$0xff]
    %v74 = vld [vmem:[%s4 + $0x30] sm:$0xff]
    %v75 = vld [vmem:[%s4 + $0x38] sm:$0xff]
    %v76 = vld [vmem:[%s4 + $0x40] sm:$0xff]
    %v77 = vld [vmem:[%s4 + $0x48] sm:$0xff]
    %v78 = vld [vmem:[%s4 + $0x50] sm:$0xff]
    %v79 = vld [vmem:[%s4 + $0x58] sm:$0xff]
    %v80 = vld [vmem:[%s4 + $0x60] sm:$0xff]
    %v81 = vld [vmem:[%s4 + $0x68] sm:$0xff]
    %v82 = vld [vmem:[%s4 + $0x70] sm:$0xff]
    %v83 = vld [vmem:[%s4 + $0x78] sm:$0xff]
    %v84 = vld [vmem:[%s4 + $0x80] sm:$0x1]
    %v85 = vld [vmem:[%s4 + $0x81] sm:$0x1]
    %v86 = vsub.f32 %v85, %v84
    %v87 = vlaneseq
    %v88 = vshrl.u32 %v87, 7
    %v89 = vsub.s32 0, %v88
    %v90 = vrot.slane %v86, %v89
    %92 = vset.pattern.permute.xlu0 1
    %93 = vperm.xlu0 %92, %v52
    %v94 = vpop.permute.xlu0 %93
    %97 = vset.pattern.permute.xlu0 1
    %98 = vperm.xlu0 %97, %v53
    %v99 = vpop.permute.xlu0 %98
    %v101 = vmul.f32 %v90, %v94
    %v102 = vmul.f32 %v90, %v99
    %v103 = vlaneseq
    %v104 = vshrl.u32 %v103, 7
    %v105 = vsub.s32 0, %v104
    %v106 = vrot.slane %v84, %v105
    %v107 = vadd.f32 %v106, %v101
    %v108 = vadd.f32 %v106, %v102
    %109 = vmatprep.subr.mxu0 0.0
    %110 = vmatpush1.msra.mxu0 %v68
    %111 = vmatprep.subr.mxu0 0.0
    %112 = vmatpush1.msra.mxu0 %v69
    %113 = vmatprep.subr.mxu0 0.0
    %114 = vmatpush1.msra.mxu0 %v70
    %115 = vmatprep.subr.mxu0 0.0
    %116 = vmatpush1.msra.mxu0 %v71
    %117 = vmatprep.subr.mxu0 0.0
    %118 = vmatpush1.msra.mxu0 %v72
    %119 = vmatprep.subr.mxu0 0.0
    %120 = vmatpush1.msra.mxu0 %v73
    %121 = vmatprep.subr.mxu0 0.0
    %122 = vmatpush1.msra.mxu0 %v74
    %123 = vmatprep.subr.mxu0 0.0
    %124 = vmatpush1.msra.mxu0 %v75
    %125 = vmatprep.subr.mxu0 0.0
    %126 = vmatpush1.msra.mxu0 %v76
    %127 = vmatprep.subr.mxu0 0.0
    %128 = vmatpush1.msra.mxu0 %v77
    %129 = vmatprep.subr.mxu0 0.0
    %130 = vmatpush1.msra.mxu0 %v78
    %131 = vmatprep.subr.mxu0 0.0
    %132 = vmatpush1.msra.mxu0 %v79
    %133 = vmatprep.subr.mxu0 0.0
    %134 = vmatpush1.msra.mxu0 %v80
    %135 = vmatprep.subr.mxu0 0.0
    %136 = vmatpush1.msra.mxu0 %v81
    %137 = vmatprep.subr.mxu0 0.0
    %138 = vmatpush1.msra.mxu0 %v82
    %139 = vmatprep.subr.mxu0 0.0
    %140 = vmatpush1.msra.mxu0 %v83
    %141 = vmatprep.subr.mxu0 0.0
    %142 = vmatpush1.msra.mxu0 0.0
    %143 = vmatprep.subr.mxu0 0.0
    %144 = vmatpush1.msra.mxu0 0.0
    %145 = vmatprep.subr.mxu0 0.0
    %146 = vmatpush1.msra.mxu0 0.0
    %147 = vmatprep.subr.mxu0 0.0
    %148 = vmatpush1.msra.mxu0 0.0
    %149 = vmatprep.subr.mxu0 0.0
    %150 = vmatpush1.msra.mxu0 0.0
    %151 = vmatprep.subr.mxu0 0.0
    %152 = vmatpush1.msra.mxu0 0.0
    %153 = vmatprep.subr.mxu0 0.0
    %154 = vmatpush1.msra.mxu0 0.0
    %155 = vmatprep.subr.mxu0 0.0
    %156 = vmatpush1.msra.mxu0 0.0
    %157 = vmatprep.subr.mxu0 0.0
    %158 = vmatpush1.msra.mxu0 0.0
    %159 = vmatprep.subr.mxu0 0.0
    %160 = vmatpush1.msra.mxu0 0.0
    %161 = vmatprep.subr.mxu0 0.0
    %162 = vmatpush1.msra.mxu0 0.0
    %163 = vmatprep.subr.mxu0 0.0
    %164 = vmatpush1.msra.mxu0 0.0
    %165 = vmatprep.subr.mxu0 0.0
    %166 = vmatpush1.msra.mxu0 0.0
    %167 = vmatprep.subr.mxu0 0.0
    %168 = vmatpush1.msra.mxu0 0.0
    %169 = vmatprep.subr.mxu0 0.0
    %170 = vmatpush1.msra.mxu0 0.0
    %171 = vmatprep.subr.mxu0 0.0
    %172 = vmatpush1.msra.mxu0 0.0
    %173 = vmatprep.mubr.f32.mxu0 0.0
    %174 = vmatmul.mubr.f32.gmra.mrb[0].mxu0 %v66
    %v175 = vpop.f32.mrb[0].mxu0
    %v176 = vadd.f32 %v107, %v175
    %v177 = vpop.f32.mrb[0].mxu0
    %178 = vmatprep.mubr.f32.mxu0 0.0
    %179 = vmatmul.mubr.f32.gmra.mrb[0].mxu0 %v67
    %v180 = vpop.f32.mrb[0].mxu0
    %v181 = vadd.f32 %v108, %v180
    %v182 = vpop.f32.mrb[0].mxu0
    %183 = vdwg.mxu0
    %v184 = vld [vmem:[%s2] sm:$0xff]
    %v185 = vld [vmem:[%s2 + $0x8] sm:$0xff]
    %v186 = vadd.f32 %v176, %v184
    %v187 = vadd.f32 %v181, %v185
    %v188 = vld [vmem:[%s5] sm:$0x1]
    %v189 = vld [vmem:[%s5 + $0x1] sm:$0x1]
    %vm190 = vcmask 261120
    %v191 = vsel %vm190, %v186, 0.0
    %192 = vadd.xlane.f32.xlu0 %v191
    %v193 = vpop.xlane.xlu0 %192
    %v194 = vsel %vm190, %v187, 0.0
    %195 = vadd.xlane.f32.xlu0 %v194
    %v196 = vpop.xlane.xlu0 %195
    %v197 = vrcp.pop 32.0
    %v198 = vmul.f32 %v193, %v197
    %v199 = vmul.f32 %v196, %v197
    %v200 = vsub.f32 %v186, %v198
    %v201 = vsub.f32 %v187, %v199
    %v202 = vmul.f32 %v200, %v200
    %v203 = vmul.f32 %v201, %v201
    %v204 = vsel %vm190, %v202, 0.0
    %205 = vadd.xlane.f32.xlu0 %v204
    %v206 = vpop.xlane.xlu0 %205
    %v207 = vsel %vm190, %v203, 0.0
    %208 = vadd.xlane.f32.xlu0 %v207
    %v209 = vpop.xlane.xlu0 %208
    %v210 = vmul.f32 %v206, %v197
    %v211 = vmul.f32 %v209, %v197
    %v212 = vadd.f32 %v210, 1e-12
    %v213 = vadd.f32 %v211, 1e-12
    %v214 = vrsqrt.pop %v212
    %v215 = vrsqrt.pop %v213
    %v216 = vmul.f32 %v200, %v214
    %v217 = vmul.f32 %v201, %v215
    %v218 = vlaneseq
    %v219 = vshrl.u32 %v218, 7
    %v220 = vsub.s32 0, %v219
    %v221 = vrot.slane %v188, %v220
    %v222 = vmul.f32 %v216, %v221
    %v223 = vmul.f32 %v217, %v221
    %v224 = vlaneseq
    %v225 = vshrl.u32 %v224, 7
    %v226 = vsub.s32 0, %v225
    %v227 = vrot.slane %v189, %v226
    %v228 = vadd.f32 %v222, %v227
    %v229 = vadd.f32 %v223, %v227
    %v230 = vld [vmem:[%s3] sm:$0xff]
    %v231 = vld [vmem:[%s3 + $0x8] sm:$0xff]
    %v232 = vld [vmem:[%s3 + $0x10] sm:$0xff]
    %v233 = vld [vmem:[%s3 + $0x18] sm:$0xff]
    %v234 = vld [vmem:[%s5 + $0x2] sm:$0x1]
    %v235 = vld [vmem:[%s5 + $0x3] sm:$0x1]
    %v236 = vld [vmem:[%s5 + $0x4] sm:$0x1]
    %v237 = vld [vmem:[%s5 + $0x5] sm:$0x1]
    %v238 = vld [vmem:[%s5 + $0x6] sm:$0x1]
    %v239 = vld [vmem:[%s5 + $0x7] sm:$0x1]
    %v240 = vld [vmem:[%s5 + $0x8] sm:$0x1]
    %v241 = vld [vmem:[%s5 + $0x9] sm:$0x1]
    %v242 = vld [vmem:[%s5 + $0xa] sm:$0x1]
    %v243 = vld [vmem:[%s6] sm:$0xff]
    %v244 = vld [vmem:[%s6 + $0x8] sm:$0xff]
    %v245 = vld [vmem:[%s6 + $0x10] sm:$0xff]
    %v246 = vld [vmem:[%s6 + $0x18] sm:$0xff]
    %v247 = vlaneseq
    %v248 = vshrl.u32 %v247, 7
    %v249 = vsub.s32 0, %v248
    %v250 = vrot.slane %v238, %v249
    %v252 = vsel %vm190, %v228, 0
    %v255 = vsel %vm190, %v229, 0
    %257 = vmatprep.subr.mxu0 0.0
    %258 = vmatpush1.msra.mxu0 %v243
    %259 = vmatprep.subr.mxu0 0.0
    %260 = vmatpush1.msra.mxu0 %v244
    %261 = vmatprep.subr.mxu0 0.0
    %262 = vmatpush1.msra.mxu0 %v245
    %263 = vmatprep.subr.mxu0 0.0
    %264 = vmatpush1.msra.mxu0 %v246
    %265 = vmatprep.subr.mxu0 0.0
    %266 = vmatpush1.msra.mxu0 0.0
    %267 = vmatprep.subr.mxu0 0.0
    %268 = vmatpush1.msra.mxu0 0.0
    %269 = vmatprep.subr.mxu0 0.0
    %270 = vmatpush1.msra.mxu0 0.0
    %271 = vmatprep.subr.mxu0 0.0
    %272 = vmatpush1.msra.mxu0 0.0
    %273 = vmatprep.subr.mxu0 0.0
    %274 = vmatpush1.msra.mxu0 0.0
    %275 = vmatprep.subr.mxu0 0.0
    %276 = vmatpush1.msra.mxu0 0.0
    %277 = vmatprep.subr.mxu0 0.0
    %278 = vmatpush1.msra.mxu0 0.0
    %279 = vmatprep.subr.mxu0 0.0
    %280 = vmatpush1.msra.mxu0 0.0
    %281 = vmatprep.subr.mxu0 0.0
    %282 = vmatpush1.msra.mxu0 0.0
    %283 = vmatprep.subr.mxu0 0.0
    %284 = vmatpush1.msra.mxu0 0.0
    %285 = vmatprep.subr.mxu0 0.0
    %286 = vmatpush1.msra.mxu0 0.0
    %287 = vmatprep.subr.mxu0 0.0
    %288 = vmatpush1.msra.mxu0 0.0
    %289 = vmatprep.subr.mxu0 0.0
    %290 = vmatpush1.msra.mxu0 0.0
    %291 = vmatprep.subr.mxu0 0.0
    %292 = vmatpush1.msra.mxu0 0.0
    %293 = vmatprep.subr.mxu0 0.0
    %294 = vmatpush1.msra.mxu0 0.0
    %295 = vmatprep.subr.mxu0 0.0
    %296 = vmatpush1.msra.mxu0 0.0
    %297 = vmatprep.subr.mxu0 0.0
    %298 = vmatpush1.msra.mxu0 0.0
    %299 = vmatprep.subr.mxu0 0.0
    %300 = vmatpush1.msra.mxu0 0.0
    %301 = vmatprep.subr.mxu0 0.0
    %302 = vmatpush1.msra.mxu0 0.0
    %303 = vmatprep.subr.mxu0 0.0
    %304 = vmatpush1.msra.mxu0 0.0
    %305 = vmatprep.subr.mxu0 0.0
    %306 = vmatpush1.msra.mxu0 0.0
    %307 = vmatprep.subr.mxu0 0.0
    %308 = vmatpush1.msra.mxu0 0.0
    %309 = vmatprep.subr.mxu0 0.0
    %310 = vmatpush1.msra.mxu0 0.0
    %311 = vmatprep.subr.mxu0 0.0
    %312 = vmatpush1.msra.mxu0 0.0
    %313 = vmatprep.subr.mxu0 0.0
    %314 = vmatpush1.msra.mxu0 0.0
    %315 = vmatprep.subr.mxu0 0.0
    %316 = vmatpush1.msra.mxu0 0.0
    %317 = vmatprep.subr.mxu0 0.0
    %318 = vmatpush1.msra.mxu0 0.0
    %319 = vmatprep.subr.mxu0 0.0
    %320 = vmatpush1.msra.mxu0 0.0
    %321 = vmatprep.mubr.f32.mxu0 0.0
    %322 = vmatmul.mubr.f32.gmra.mrb[0].mxu0 %v252
    %v323 = vpop.f32.mrb[0].mxu0
    %v324 = vadd.f32 %v250, %v323
    %v325 = vpop.f32.mrb[0].mxu0
    %326 = vmatprep.mubr.f32.mxu0 0.0
    %327 = vmatmul.mubr.f32.gmra.mrb[0].mxu0 %v255
    %v328 = vpop.f32.mrb[0].mxu0
    %v329 = vadd.f32 %v250, %v328
    %v330 = vpop.f32.mrb[0].mxu0
    %331 = vdwg.mxu0
    %s332 = scalar_lea.vmem %s6, 32
    %v333 = vld [vmem:[%s332] sm:$0xff]
    %v334 = vld [vmem:[%s332 + $0x8] sm:$0xff]
    %v335 = vld [vmem:[%s332 + $0x10] sm:$0xff]
    %v336 = vld [vmem:[%s332 + $0x18] sm:$0xff]
    %338 = vrot.lane.b32.xlu0 %v250, 112
    %v339 = vpop.permute.xlu0 %338
    %341 = vmatprep.subr.mxu0 0.0
    %342 = vmatpush1.msra.mxu0 %v333
    %343 = vmatprep.subr.mxu0 0.0
    %344 = vmatpush1.msra.mxu0 %v334
    %345 = vmatprep.subr.mxu0 0.0
    %346 = vmatpush1.msra.mxu0 %v335
    %347 = vmatprep.subr.mxu0 0.0
    %348 = vmatpush1.msra.mxu0 %v336
    %349 = vmatprep.subr.mxu0 0.0
    %350 = vmatpush1.msra.mxu0 0.0
    %351 = vmatprep.subr.mxu0 0.0
    %352 = vmatpush1.msra.mxu0 0.0
    %353 = vmatprep.subr.mxu0 0.0
    %354 = vmatpush1.msra.mxu0 0.0
    %355 = vmatprep.subr.mxu0 0.0
    %356 = vmatpush1.msra.mxu0 0.0
    %357 = vmatprep.subr.mxu0 0.0
    %358 = vmatpush1.msra.mxu0 0.0
    %359 = vmatprep.subr.mxu0 0.0
    %360 = vmatpush1.msra.mxu0 0.0
    %361 = vmatprep.subr.mxu0 0.0
    %362 = vmatpush1.msra.mxu0 0.0
    %363 = vmatprep.subr.mxu0 0.0
    %364 = vmatpush1.msra.mxu0 0.0
    %365 = vmatprep.subr.mxu0 0.0
    %366 = vmatpush1.msra.mxu0 0.0
    %367 = vmatprep.subr.mxu0 0.0
    %368 = vmatpush1.msra.mxu0 0.0
    %369 = vmatprep.subr.mxu0 0.0
    %370 = vmatpush1.msra.mxu0 0.0
    %371 = vmatprep.subr.mxu0 0.0
    %372 = vmatpush1.msra.mxu0 0.0
    %373 = vmatprep.subr.mxu0 0.0
    %374 = vmatpush1.msra.mxu0 0.0
    %375 = vmatprep.subr.mxu0 0.0
    %376 = vmatpush1.msra.mxu0 0.0
    %377 = vmatprep.subr.mxu0 0.0
    %378 = vmatpush1.msra.mxu0 0.0
    %379 = vmatprep.subr.mxu0 0.0
    %380 = vmatpush1.msra.mxu0 0.0
    %381 = vmatprep.subr.mxu0 0.0
    %382 = vmatpush1.msra.mxu0 0.0
    %383 = vmatprep.subr.mxu0 0.0
    %384 = vmatpush1.msra.mxu0 0.0
    %385 = vmatprep.subr.mxu0 0.0
    %386 = vmatpush1.msra.mxu0 0.0
    %387 = vmatprep.subr.mxu0 0.0
    %388 = vmatpush1.msra.mxu0 0.0
    %389 = vmatprep.subr.mxu0 0.0
    %390 = vmatpush1.msra.mxu0 0.0
    %391 = vmatprep.subr.mxu0 0.0
    %392 = vmatpush1.msra.mxu0 0.0
    %393 = vmatprep.subr.mxu0 0.0
    %394 = vmatpush1.msra.mxu0 0.0
    %395 = vmatprep.subr.mxu0 0.0
    %396 = vmatpush1.msra.mxu0 0.0
    %397 = vmatprep.subr.mxu0 0.0
    %398 = vmatpush1.msra.mxu0 0.0
    %399 = vmatprep.subr.mxu0 0.0
    %400 = vmatpush1.msra.mxu0 0.0
    %401 = vmatprep.subr.mxu0 0.0
    %402 = vmatpush1.msra.mxu0 0.0
    %403 = vmatprep.subr.mxu0 0.0
    %404 = vmatpush1.msra.mxu0 0.0
    %405 = vmatprep.mubr.f32.mxu0 0.0
    %406 = vmatmul.mubr.f32.gmra.mrb[0].mxu0 %v252
    %v407 = vpop.f32.mrb[0].mxu0
    %v408 = vadd.f32 %v339, %v407
    %v409 = vpop.f32.mrb[0].mxu0
    %410 = vmatprep.mubr.f32.mxu0 0.0
    %411 = vmatmul.mubr.f32.gmra.mrb[0].mxu0 %v255
    %v412 = vpop.f32.mrb[0].mxu0
    %v413 = vadd.f32 %v339, %v412
    %v414 = vpop.f32.mrb[0].mxu0
    %415 = vdwg.mxu0
    %s416 = scalar_lea.vmem %s6, 64
    %v417 = vld [vmem:[%s416] sm:$0xff]
    %v418 = vld [vmem:[%s416 + $0x8] sm:$0xff]
    %v419 = vld [vmem:[%s416 + $0x10] sm:$0xff]
    %v420 = vld [vmem:[%s416 + $0x18] sm:$0xff]
    %v421 = vlaneseq
    %v422 = vshrl.u32 %v421, 7
    %v423 = vsub.s32 0, %v422
    %v424 = vrot.slane %v239, %v423
    %425 = vmatprep.subr.mxu0 0.0
    %426 = vmatpush1.msra.mxu0 %v417
    %427 = vmatprep.subr.mxu0 0.0
    %428 = vmatpush1.msra.mxu0 %v418
    %429 = vmatprep.subr.mxu0 0.0
    %430 = vmatpush1.msra.mxu0 %v419
    %431 = vmatprep.subr.mxu0 0.0
    %432 = vmatpush1.msra.mxu0 %v420
    %433 = vmatprep.subr.mxu0 0.0
    %434 = vmatpush1.msra.mxu0 0.0
    %435 = vmatprep.subr.mxu0 0.0
    %436 = vmatpush1.msra.mxu0 0.0
    %437 = vmatprep.subr.mxu0 0.0
    %438 = vmatpush1.msra.mxu0 0.0
    %439 = vmatprep.subr.mxu0 0.0
    %440 = vmatpush1.msra.mxu0 0.0
    %441 = vmatprep.subr.mxu0 0.0
    %442 = vmatpush1.msra.mxu0 0.0
    %443 = vmatprep.subr.mxu0 0.0
    %444 = vmatpush1.msra.mxu0 0.0
    %445 = vmatprep.subr.mxu0 0.0
    %446 = vmatpush1.msra.mxu0 0.0
    %447 = vmatprep.subr.mxu0 0.0
    %448 = vmatpush1.msra.mxu0 0.0
    %449 = vmatprep.subr.mxu0 0.0
    %450 = vmatpush1.msra.mxu0 0.0
    %451 = vmatprep.subr.mxu0 0.0
    %452 = vmatpush1.msra.mxu0 0.0
    %453 = vmatprep.subr.mxu0 0.0
    %454 = vmatpush1.msra.mxu0 0.0
    %455 = vmatprep.subr.mxu0 0.0
    %456 = vmatpush1.msra.mxu0 0.0
    %457 = vmatprep.subr.mxu0 0.0
    %458 = vmatpush1.msra.mxu0 0.0
    %459 = vmatprep.subr.mxu0 0.0
    %460 = vmatpush1.msra.mxu0 0.0
    %461 = vmatprep.subr.mxu0 0.0
    %462 = vmatpush1.msra.mxu0 0.0
    %463 = vmatprep.subr.mxu0 0.0
    %464 = vmatpush1.msra.mxu0 0.0
    %465 = vmatprep.subr.mxu0 0.0
    %466 = vmatpush1.msra.mxu0 0.0
    %467 = vmatprep.subr.mxu0 0.0
    %468 = vmatpush1.msra.mxu0 0.0
    %469 = vmatprep.subr.mxu0 0.0
    %470 = vmatpush1.msra.mxu0 0.0
    %471 = vmatprep.subr.mxu0 0.0
    %472 = vmatpush1.msra.mxu0 0.0
    %473 = vmatprep.subr.mxu0 0.0
    %474 = vmatpush1.msra.mxu0 0.0
    %475 = vmatprep.subr.mxu0 0.0
    %476 = vmatpush1.msra.mxu0 0.0
    %477 = vmatprep.subr.mxu0 0.0
    %478 = vmatpush1.msra.mxu0 0.0
    %479 = vmatprep.subr.mxu0 0.0
    %480 = vmatpush1.msra.mxu0 0.0
    %481 = vmatprep.subr.mxu0 0.0
    %482 = vmatpush1.msra.mxu0 0.0
    %483 = vmatprep.subr.mxu0 0.0
    %484 = vmatpush1.msra.mxu0 0.0
    %485 = vmatprep.subr.mxu0 0.0
    %486 = vmatpush1.msra.mxu0 0.0
    %487 = vmatprep.subr.mxu0 0.0
    %488 = vmatpush1.msra.mxu0 0.0
    %489 = vmatprep.mubr.f32.mxu0 0.0
    %490 = vmatmul.mubr.f32.gmra.mrb[0].mxu0 %v252
    %v491 = vpop.f32.mrb[0].mxu0
    %v492 = vadd.f32 %v424, %v491
    %v493 = vpop.f32.mrb[0].mxu0
    %494 = vmatprep.mubr.f32.mxu0 0.0
    %495 = vmatmul.mubr.f32.gmra.mrb[0].mxu0 %v255
    %v496 = vpop.f32.mrb[0].mxu0
    %v497 = vadd.f32 %v424, %v496
    %v498 = vpop.f32.mrb[0].mxu0
    %499 = vdwg.mxu0
    %s500 = scalar_lea.vmem %s6, 96
    %v501 = vld [vmem:[%s500] sm:$0xff]
    %v502 = vld [vmem:[%s500 + $0x8] sm:$0xff]
    %v503 = vld [vmem:[%s500 + $0x10] sm:$0xff]
    %v504 = vld [vmem:[%s500 + $0x18] sm:$0xff]
    %506 = vrot.lane.b32.xlu0 %v424, 112
    %v507 = vpop.permute.xlu0 %506
    %509 = vmatprep.subr.mxu0 0.0
    %510 = vmatpush1.msra.mxu0 %v501
    %511 = vmatprep.subr.mxu0 0.0
    %512 = vmatpush1.msra.mxu0 %v502
    %513 = vmatprep.subr.mxu0 0.0
    %514 = vmatpush1.msra.mxu0 %v503
    %515 = vmatprep.subr.mxu0 0.0
    %516 = vmatpush1.msra.mxu0 %v504
    %517 = vmatprep.subr.mxu0 0.0
    %518 = vmatpush1.msra.mxu0 0.0
    %519 = vmatprep.subr.mxu0 0.0
    %520 = vmatpush1.msra.mxu0 0.0
    %521 = vmatprep.subr.mxu0 0.0
    %522 = vmatpush1.msra.mxu0 0.0
    %523 = vmatprep.subr.mxu0 0.0
    %524 = vmatpush1.msra.mxu0 0.0
    %525 = vmatprep.subr.mxu0 0.0
    %526 = vmatpush1.msra.mxu0 0.0
    %527 = vmatprep.subr.mxu0 0.0
    %528 = vmatpush1.msra.mxu0 0.0
    %529 = vmatprep.subr.mxu0 0.0
    %530 = vmatpush1.msra.mxu0 0.0
    %531 = vmatprep.subr.mxu0 0.0
    %532 = vmatpush1.msra.mxu0 0.0
    %533 = vmatprep.subr.mxu0 0.0
    %534 = vmatpush1.msra.mxu0 0.0
    %535 = vmatprep.subr.mxu0 0.0
    %536 = vmatpush1.msra.mxu0 0.0
    %537 = vmatprep.subr.mxu0 0.0
    %538 = vmatpush1.msra.mxu0 0.0
    %539 = vmatprep.subr.mxu0 0.0
    %540 = vmatpush1.msra.mxu0 0.0
    %541 = vmatprep.subr.mxu0 0.0
    %542 = vmatpush1.msra.mxu0 0.0
    %543 = vmatprep.subr.mxu0 0.0
    %544 = vmatpush1.msra.mxu0 0.0
    %545 = vmatprep.subr.mxu0 0.0
    %546 = vmatpush1.msra.mxu0 0.0
    %547 = vmatprep.subr.mxu0 0.0
    %548 = vmatpush1.msra.mxu0 0.0
    %549 = vmatprep.subr.mxu0 0.0
    %550 = vmatpush1.msra.mxu0 0.0
    %551 = vmatprep.subr.mxu0 0.0
    %552 = vmatpush1.msra.mxu0 0.0
    %553 = vmatprep.subr.mxu0 0.0
    %554 = vmatpush1.msra.mxu0 0.0
    %555 = vmatprep.subr.mxu0 0.0
    %556 = vmatpush1.msra.mxu0 0.0
    %557 = vmatprep.subr.mxu0 0.0
    %558 = vmatpush1.msra.mxu0 0.0
    %559 = vmatprep.subr.mxu0 0.0
    %560 = vmatpush1.msra.mxu0 0.0
    %561 = vmatprep.subr.mxu0 0.0
    %562 = vmatpush1.msra.mxu0 0.0
    %563 = vmatprep.subr.mxu0 0.0
    %564 = vmatpush1.msra.mxu0 0.0
    %565 = vmatprep.subr.mxu0 0.0
    %566 = vmatpush1.msra.mxu0 0.0
    %567 = vmatprep.subr.mxu0 0.0
    %568 = vmatpush1.msra.mxu0 0.0
    %569 = vmatprep.subr.mxu0 0.0
    %570 = vmatpush1.msra.mxu0 0.0
    %571 = vmatprep.subr.mxu0 0.0
    %572 = vmatpush1.msra.mxu0 0.0
    %573 = vmatprep.mubr.f32.mxu0 0.0
    %574 = vmatmul.mubr.f32.gmra.mrb[0].mxu0 %v252
    %v575 = vpop.f32.mrb[0].mxu0
    %v576 = vadd.f32 %v507, %v575
    %v577 = vpop.f32.mrb[0].mxu0
    %578 = vmatprep.mubr.f32.mxu0 0.0
    %579 = vmatmul.mubr.f32.gmra.mrb[0].mxu0 %v255
    %v580 = vpop.f32.mrb[0].mxu0
    %v581 = vadd.f32 %v507, %v580
    %v582 = vpop.f32.mrb[0].mxu0
    %583 = vdwg.mxu0
    %s584 = scalar_lea.vmem %s6, 128
    %v585 = vld [vmem:[%s584] sm:$0xff]
    %v586 = vld [vmem:[%s584 + $0x8] sm:$0xff]
    %v587 = vld [vmem:[%s584 + $0x10] sm:$0xff]
    %v588 = vld [vmem:[%s584 + $0x18] sm:$0xff]
    %v589 = vlaneseq
    %v590 = vshrl.u32 %v589, 7
    %v591 = vsub.s32 0, %v590
    %v592 = vrot.slane %v240, %v591
    %593 = vmatprep.subr.mxu0 0.0
    %594 = vmatpush1.msra.mxu0 %v585
    %595 = vmatprep.subr.mxu0 0.0
    %596 = vmatpush1.msra.mxu0 %v586
    %597 = vmatprep.subr.mxu0 0.0
    %598 = vmatpush1.msra.mxu0 %v587
    %599 = vmatprep.subr.mxu0 0.0
    %600 = vmatpush1.msra.mxu0 %v588
    %601 = vmatprep.subr.mxu0 0.0
    %602 = vmatpush1.msra.mxu0 0.0
    %603 = vmatprep.subr.mxu0 0.0
    %604 = vmatpush1.msra.mxu0 0.0
    %605 = vmatprep.subr.mxu0 0.0
    %606 = vmatpush1.msra.mxu0 0.0
    %607 = vmatprep.subr.mxu0 0.0
    %608 = vmatpush1.msra.mxu0 0.0
    %609 = vmatprep.subr.mxu0 0.0
    %610 = vmatpush1.msra.mxu0 0.0
    %611 = vmatprep.subr.mxu0 0.0
    %612 = vmatpush1.msra.mxu0 0.0
    %613 = vmatprep.subr.mxu0 0.0
    %614 = vmatpush1.msra.mxu0 0.0
    %615 = vmatprep.subr.mxu0 0.0
    %616 = vmatpush1.msra.mxu0 0.0
    %617 = vmatprep.subr.mxu0 0.0
    %618 = vmatpush1.msra.mxu0 0.0
    %619 = vmatprep.subr.mxu0 0.0
    %620 = vmatpush1.msra.mxu0 0.0
    %621 = vmatprep.subr.mxu0 0.0
    %622 = vmatpush1.msra.mxu0 0.0
    %623 = vmatprep.subr.mxu0 0.0
    %624 = vmatpush1.msra.mxu0 0.0
    %625 = vmatprep.subr.mxu0 0.0
    %626 = vmatpush1.msra.mxu0 0.0
    %627 = vmatprep.subr.mxu0 0.0
    %628 = vmatpush1.msra.mxu0 0.0
    %629 = vmatprep.subr.mxu0 0.0
    %630 = vmatpush1.msra.mxu0 0.0
    %631 = vmatprep.subr.mxu0 0.0
    %632 = vmatpush1.msra.mxu0 0.0
    %633 = vmatprep.subr.mxu0 0.0
    %634 = vmatpush1.msra.mxu0 0.0
    %635 = vmatprep.subr.mxu0 0.0
    %636 = vmatpush1.msra.mxu0 0.0
    %637 = vmatprep.subr.mxu0 0.0
    %638 = vmatpush1.msra.mxu0 0.0
    %639 = vmatprep.subr.mxu0 0.0
    %640 = vmatpush1.msra.mxu0 0.0
    %641 = vmatprep.subr.mxu0 0.0
    %642 = vmatpush1.msra.mxu0 0.0
    %643 = vmatprep.subr.mxu0 0.0
    %644 = vmatpush1.msra.mxu0 0.0
    %645 = vmatprep.subr.mxu0 0.0
    %646 = vmatpush1.msra.mxu0 0.0
    %647 = vmatprep.subr.mxu0 0.0
    %648 = vmatpush1.msra.mxu0 0.0
    %649 = vmatprep.subr.mxu0 0.0
    %650 = vmatpush1.msra.mxu0 0.0
    %651 = vmatprep.subr.mxu0 0.0
    %652 = vmatpush1.msra.mxu0 0.0
    %653 = vmatprep.subr.mxu0 0.0
    %654 = vmatpush1.msra.mxu0 0.0
    %655 = vmatprep.subr.mxu0 0.0
    %656 = vmatpush1.msra.mxu0 0.0
    %657 = vmatprep.mubr.f32.mxu0 0.0
    %658 = vmatmul.mubr.f32.gmra.mrb[0].mxu0 %v252
    %v659 = vpop.f32.mrb[0].mxu0
    %v660 = vadd.f32 %v592, %v659
    %v661 = vpop.f32.mrb[0].mxu0
    %662 = vmatprep.mubr.f32.mxu0 0.0
    %663 = vmatmul.mubr.f32.gmra.mrb[0].mxu0 %v255
    %v664 = vpop.f32.mrb[0].mxu0
    %v665 = vadd.f32 %v592, %v664
    %v666 = vpop.f32.mrb[0].mxu0
    %667 = vdwg.mxu0
    %s668 = scalar_lea.vmem %s6, 160
    %v669 = vld [vmem:[%s668] sm:$0xff]
    %v670 = vld [vmem:[%s668 + $0x8] sm:$0xff]
    %v671 = vld [vmem:[%s668 + $0x10] sm:$0xff]
    %v672 = vld [vmem:[%s668 + $0x18] sm:$0xff]
    %674 = vrot.lane.b32.xlu0 %v592, 112
    %v675 = vpop.permute.xlu0 %674
    %677 = vmatprep.subr.mxu0 0.0
    %678 = vmatpush1.msra.mxu0 %v669
    %679 = vmatprep.subr.mxu0 0.0
    %680 = vmatpush1.msra.mxu0 %v670
    %681 = vmatprep.subr.mxu0 0.0
    %682 = vmatpush1.msra.mxu0 %v671
    %683 = vmatprep.subr.mxu0 0.0
    %684 = vmatpush1.msra.mxu0 %v672
    %685 = vmatprep.subr.mxu0 0.0
    %686 = vmatpush1.msra.mxu0 0.0
    %687 = vmatprep.subr.mxu0 0.0
    %688 = vmatpush1.msra.mxu0 0.0
    %689 = vmatprep.subr.mxu0 0.0
    %690 = vmatpush1.msra.mxu0 0.0
    %691 = vmatprep.subr.mxu0 0.0
    %692 = vmatpush1.msra.mxu0 0.0
    %693 = vmatprep.subr.mxu0 0.0
    %694 = vmatpush1.msra.mxu0 0.0
    %695 = vmatprep.subr.mxu0 0.0
    %696 = vmatpush1.msra.mxu0 0.0
    %697 = vmatprep.subr.mxu0 0.0
    %698 = vmatpush1.msra.mxu0 0.0
    %699 = vmatprep.subr.mxu0 0.0
    %700 = vmatpush1.msra.mxu0 0.0
    %701 = vmatprep.subr.mxu0 0.0
    %702 = vmatpush1.msra.mxu0 0.0
    %703 = vmatprep.subr.mxu0 0.0
    %704 = vmatpush1.msra.mxu0 0.0
    %705 = vmatprep.subr.mxu0 0.0
    %706 = vmatpush1.msra.mxu0 0.0
    %707 = vmatprep.subr.mxu0 0.0
    %708 = vmatpush1.msra.mxu0 0.0
    %709 = vmatprep.subr.mxu0 0.0
    %710 = vmatpush1.msra.mxu0 0.0
    %711 = vmatprep.subr.mxu0 0.0
    %712 = vmatpush1.msra.mxu0 0.0
    %713 = vmatprep.subr.mxu0 0.0
    %714 = vmatpush1.msra.mxu0 0.0
    %715 = vmatprep.subr.mxu0 0.0
    %716 = vmatpush1.msra.mxu0 0.0
    %717 = vmatprep.subr.mxu0 0.0
    %718 = vmatpush1.msra.mxu0 0.0
    %719 = vmatprep.subr.mxu0 0.0
    %720 = vmatpush1.msra.mxu0 0.0
    %721 = vmatprep.subr.mxu0 0.0
    %722 = vmatpush1.msra.mxu0 0.0
    %723 = vmatprep.subr.mxu0 0.0
    %724 = vmatpush1.msra.mxu0 0.0
    %725 = vmatprep.subr.mxu0 0.0
    %726 = vmatpush1.msra.mxu0 0.0
    %727 = vmatprep.subr.mxu0 0.0
    %728 = vmatpush1.msra.mxu0 0.0
    %729 = vmatprep.subr.mxu0 0.0
    %730 = vmatpush1.msra.mxu0 0.0
    %731 = vmatprep.subr.mxu0 0.0
    %732 = vmatpush1.msra.mxu0 0.0
    %733 = vmatprep.subr.mxu0 0.0
    %734 = vmatpush1.msra.mxu0 0.0
    %735 = vmatprep.subr.mxu0 0.0
    %736 = vmatpush1.msra.mxu0 0.0
    %737 = vmatprep.subr.mxu0 0.0
    %738 = vmatpush1.msra.mxu0 0.0
    %739 = vmatprep.subr.mxu0 0.0
    %740 = vmatpush1.msra.mxu0 0.0
    %741 = vmatprep.mubr.f32.mxu0 0.0
    %742 = vmatmul.mubr.f32.gmra.mrb[0].mxu0 %v252
    %v743 = vpop.f32.mrb[0].mxu0
    %v744 = vadd.f32 %v675, %v743
    %v745 = vpop.f32.mrb[0].mxu0
    %746 = vmatprep.mubr.f32.mxu0 0.0
    %747 = vmatmul.mubr.f32.gmra.mrb[0].mxu0 %v255
    %v748 = vpop.f32.mrb[0].mxu0
    %v749 = vadd.f32 %v675, %v748
    %v750 = vpop.f32.mrb[0].mxu0
    %751 = vdwg.mxu0
    %vm752 = vcmask 130048
    %v754 = vsel %vm752, %v324, 0
    %v757 = vsel %vm752, %v329, 0
    %v760 = vsel %vm752, %v408, 0
    %v763 = vsel %vm752, %v413, 0
    %v766 = vsel %vm752, %v492, 0
    %v769 = vsel %vm752, %v497, 0
    %v772 = vsel %vm752, %v576, 0
    %v775 = vsel %vm752, %v581, 0
    %777 = vmatprep.subr.mxu0 0.0
    %778 = vmatpush1.xpose.msra.mxu0 %v766
    %779 = vmatprep.subr.mxu0 0.0
    %780 = vmatpush1.xpose.msra.mxu0 %v769
    %781 = vmatprep.subr.mxu0 0.0
    %782 = vmatpush1.xpose.msra.mxu0 %v772
    %783 = vmatprep.subr.mxu0 0.0
    %784 = vmatpush1.xpose.msra.mxu0 %v775
    %785 = vmatprep.subr.mxu0 0.0
    %786 = vmatpush1.xpose.msra.mxu0 0.0
    %787 = vmatprep.subr.mxu0 0.0
    %788 = vmatpush1.xpose.msra.mxu0 0.0
    %789 = vmatprep.subr.mxu0 0.0
    %790 = vmatpush1.xpose.msra.mxu0 0.0
    %791 = vmatprep.subr.mxu0 0.0
    %792 = vmatpush1.xpose.msra.mxu0 0.0
    %793 = vmatprep.subr.mxu0 0.0
    %794 = vmatpush1.xpose.msra.mxu0 0.0
    %795 = vmatprep.subr.mxu0 0.0
    %796 = vmatpush1.xpose.msra.mxu0 0.0
    %797 = vmatprep.subr.mxu0 0.0
    %798 = vmatpush1.xpose.msra.mxu0 0.0
    %799 = vmatprep.subr.mxu0 0.0
    %800 = vmatpush1.xpose.msra.mxu0 0.0
    %801 = vmatprep.subr.mxu0 0.0
    %802 = vmatpush1.xpose.msra.mxu0 0.0
    %803 = vmatprep.subr.mxu0 0.0
    %804 = vmatpush1.xpose.msra.mxu0 0.0
    %805 = vmatprep.subr.mxu0 0.0
    %806 = vmatpush1.xpose.msra.mxu0 0.0
    %807 = vmatprep.subr.mxu0 0.0
    %808 = vmatpush1.xpose.msra.mxu0 0.0
    %809 = vmatprep.subr.mxu0 0.0
    %810 = vmatpush1.xpose.msra.mxu0 0.0
    %811 = vmatprep.subr.mxu0 0.0
    %812 = vmatpush1.xpose.msra.mxu0 0.0
    %813 = vmatprep.subr.mxu0 0.0
    %814 = vmatpush1.xpose.msra.mxu0 0.0
    %815 = vmatprep.subr.mxu0 0.0
    %816 = vmatpush1.xpose.msra.mxu0 0.0
    %817 = vmatprep.subr.mxu0 0.0
    %818 = vmatpush1.xpose.msra.mxu0 0.0
    %819 = vmatprep.subr.mxu0 0.0
    %820 = vmatpush1.xpose.msra.mxu0 0.0
    %821 = vmatprep.subr.mxu0 0.0
    %822 = vmatpush1.xpose.msra.mxu0 0.0
    %823 = vmatprep.subr.mxu0 0.0
    %824 = vmatpush1.xpose.msra.mxu0 0.0
    %825 = vmatprep.subr.mxu0 0.0
    %826 = vmatpush1.xpose.msra.mxu0 0.0
    %827 = vmatprep.subr.mxu0 0.0
    %828 = vmatpush1.xpose.msra.mxu0 0.0
    %829 = vmatprep.subr.mxu0 0.0
    %830 = vmatpush1.xpose.msra.mxu0 0.0
    %831 = vmatprep.subr.mxu0 0.0
    %832 = vmatpush1.xpose.msra.mxu0 0.0
    %833 = vmatprep.subr.mxu0 0.0
    %834 = vmatpush1.xpose.msra.mxu0 0.0
    %835 = vmatprep.subr.mxu0 0.0
    %836 = vmatpush1.xpose.msra.mxu0 0.0
    %837 = vmatprep.subr.mxu0 0.0
    %838 = vmatpush1.xpose.msra.mxu0 0.0
    %839 = vmatprep.subr.mxu0 0.0
    %840 = vmatpush1.xpose.msra.mxu0 0.0
    %841 = vmatprep.mubr.f32.mxu0 0.0
    %842 = vmatmul.mubr.f32.gmra.mrb[0].mxu0 %v754
    %v843 = vpop.f32.mrb[0].mxu0
    %v844 = vadd.f32 0.0, %v843
    %v845 = vpop.f32.mrb[0].mxu0
    %846 = vmatprep.mubr.f32.mxu0 0.0
    %847 = vmatmul.mubr.f32.gmra.mrb[0].mxu0 %v757
    %v848 = vpop.f32.mrb[0].mxu0
    %v849 = vadd.f32 0.0, %v848
    %v850 = vpop.f32.mrb[0].mxu0
    %851 = vmatprep.mubr.f32.mxu0 0.0
    %852 = vmatmul.mubr.f32.gmra.mrb[0].mxu0 %v760
    %v853 = vpop.f32.mrb[0].mxu0
    %v854 = vadd.f32 0.0, %v853
    %v855 = vpop.f32.mrb[0].mxu0
    %856 = vmatprep.mubr.f32.mxu0 0.0
    %857 = vmatmul.mubr.f32.gmra.mrb[0].mxu0 %v763
    %v858 = vpop.f32.mrb[0].mxu0
    %v859 = vadd.f32 0.0, %v858
    %v860 = vpop.f32.mrb[0].mxu0
    %861 = vdwg.mxu0
    %v862 = vmul.f32 %v844, 0.25
    %v863 = vmul.f32 %v849, 0.25
    %v864 = vmul.f32 %v854, 0.25
    %v865 = vmul.f32 %v859, 0.25
    %v866 = vadd.f32 %v862, %v230
    %v867 = vadd.f32 %v863, %v231
    %v868 = vadd.f32 %v864, %v232
    %v869 = vadd.f32 %v865, %v233
    %v870 = vsel %vm190, %v866, -inf
    %871 = vmax.xlane.f32.xlu0 %v870
    %v872 = vpop.xlane.xlu0 %871
    %v873 = vsel %vm190, %v867, -inf
    %874 = vmax.xlane.f32.xlu0 %v873
    %v875 = vpop.xlane.xlu0 %874
    %v876 = vsel %vm190, %v868, -inf
    %877 = vmax.xlane.f32.xlu0 %v876
    %v878 = vpop.xlane.xlu0 %877
    %v879 = vsel %vm190, %v869, -inf
    %880 = vmax.xlane.f32.xlu0 %v879
    %v881 = vpop.xlane.xlu0 %880
    %v882 = vsub.f32 %v866, %v872
    %v883 = vsub.f32 %v867, %v875
    %v884 = vsub.f32 %v868, %v878
    %v885 = vsub.f32 %v869, %v881
    %v886 = vmul.f32 %v882, 1.442695
    %v887 = vpow.pop %v886
    %v888 = vmul.f32 %v883, 1.442695
    %v889 = vpow.pop %v888
    %v890 = vmul.f32 %v884, 1.442695
    %v891 = vpow.pop %v890
    %v892 = vmul.f32 %v885, 1.442695
    %v893 = vpow.pop %v892
    %v894 = vsel %vm190, %v887, 0.0
    %895 = vadd.xlane.f32.xlu0 %v894
    %v896 = vpop.xlane.xlu0 %895
    %v897 = vsel %vm190, %v889, 0.0
    %898 = vadd.xlane.f32.xlu0 %v897
    %v899 = vpop.xlane.xlu0 %898
    %v900 = vsel %vm190, %v891, 0.0
    %901 = vadd.xlane.f32.xlu0 %v900
    %v902 = vpop.xlane.xlu0 %901
    %v903 = vsel %vm190, %v893, 0.0
    %904 = vadd.xlane.f32.xlu0 %v903
    %v905 = vpop.xlane.xlu0 %904
    %v906 = vrcp.pop %v896
    %v907 = vmul.f32 %v887, %v906
    %v908 = vrcp.pop %v899
    %v909 = vmul.f32 %v889, %v908
    %v910 = vrcp.pop %v902
    %v911 = vmul.f32 %v891, %v910
    %v912 = vrcp.pop %v905
    %v913 = vmul.f32 %v893, %v912
    %v915 = vsel %vm190, %v907, 0
    %v918 = vsel %vm190, %v909, 0
    %v921 = vsel %vm190, %v911, 0
    %v924 = vsel %vm190, %v913, 0
    %926 = vmatprep.subr.mxu0 0.0
    %927 = vmatpush1.msra.mxu0 %v660
    %928 = vmatprep.subr.mxu0 0.0
    %929 = vmatpush1.msra.mxu0 %v665
    %930 = vmatprep.subr.mxu0 0.0
    %931 = vmatpush1.msra.mxu0 %v744
    %932 = vmatprep.subr.mxu0 0.0
    %933 = vmatpush1.msra.mxu0 %v749
    %934 = vmatprep.subr.mxu0 0.0
    %935 = vmatpush1.msra.mxu0 0.0
    %936 = vmatprep.subr.mxu0 0.0
    %937 = vmatpush1.msra.mxu0 0.0
    %938 = vmatprep.subr.mxu0 0.0
    %939 = vmatpush1.msra.mxu0 0.0
    %940 = vmatprep.subr.mxu0 0.0
    %941 = vmatpush1.msra.mxu0 0.0
    %942 = vmatprep.subr.mxu0 0.0
    %943 = vmatpush1.msra.mxu0 0.0
    %944 = vmatprep.subr.mxu0 0.0
    %945 = vmatpush1.msra.mxu0 0.0
    %946 = vmatprep.subr.mxu0 0.0
    %947 = vmatpush1.msra.mxu0 0.0
    %948 = vmatprep.subr.mxu0 0.0
    %949 = vmatpush1.msra.mxu0 0.0
    %950 = vmatprep.subr.mxu0 0.0
    %951 = vmatpush1.msra.mxu0 0.0
    %952 = vmatprep.subr.mxu0 0.0
    %953 = vmatpush1.msra.mxu0 0.0
    %954 = vmatprep.subr.mxu0 0.0
    %955 = vmatpush1.msra.mxu0 0.0
    %956 = vmatprep.subr.mxu0 0.0
    %957 = vmatpush1.msra.mxu0 0.0
    %958 = vmatprep.subr.mxu0 0.0
    %959 = vmatpush1.msra.mxu0 0.0
    %960 = vmatprep.subr.mxu0 0.0
    %961 = vmatpush1.msra.mxu0 0.0
    %962 = vmatprep.subr.mxu0 0.0
    %963 = vmatpush1.msra.mxu0 0.0
    %964 = vmatprep.subr.mxu0 0.0
    %965 = vmatpush1.msra.mxu0 0.0
    %966 = vmatprep.subr.mxu0 0.0
    %967 = vmatpush1.msra.mxu0 0.0
    %968 = vmatprep.subr.mxu0 0.0
    %969 = vmatpush1.msra.mxu0 0.0
    %970 = vmatprep.subr.mxu0 0.0
    %971 = vmatpush1.msra.mxu0 0.0
    %972 = vmatprep.subr.mxu0 0.0
    %973 = vmatpush1.msra.mxu0 0.0
    %974 = vmatprep.subr.mxu0 0.0
    %975 = vmatpush1.msra.mxu0 0.0
    %976 = vmatprep.subr.mxu0 0.0
    %977 = vmatpush1.msra.mxu0 0.0
    %978 = vmatprep.subr.mxu0 0.0
    %979 = vmatpush1.msra.mxu0 0.0
    %980 = vmatprep.subr.mxu0 0.0
    %981 = vmatpush1.msra.mxu0 0.0
    %982 = vmatprep.subr.mxu0 0.0
    %983 = vmatpush1.msra.mxu0 0.0
    %984 = vmatprep.subr.mxu0 0.0
    %985 = vmatpush1.msra.mxu0 0.0
    %986 = vmatprep.subr.mxu0 0.0
    %987 = vmatpush1.msra.mxu0 0.0
    %988 = vmatprep.subr.mxu0 0.0
    %989 = vmatpush1.msra.mxu0 0.0
    %990 = vmatprep.mubr.f32.mxu0 0.0
    %991 = vmatmul.mubr.f32.gmra.mrb[0].mxu0 %v915
    %v992 = vpop.f32.mrb[0].mxu0
    %v993 = vadd.f32 0.0, %v992
    %v994 = vpop.f32.mrb[0].mxu0
    %995 = vmatprep.mubr.f32.mxu0 0.0
    %996 = vmatmul.mubr.f32.gmra.mrb[0].mxu0 %v918
    %v997 = vpop.f32.mrb[0].mxu0
    %v998 = vadd.f32 0.0, %v997
    %v999 = vpop.f32.mrb[0].mxu0
    %1000 = vmatprep.mubr.f32.mxu0 0.0
    %1001 = vmatmul.mubr.f32.gmra.mrb[0].mxu0 %v921
    %v1002 = vpop.f32.mrb[0].mxu0
    %v1003 = vadd.f32 0.0, %v1002
    %v1004 = vpop.f32.mrb[0].mxu0
    %1005 = vmatprep.mubr.f32.mxu0 0.0
    %1006 = vmatmul.mubr.f32.gmra.mrb[0].mxu0 %v924
    %v1007 = vpop.f32.mrb[0].mxu0
    %v1008 = vadd.f32 0.0, %v1007
    %v1009 = vpop.f32.mrb[0].mxu0
    %1010 = vdwg.mxu0
    %1013 = vrot.lane.b32.xlu0 %v1003, 16
    %v1014 = vpop.permute.xlu0 %1013
    %1015 = vrot.lane.b32.xlu0 %v1008, 16
    %v1016 = vpop.permute.xlu0 %1015
    %v1019 = vsel %vm752, %v993, %v1014
    %v1020 = vsel %vm752, %v998, %v1016
    %v1021 = vld [vmem:[%s7] sm:$0xff]
    %v1022 = vld [vmem:[%s7 + $0x8] sm:$0xff]
    %v1023 = vld [vmem:[%s7 + $0x10] sm:$0xff]
    %v1024 = vld [vmem:[%s7 + $0x18] sm:$0xff]
    %v1025 = vlaneseq
    %v1026 = vshrl.u32 %v1025, 7
    %v1027 = vsub.s32 0, %v1026
    %v1028 = vrot.slane %v241, %v1027
    %v1030 = vsel %vm190, %v1019, 0
    %v1033 = vsel %vm190, %v1020, 0
    %1035 = vmatprep.subr.mxu0 0.0
    %1036 = vmatpush1.msra.mxu0 %v1021
    %1037 = vmatprep.subr.mxu0 0.0
    %1038 = vmatpush1.msra.mxu0 %v1022
    %1039 = vmatprep.subr.mxu0 0.0
    %1040 = vmatpush1.msra.mxu0 %v1023
    %1041 = vmatprep.subr.mxu0 0.0
    %1042 = vmatpush1.msra.mxu0 %v1024
    %1043 = vmatprep.subr.mxu0 0.0
    %1044 = vmatpush1.msra.mxu0 0.0
    %1045 = vmatprep.subr.mxu0 0.0
    %1046 = vmatpush1.msra.mxu0 0.0
    %1047 = vmatprep.subr.mxu0 0.0
    %1048 = vmatpush1.msra.mxu0 0.0
    %1049 = vmatprep.subr.mxu0 0.0
    %1050 = vmatpush1.msra.mxu0 0.0
    %1051 = vmatprep.subr.mxu0 0.0
    %1052 = vmatpush1.msra.mxu0 0.0
    %1053 = vmatprep.subr.mxu0 0.0
    %1054 = vmatpush1.msra.mxu0 0.0
    %1055 = vmatprep.subr.mxu0 0.0
    %1056 = vmatpush1.msra.mxu0 0.0
    %1057 = vmatprep.subr.mxu0 0.0
    %1058 = vmatpush1.msra.mxu0 0.0
    %1059 = vmatprep.subr.mxu0 0.0
    %1060 = vmatpush1.msra.mxu0 0.0
    %1061 = vmatprep.subr.mxu0 0.0
    %1062 = vmatpush1.msra.mxu0 0.0
    %1063 = vmatprep.subr.mxu0 0.0
    %1064 = vmatpush1.msra.mxu0 0.0
    %1065 = vmatprep.subr.mxu0 0.0
    %1066 = vmatpush1.msra.mxu0 0.0
    %1067 = vmatprep.subr.mxu0 0.0
    %1068 = vmatpush1.msra.mxu0 0.0
    %1069 = vmatprep.subr.mxu0 0.0
    %1070 = vmatpush1.msra.mxu0 0.0
    %1071 = vmatprep.subr.mxu0 0.0
    %1072 = vmatpush1.msra.mxu0 0.0
    %1073 = vmatprep.subr.mxu0 0.0
    %1074 = vmatpush1.msra.mxu0 0.0
    %1075 = vmatprep.subr.mxu0 0.0
    %1076 = vmatpush1.msra.mxu0 0.0
    %1077 = vmatprep.subr.mxu0 0.0
    %1078 = vmatpush1.msra.mxu0 0.0
    %1079 = vmatprep.subr.mxu0 0.0
    %1080 = vmatpush1.msra.mxu0 0.0
    %1081 = vmatprep.subr.mxu0 0.0
    %1082 = vmatpush1.msra.mxu0 0.0
    %1083 = vmatprep.subr.mxu0 0.0
    %1084 = vmatpush1.msra.mxu0 0.0
    %1085 = vmatprep.subr.mxu0 0.0
    %1086 = vmatpush1.msra.mxu0 0.0
    %1087 = vmatprep.subr.mxu0 0.0
    %1088 = vmatpush1.msra.mxu0 0.0
    %1089 = vmatprep.subr.mxu0 0.0
    %1090 = vmatpush1.msra.mxu0 0.0
    %1091 = vmatprep.subr.mxu0 0.0
    %1092 = vmatpush1.msra.mxu0 0.0
    %1093 = vmatprep.subr.mxu0 0.0
    %1094 = vmatpush1.msra.mxu0 0.0
    %1095 = vmatprep.subr.mxu0 0.0
    %1096 = vmatpush1.msra.mxu0 0.0
    %1097 = vmatprep.subr.mxu0 0.0
    %1098 = vmatpush1.msra.mxu0 0.0
    %1099 = vmatprep.mubr.f32.mxu0 0.0
    %1100 = vmatmul.mubr.f32.gmra.mrb[0].mxu0 %v1030
    %v1101 = vpop.f32.mrb[0].mxu0
    %v1102 = vadd.f32 %v1028, %v1101
    %v1103 = vpop.f32.mrb[0].mxu0
    %1104 = vmatprep.mubr.f32.mxu0 0.0
    %1105 = vmatmul.mubr.f32.gmra.mrb[0].mxu0 %v1033
    %v1106 = vpop.f32.mrb[0].mxu0
    %v1107 = vadd.f32 %v1028, %v1106
    %v1108 = vpop.f32.mrb[0].mxu0
    %1109 = vdwg.mxu0
    %v1110 = vadd.f32 %v1102, %v228
    %v1111 = vadd.f32 %v1107, %v229
    %v1112 = vsel %vm190, %v1110, 0.0
    %1113 = vadd.xlane.f32.xlu0 %v1112
    %v1114 = vpop.xlane.xlu0 %1113
    %v1115 = vsel %vm190, %v1111, 0.0
    %1116 = vadd.xlane.f32.xlu0 %v1115
    %v1117 = vpop.xlane.xlu0 %1116
    %v1118 = vmul.f32 %v1114, %v197
    %v1119 = vmul.f32 %v1117, %v197
    %v1120 = vsub.f32 %v1110, %v1118
    %v1121 = vsub.f32 %v1111, %v1119
    %v1122 = vmul.f32 %v1120, %v1120
    %v1123 = vmul.f32 %v1121, %v1121
    %v1124 = vsel %vm190, %v1122, 0.0
    %1125 = vadd.xlane.f32.xlu0 %v1124
    %v1126 = vpop.xlane.xlu0 %1125
    %v1127 = vsel %vm190, %v1123, 0.0
    %1128 = vadd.xlane.f32.xlu0 %v1127
    %v1129 = vpop.xlane.xlu0 %1128
    %v1130 = vmul.f32 %v1126, %v197
    %v1131 = vmul.f32 %v1129, %v197
    %v1132 = vadd.f32 %v1130, 1e-12
    %v1133 = vadd.f32 %v1131, 1e-12
    %v1134 = vrsqrt.pop %v1132
    %v1135 = vrsqrt.pop %v1133
    %v1136 = vmul.f32 %v1120, %v1134
    %v1137 = vmul.f32 %v1121, %v1135
    %v1138 = vlaneseq
    %v1139 = vshrl.u32 %v1138, 7
    %v1140 = vsub.s32 0, %v1139
    %v1141 = vrot.slane %v234, %v1140
    %v1142 = vmul.f32 %v1136, %v1141
    %v1143 = vmul.f32 %v1137, %v1141
    %v1144 = vlaneseq
    %v1145 = vshrl.u32 %v1144, 7
    %v1146 = vsub.s32 0, %v1145
    %v1147 = vrot.slane %v235, %v1146
    %v1148 = vadd.f32 %v1142, %v1147
    %v1149 = vadd.f32 %v1143, %v1147
    %v1150 = vld [vmem:[%s8] sm:$0xff]
    %v1151 = vld [vmem:[%s8 + $0x8] sm:$0xff]
    %v1152 = vld [vmem:[%s8 + $0x10] sm:$0xff]
    %v1153 = vld [vmem:[%s8 + $0x18] sm:$0xff]
    %v1154 = vld [vmem:[%s9] sm:$0x1]
    %v1156 = vlaneseq
    %v1157 = vshrl.u32 %v1156, 7
    %v1158 = vsub.s32 0, %v1157
    %v1159 = vrot.slane %v1154, %v1158
    %v1162 = vsel %vm190, %v1148, 0
    %v1165 = vsel %vm190, %v1149, 0
    %1167 = vmatprep.subr.mxu0 0.0
    %1168 = vmatpush1.msra.mxu0 %v1150
    %1169 = vmatprep.subr.mxu0 0.0
    %1170 = vmatpush1.msra.mxu0 %v1151
    %1171 = vmatprep.subr.mxu0 0.0
    %1172 = vmatpush1.msra.mxu0 %v1152
    %1173 = vmatprep.subr.mxu0 0.0
    %1174 = vmatpush1.msra.mxu0 %v1153
    %1175 = vmatprep.subr.mxu0 0.0
    %1176 = vmatpush1.msra.mxu0 0.0
    %1177 = vmatprep.subr.mxu0 0.0
    %1178 = vmatpush1.msra.mxu0 0.0
    %1179 = vmatprep.subr.mxu0 0.0
    %1180 = vmatpush1.msra.mxu0 0.0
    %1181 = vmatprep.subr.mxu0 0.0
    %1182 = vmatpush1.msra.mxu0 0.0
    %1183 = vmatprep.subr.mxu0 0.0
    %1184 = vmatpush1.msra.mxu0 0.0
    %1185 = vmatprep.subr.mxu0 0.0
    %1186 = vmatpush1.msra.mxu0 0.0
    %1187 = vmatprep.subr.mxu0 0.0
    %1188 = vmatpush1.msra.mxu0 0.0
    %1189 = vmatprep.subr.mxu0 0.0
    %1190 = vmatpush1.msra.mxu0 0.0
    %1191 = vmatprep.subr.mxu0 0.0
    %1192 = vmatpush1.msra.mxu0 0.0
    %1193 = vmatprep.subr.mxu0 0.0
    %1194 = vmatpush1.msra.mxu0 0.0
    %1195 = vmatprep.subr.mxu0 0.0
    %1196 = vmatpush1.msra.mxu0 0.0
    %1197 = vmatprep.subr.mxu0 0.0
    %1198 = vmatpush1.msra.mxu0 0.0
    %1199 = vmatprep.subr.mxu0 0.0
    %1200 = vmatpush1.msra.mxu0 0.0
    %1201 = vmatprep.subr.mxu0 0.0
    %1202 = vmatpush1.msra.mxu0 0.0
    %1203 = vmatprep.subr.mxu0 0.0
    %1204 = vmatpush1.msra.mxu0 0.0
    %1205 = vmatprep.subr.mxu0 0.0
    %1206 = vmatpush1.msra.mxu0 0.0
    %1207 = vmatprep.subr.mxu0 0.0
    %1208 = vmatpush1.msra.mxu0 0.0
    %1209 = vmatprep.subr.mxu0 0.0
    %1210 = vmatpush1.msra.mxu0 0.0
    %1211 = vmatprep.subr.mxu0 0.0
    %1212 = vmatpush1.msra.mxu0 0.0
    %1213 = vmatprep.subr.mxu0 0.0
    %1214 = vmatpush1.msra.mxu0 0.0
    %1215 = vmatprep.subr.mxu0 0.0
    %1216 = vmatpush1.msra.mxu0 0.0
    %1217 = vmatprep.subr.mxu0 0.0
    %1218 = vmatpush1.msra.mxu0 0.0
    %1219 = vmatprep.subr.mxu0 0.0
    %1220 = vmatpush1.msra.mxu0 0.0
    %1221 = vmatprep.subr.mxu0 0.0
    %1222 = vmatpush1.msra.mxu0 0.0
    %1223 = vmatprep.subr.mxu0 0.0
    %1224 = vmatpush1.msra.mxu0 0.0
    %1225 = vmatprep.subr.mxu0 0.0
    %1226 = vmatpush1.msra.mxu0 0.0
    %1227 = vmatprep.subr.mxu0 0.0
    %1228 = vmatpush1.msra.mxu0 0.0
    %1229 = vmatprep.subr.mxu0 0.0
    %1230 = vmatpush1.msra.mxu0 0.0
    %1231 = vmatprep.mubr.f32.mxu0 0.0
    %1232 = vmatmul.mubr.f32.gmra.mrb[0].mxu0 %v1162
    %v1233 = vpop.f32.mrb[0].mxu0
    %v1234 = vadd.f32 %v1159, %v1233
    %v1235 = vpop.f32.mrb[0].mxu0
    %1236 = vmatprep.mubr.f32.mxu0 0.0
    %1237 = vmatmul.mubr.f32.gmra.mrb[0].mxu0 %v1165
    %v1238 = vpop.f32.mrb[0].mxu0
    %v1239 = vadd.f32 %v1159, %v1238
    %v1240 = vpop.f32.mrb[0].mxu0
    %1241 = vdwg.mxu0
    %v1242 = vmul.f32 %v1234, 0.5
    %v1243 = vmul.f32 %v1239, 0.5
    %v1244 = vmul.f32 %v1234, 0.044715
    %v1245 = vmul.f32 %v1239, 0.044715
    %v1246 = vmul.f32 %v1244, %v1234
    %v1247 = vmul.f32 %v1245, %v1239
    %v1248 = vmul.f32 %v1246, %v1234
    %v1249 = vmul.f32 %v1247, %v1239
    %v1250 = vadd.f32 %v1234, %v1248
    %v1251 = vadd.f32 %v1239, %v1249
    %v1252 = vmul.f32 %v1250, 0.7978846
    %v1253 = vmul.f32 %v1251, 0.7978846
    %v1254 = vtanh.pop %v1252
    %v1255 = vtanh.pop %v1253
    %v1256 = vadd.f32 %v1254, 1.0
    %v1257 = vadd.f32 %v1255, 1.0
    %v1258 = vmul.f32 %v1242, %v1256
    %v1259 = vmul.f32 %v1243, %v1257
    %v1260 = vld [vmem:[%s10] sm:$0xff]
    %v1261 = vld [vmem:[%s10 + $0x8] sm:$0xff]
    %v1262 = vld [vmem:[%s10 + $0x10] sm:$0xff]
    %v1263 = vld [vmem:[%s10 + $0x18] sm:$0xff]
    %v1264 = vld [vmem:[%s10 + $0x20] sm:$0xff]
    %v1265 = vld [vmem:[%s10 + $0x28] sm:$0xff]
    %v1266 = vld [vmem:[%s10 + $0x30] sm:$0xff]
    %v1267 = vld [vmem:[%s10 + $0x38] sm:$0xff]
    %v1268 = vlaneseq
    %v1269 = vshrl.u32 %v1268, 7
    %v1270 = vsub.s32 0, %v1269
    %v1271 = vrot.slane %v242, %v1270
    %vm1272 = vcmask 523264
    %v1274 = vsel %vm1272, %v1258, 0
    %v1277 = vsel %vm1272, %v1259, 0
    %1279 = vmatprep.subr.mxu0 0.0
    %1280 = vmatpush1.msra.mxu0 %v1260
    %1281 = vmatprep.subr.mxu0 0.0
    %1282 = vmatpush1.msra.mxu0 %v1261
    %1283 = vmatprep.subr.mxu0 0.0
    %1284 = vmatpush1.msra.mxu0 %v1262
    %1285 = vmatprep.subr.mxu0 0.0
    %1286 = vmatpush1.msra.mxu0 %v1263
    %1287 = vmatprep.subr.mxu0 0.0
    %1288 = vmatpush1.msra.mxu0 %v1264
    %1289 = vmatprep.subr.mxu0 0.0
    %1290 = vmatpush1.msra.mxu0 %v1265
    %1291 = vmatprep.subr.mxu0 0.0
    %1292 = vmatpush1.msra.mxu0 %v1266
    %1293 = vmatprep.subr.mxu0 0.0
    %1294 = vmatpush1.msra.mxu0 %v1267
    %1295 = vmatprep.subr.mxu0 0.0
    %1296 = vmatpush1.msra.mxu0 0.0
    %1297 = vmatprep.subr.mxu0 0.0
    %1298 = vmatpush1.msra.mxu0 0.0
    %1299 = vmatprep.subr.mxu0 0.0
    %1300 = vmatpush1.msra.mxu0 0.0
    %1301 = vmatprep.subr.mxu0 0.0
    %1302 = vmatpush1.msra.mxu0 0.0
    %1303 = vmatprep.subr.mxu0 0.0
    %1304 = vmatpush1.msra.mxu0 0.0
    %1305 = vmatprep.subr.mxu0 0.0
    %1306 = vmatpush1.msra.mxu0 0.0
    %1307 = vmatprep.subr.mxu0 0.0
    %1308 = vmatpush1.msra.mxu0 0.0
    %1309 = vmatprep.subr.mxu0 0.0
    %1310 = vmatpush1.msra.mxu0 0.0
    %1311 = vmatprep.subr.mxu0 0.0
    %1312 = vmatpush1.msra.mxu0 0.0
    %1313 = vmatprep.subr.mxu0 0.0
    %1314 = vmatpush1.msra.mxu0 0.0
    %1315 = vmatprep.subr.mxu0 0.0
    %1316 = vmatpush1.msra.mxu0 0.0
    %1317 = vmatprep.subr.mxu0 0.0
    %1318 = vmatpush1.msra.mxu0 0.0
    %1319 = vmatprep.subr.mxu0 0.0
    %1320 = vmatpush1.msra.mxu0 0.0
    %1321 = vmatprep.subr.mxu0 0.0
    %1322 = vmatpush1.msra.mxu0 0.0
    %1323 = vmatprep.subr.mxu0 0.0
    %1324 = vmatpush1.msra.mxu0 0.0
    %1325 = vmatprep.subr.mxu0 0.0
    %1326 = vmatpush1.msra.mxu0 0.0
    %1327 = vmatprep.subr.mxu0 0.0
    %1328 = vmatpush1.msra.mxu0 0.0
    %1329 = vmatprep.subr.mxu0 0.0
    %1330 = vmatpush1.msra.mxu0 0.0
    %1331 = vmatprep.subr.mxu0 0.0
    %1332 = vmatpush1.msra.mxu0 0.0
    %1333 = vmatprep.subr.mxu0 0.0
    %1334 = vmatpush1.msra.mxu0 0.0
    %1335 = vmatprep.subr.mxu0 0.0
    %1336 = vmatpush1.msra.mxu0 0.0
    %1337 = vmatprep.subr.mxu0 0.0
    %1338 = vmatpush1.msra.mxu0 0.0
    %1339 = vmatprep.subr.mxu0 0.0
    %1340 = vmatpush1.msra.mxu0 0.0
    %1341 = vmatprep.subr.mxu0 0.0
    %1342 = vmatpush1.msra.mxu0 0.0
    %1343 = vmatprep.mubr.f32.mxu0 0.0
    %1344 = vmatmul.mubr.f32.gmra.mrb[0].mxu0 %v1274
    %v1345 = vpop.f32.mrb[0].mxu0
    %v1346 = vadd.f32 %v1271, %v1345
    %v1347 = vpop.f32.mrb[0].mxu0
    %1348 = vmatprep.mubr.f32.mxu0 0.0
    %1349 = vmatmul.mubr.f32.gmra.mrb[0].mxu0 %v1277
    %v1350 = vpop.f32.mrb[0].mxu0
    %v1351 = vadd.f32 %v1271, %v1350
    %v1352 = vpop.f32.mrb[0].mxu0
    %1353 = vdwg.mxu0
    %v1354 = vadd.f32 %v1346, %v1148
    %v1355 = vadd.f32 %v1351, %v1149
    %v1356 = vsel %vm190, %v1354, 0.0
    %1357 = vadd.xlane.f32.xlu0 %v1356
    %v1358 = vpop.xlane.xlu0 %1357
    %v1359 = vsel %vm190, %v1355, 0.0
    %1360 = vadd.xlane.f32.xlu0 %v1359
    %v1361 = vpop.xlane.xlu0 %1360
    %v1362 = vmul.f32 %v1358, %v197
    %v1363 = vmul.f32 %v1361, %v197
    %v1364 = vsub.f32 %v1354, %v1362
    %v1365 = vsub.f32 %v1355, %v1363
    %v1366 = vmul.f32 %v1364, %v1364
    %v1367 = vmul.f32 %v1365, %v1365
    %v1368 = vsel %vm190, %v1366, 0.0
    %1369 = vadd.xlane.f32.xlu0 %v1368
    %v1370 = vpop.xlane.xlu0 %1369
    %v1371 = vsel %vm190, %v1367, 0.0
    %1372 = vadd.xlane.f32.xlu0 %v1371
    %v1373 = vpop.xlane.xlu0 %1372
    %v1374 = vmul.f32 %v1370, %v197
    %v1375 = vmul.f32 %v1373, %v197
    %v1376 = vadd.f32 %v1374, 1e-12
    %v1377 = vadd.f32 %v1375, 1e-12
    %v1378 = vrsqrt.pop %v1376
    %v1379 = vrsqrt.pop %v1377
    %v1380 = vmul.f32 %v1364, %v1378
    %v1381 = vmul.f32 %v1365, %v1379
    %v1382 = vlaneseq
    %v1383 = vshrl.u32 %v1382, 7
    %v1384 = vsub.s32 0, %v1383
    %v1385 = vrot.slane %v236, %v1384
    %v1386 = vmul.f32 %v1380, %v1385
    %v1387 = vmul.f32 %v1381, %v1385
    %v1388 = vlaneseq
    %v1389 = vshrl.u32 %v1388, 7
    %v1390 = vsub.s32 0, %v1389
    %v1391 = vrot.slane %v237, %v1390
    %v1392 = vadd.f32 %v1386, %v1391
    %v1393 = vadd.f32 %v1387, %v1391
    %v1394 = vld [vmem:[%s5 + $0xb] sm:$0x1]
    %v1395 = vld [vmem:[%s5 + $0xc] sm:$0x1]
    %v1396 = vld [vmem:[%s5 + $0xd] sm:$0x1]
    %v1397 = vld [vmem:[%s5 + $0xe] sm:$0x1]
    %v1398 = vld [vmem:[%s5 + $0xf] sm:$0x1]
    %v1399 = vld [vmem:[%s5 + $0x10] sm:$0x1]
    %v1400 = vld [vmem:[%s5 + $0x11] sm:$0x1]
    %v1401 = vld [vmem:[%s5 + $0x12] sm:$0x1]
    %v1402 = vld [vmem:[%s5 + $0x13] sm:$0x1]
    %s1403 = scalar_lea.vmem %s6, 192
    %v1404 = vld [vmem:[%s1403] sm:$0xff]
    %v1405 = vld [vmem:[%s1403 + $0x8] sm:$0xff]
    %v1406 = vld [vmem:[%s1403 + $0x10] sm:$0xff]
    %v1407 = vld [vmem:[%s1403 + $0x18] sm:$0xff]
    %v1408 = vlaneseq
    %v1409 = vshrl.u32 %v1408, 7
    %v1410 = vsub.s32 0, %v1409
    %v1411 = vrot.slane %v1398, %v1410
    %v1413 = vsel %vm190, %v1392, 0
    %v1416 = vsel %vm190, %v1393, 0
    %1418 = vmatprep.subr.mxu0 0.0
    %1419 = vmatpush1.msra.mxu0 %v1404
    %1420 = vmatprep.subr.mxu0 0.0
    %1421 = vmatpush1.msra.mxu0 %v1405
    %1422 = vmatprep.subr.mxu0 0.0
    %1423 = vmatpush1.msra.mxu0 %v1406
    %1424 = vmatprep.subr.mxu0 0.0
    %1425 = vmatpush1.msra.mxu0 %v1407
    %1426 = vmatprep.subr.mxu0 0.0
    %1427 = vmatpush1.msra.mxu0 0.0
    %1428 = vmatprep.subr.mxu0 0.0
    %1429 = vmatpush1.msra.mxu0 0.0
    %1430 = vmatprep.subr.mxu0 0.0
    %1431 = vmatpush1.msra.mxu0 0.0
    %1432 = vmatprep.subr.mxu0 0.0
    %1433 = vmatpush1.msra.mxu0 0.0
    %1434 = vmatprep.subr.mxu0 0.0
    %1435 = vmatpush1.msra.mxu0 0.0
    %1436 = vmatprep.subr.mxu0 0.0
    %1437 = vmatpush1.msra.mxu0 0.0
    %1438 = vmatprep.subr.mxu0 0.0
    %1439 = vmatpush1.msra.mxu0 0.0
    %1440 = vmatprep.subr.mxu0 0.0
    %1441 = vmatpush1.msra.mxu0 0.0
    %1442 = vmatprep.subr.mxu0 0.0
    %1443 = vmatpush1.msra.mxu0 0.0
    %1444 = vmatprep.subr.mxu0 0.0
    %1445 = vmatpush1.msra.mxu0 0.0
    %1446 = vmatprep.subr.mxu0 0.0
    %1447 = vmatpush1.msra.mxu0 0.0
    %1448 = vmatprep.subr.mxu0 0.0
    %1449 = vmatpush1.msra.mxu0 0.0
    %1450 = vmatprep.subr.mxu0 0.0
    %1451 = vmatpush1.msra.mxu0 0.0
    %1452 = vmatprep.subr.mxu0 0.0
    %1453 = vmatpush1.msra.mxu0 0.0
    %1454 = vmatprep.subr.mxu0 0.0
    %1455 = vmatpush1.msra.mxu0 0.0
    %1456 = vmatprep.subr.mxu0 0.0
    %1457 = vmatpush1.msra.mxu0 0.0
    %1458 = vmatprep.subr.mxu0 0.0
    %1459 = vmatpush1.msra.mxu0 0.0
    %1460 = vmatprep.subr.mxu0 0.0
    %1461 = vmatpush1.msra.mxu0 0.0
    %1462 = vmatprep.subr.mxu0 0.0
    %1463 = vmatpush1.msra.mxu0 0.0
    %1464 = vmatprep.subr.mxu0 0.0
    %1465 = vmatpush1.msra.mxu0 0.0
    %1466 = vmatprep.subr.mxu0 0.0
    %1467 = vmatpush1.msra.mxu0 0.0
    %1468 = vmatprep.subr.mxu0 0.0
    %1469 = vmatpush1.msra.mxu0 0.0
    %1470 = vmatprep.subr.mxu0 0.0
    %1471 = vmatpush1.msra.mxu0 0.0
    %1472 = vmatprep.subr.mxu0 0.0
    %1473 = vmatpush1.msra.mxu0 0.0
    %1474 = vmatprep.subr.mxu0 0.0
    %1475 = vmatpush1.msra.mxu0 0.0
    %1476 = vmatprep.subr.mxu0 0.0
    %1477 = vmatpush1.msra.mxu0 0.0
    %1478 = vmatprep.subr.mxu0 0.0
    %1479 = vmatpush1.msra.mxu0 0.0
    %1480 = vmatprep.subr.mxu0 0.0
    %1481 = vmatpush1.msra.mxu0 0.0
    %1482 = vmatprep.mubr.f32.mxu0 0.0
    %1483 = vmatmul.mubr.f32.gmra.mrb[0].mxu0 %v1413
    %v1484 = vpop.f32.mrb[0].mxu0
    %v1485 = vadd.f32 %v1411, %v1484
    %v1486 = vpop.f32.mrb[0].mxu0
    %1487 = vmatprep.mubr.f32.mxu0 0.0
    %1488 = vmatmul.mubr.f32.gmra.mrb[0].mxu0 %v1416
    %v1489 = vpop.f32.mrb[0].mxu0
    %v1490 = vadd.f32 %v1411, %v1489
    %v1491 = vpop.f32.mrb[0].mxu0
    %1492 = vdwg.mxu0
    %s1493 = scalar_lea.vmem %s6, 224
    %v1494 = vld [vmem:[%s1493] sm:$0xff]
    %v1495 = vld [vmem:[%s1493 + $0x8] sm:$0xff]
    %v1496 = vld [vmem:[%s1493 + $0x10] sm:$0xff]
    %v1497 = vld [vmem:[%s1493 + $0x18] sm:$0xff]
    %1499 = vrot.lane.b32.xlu0 %v1411, 112
    %v1500 = vpop.permute.xlu0 %1499
    %1502 = vmatprep.subr.mxu0 0.0
    %1503 = vmatpush1.msra.mxu0 %v1494
    %1504 = vmatprep.subr.mxu0 0.0
    %1505 = vmatpush1.msra.mxu0 %v1495
    %1506 = vmatprep.subr.mxu0 0.0
    %1507 = vmatpush1.msra.mxu0 %v1496
    %1508 = vmatprep.subr.mxu0 0.0
    %1509 = vmatpush1.msra.mxu0 %v1497
    %1510 = vmatprep.subr.mxu0 0.0
    %1511 = vmatpush1.msra.mxu0 0.0
    %1512 = vmatprep.subr.mxu0 0.0
    %1513 = vmatpush1.msra.mxu0 0.0
    %1514 = vmatprep.subr.mxu0 0.0
    %1515 = vmatpush1.msra.mxu0 0.0
    %1516 = vmatprep.subr.mxu0 0.0
    %1517 = vmatpush1.msra.mxu0 0.0
    %1518 = vmatprep.subr.mxu0 0.0
    %1519 = vmatpush1.msra.mxu0 0.0
    %1520 = vmatprep.subr.mxu0 0.0
    %1521 = vmatpush1.msra.mxu0 0.0
    %1522 = vmatprep.subr.mxu0 0.0
    %1523 = vmatpush1.msra.mxu0 0.0
    %1524 = vmatprep.subr.mxu0 0.0
    %1525 = vmatpush1.msra.mxu0 0.0
    %1526 = vmatprep.subr.mxu0 0.0
    %1527 = vmatpush1.msra.mxu0 0.0
    %1528 = vmatprep.subr.mxu0 0.0
    %1529 = vmatpush1.msra.mxu0 0.0
    %1530 = vmatprep.subr.mxu0 0.0
    %1531 = vmatpush1.msra.mxu0 0.0
    %1532 = vmatprep.subr.mxu0 0.0
    %1533 = vmatpush1.msra.mxu0 0.0
    %1534 = vmatprep.subr.mxu0 0.0
    %1535 = vmatpush1.msra.mxu0 0.0
    %1536 = vmatprep.subr.mxu0 0.0
    %1537 = vmatpush1.msra.mxu0 0.0
    %1538 = vmatprep.subr.mxu0 0.0
    %1539 = vmatpush1.msra.mxu0 0.0
    %1540 = vmatprep.subr.mxu0 0.0
    %1541 = vmatpush1.msra.mxu0 0.0
    %1542 = vmatprep.subr.mxu0 0.0
    %1543 = vmatpush1.msra.mxu0 0.0
    %1544 = vmatprep.subr.mxu0 0.0
    %1545 = vmatpush1.msra.mxu0 0.0
    %1546 = vmatprep.subr.mxu0 0.0
    %1547 = vmatpush1.msra.mxu0 0.0
    %1548 = vmatprep.subr.mxu0 0.0
    %1549 = vmatpush1.msra.mxu0 0.0
    %1550 = vmatprep.subr.mxu0 0.0
    %1551 = vmatpush1.msra.mxu0 0.0
    %1552 = vmatprep.subr.mxu0 0.0
    %1553 = vmatpush1.msra.mxu0 0.0
    %1554 = vmatprep.subr.mxu0 0.0
    %1555 = vmatpush1.msra.mxu0 0.0
    %1556 = vmatprep.subr.mxu0 0.0
    %1557 = vmatpush1.msra.mxu0 0.0
    %1558 = vmatprep.subr.mxu0 0.0
    %1559 = vmatpush1.msra.mxu0 0.0
    %1560 = vmatprep.subr.mxu0 0.0
    %1561 = vmatpush1.msra.mxu0 0.0
    %1562 = vmatprep.subr.mxu0 0.0
    %1563 = vmatpush1.msra.mxu0 0.0
    %1564 = vmatprep.subr.mxu0 0.0
    %1565 = vmatpush1.msra.mxu0 0.0
    %1566 = vmatprep.mubr.f32.mxu0 0.0
    %1567 = vmatmul.mubr.f32.gmra.mrb[0].mxu0 %v1413
    %v1568 = vpop.f32.mrb[0].mxu0
    %v1569 = vadd.f32 %v1500, %v1568
    %v1570 = vpop.f32.mrb[0].mxu0
    %1571 = vmatprep.mubr.f32.mxu0 0.0
    %1572 = vmatmul.mubr.f32.gmra.mrb[0].mxu0 %v1416
    %v1573 = vpop.f32.mrb[0].mxu0
    %v1574 = vadd.f32 %v1500, %v1573
    %v1575 = vpop.f32.mrb[0].mxu0
    %1576 = vdwg.mxu0
    %s1577 = scalar_lea.vmem %s6, 256
    %v1578 = vld [vmem:[%s1577] sm:$0xff]
    %v1579 = vld [vmem:[%s1577 + $0x8] sm:$0xff]
    %v1580 = vld [vmem:[%s1577 + $0x10] sm:$0xff]
    %v1581 = vld [vmem:[%s1577 + $0x18] sm:$0xff]
    %v1582 = vlaneseq
    %v1583 = vshrl.u32 %v1582, 7
    %v1584 = vsub.s32 0, %v1583
    %v1585 = vrot.slane %v1399, %v1584
    %1586 = vmatprep.subr.mxu0 0.0
    %1587 = vmatpush1.msra.mxu0 %v1578
    %1588 = vmatprep.subr.mxu0 0.0
    %1589 = vmatpush1.msra.mxu0 %v1579
    %1590 = vmatprep.subr.mxu0 0.0
    %1591 = vmatpush1.msra.mxu0 %v1580
    %1592 = vmatprep.subr.mxu0 0.0
    %1593 = vmatpush1.msra.mxu0 %v1581
    %1594 = vmatprep.subr.mxu0 0.0
    %1595 = vmatpush1.msra.mxu0 0.0
    %1596 = vmatprep.subr.mxu0 0.0
    %1597 = vmatpush1.msra.mxu0 0.0
    %1598 = vmatprep.subr.mxu0 0.0
    %1599 = vmatpush1.msra.mxu0 0.0
    %1600 = vmatprep.subr.mxu0 0.0
    %1601 = vmatpush1.msra.mxu0 0.0
    %1602 = vmatprep.subr.mxu0 0.0
    %1603 = vmatpush1.msra.mxu0 0.0
    %1604 = vmatprep.subr.mxu0 0.0
    %1605 = vmatpush1.msra.mxu0 0.0
    %1606 = vmatprep.subr.mxu0 0.0
    %1607 = vmatpush1.msra.mxu0 0.0
    %1608 = vmatprep.subr.mxu0 0.0
    %1609 = vmatpush1.msra.mxu0 0.0
    %1610 = vmatprep.subr.mxu0 0.0
    %1611 = vmatpush1.msra.mxu0 0.0
    %1612 = vmatprep.subr.mxu0 0.0
    %1613 = vmatpush1.msra.mxu0 0.0
    %1614 = vmatprep.subr.mxu0 0.0
    %1615 = vmatpush1.msra.mxu0 0.0
    %1616 = vmatprep.subr.mxu0 0.0
    %1617 = vmatpush1.msra.mxu0 0.0
    %1618 = vmatprep.subr.mxu0 0.0
    %1619 = vmatpush1.msra.mxu0 0.0
    %1620 = vmatprep.subr.mxu0 0.0
    %1621 = vmatpush1.msra.mxu0 0.0
    %1622 = vmatprep.subr.mxu0 0.0
    %1623 = vmatpush1.msra.mxu0 0.0
    %1624 = vmatprep.subr.mxu0 0.0
    %1625 = vmatpush1.msra.mxu0 0.0
    %1626 = vmatprep.subr.mxu0 0.0
    %1627 = vmatpush1.msra.mxu0 0.0
    %1628 = vmatprep.subr.mxu0 0.0
    %1629 = vmatpush1.msra.mxu0 0.0
    %1630 = vmatprep.subr.mxu0 0.0
    %1631 = vmatpush1.msra.mxu0 0.0
    %1632 = vmatprep.subr.mxu0 0.0
    %1633 = vmatpush1.msra.mxu0 0.0
    %1634 = vmatprep.subr.mxu0 0.0
    %1635 = vmatpush1.msra.mxu0 0.0
    %1636 = vmatprep.subr.mxu0 0.0
    %1637 = vmatpush1.msra.mxu0 0.0
    %1638 = vmatprep.subr.mxu0 0.0
    %1639 = vmatpush1.msra.mxu0 0.0
    %1640 = vmatprep.subr.mxu0 0.0
    %1641 = vmatpush1.msra.mxu0 0.0
    %1642 = vmatprep.subr.mxu0 0.0
    %1643 = vmatpush1.msra.mxu0 0.0
    %1644 = vmatprep.subr.mxu0 0.0
    %1645 = vmatpush1.msra.mxu0 0.0
    %1646 = vmatprep.subr.mxu0 0.0
    %1647 = vmatpush1.msra.mxu0 0.0
    %1648 = vmatprep.subr.mxu0 0.0
    %1649 = vmatpush1.msra.mxu0 0.0
    %1650 = vmatprep.mubr.f32.mxu0 0.0
    %1651 = vmatmul.mubr.f32.gmra.mrb[0].mxu0 %v1413
    %v1652 = vpop.f32.mrb[0].mxu0
    %v1653 = vadd.f32 %v1585, %v1652
    %v1654 = vpop.f32.mrb[0].mxu0
    %1655 = vmatprep.mubr.f32.mxu0 0.0
    %1656 = vmatmul.mubr.f32.gmra.mrb[0].mxu0 %v1416
    %v1657 = vpop.f32.mrb[0].mxu0
    %v1658 = vadd.f32 %v1585, %v1657
    %v1659 = vpop.f32.mrb[0].mxu0
    %1660 = vdwg.mxu0
    %s1661 = scalar_lea.vmem %s6, 288
    %v1662 = vld [vmem:[%s1661] sm:$0xff]
    %v1663 = vld [vmem:[%s1661 + $0x8] sm:$0xff]
    %v1664 = vld [vmem:[%s1661 + $0x10] sm:$0xff]
    %v1665 = vld [vmem:[%s1661 + $0x18] sm:$0xff]
    %1667 = vrot.lane.b32.xlu0 %v1585, 112
    %v1668 = vpop.permute.xlu0 %1667
    %1670 = vmatprep.subr.mxu0 0.0
    %1671 = vmatpush1.msra.mxu0 %v1662
    %1672 = vmatprep.subr.mxu0 0.0
    %1673 = vmatpush1.msra.mxu0 %v1663
    %1674 = vmatprep.subr.mxu0 0.0
    %1675 = vmatpush1.msra.mxu0 %v1664
    %1676 = vmatprep.subr.mxu0 0.0
    %1677 = vmatpush1.msra.mxu0 %v1665
    %1678 = vmatprep.subr.mxu0 0.0
    %1679 = vmatpush1.msra.mxu0 0.0
    %1680 = vmatprep.subr.mxu0 0.0
    %1681 = vmatpush1.msra.mxu0 0.0
    %1682 = vmatprep.subr.mxu0 0.0
    %1683 = vmatpush1.msra.mxu0 0.0
    %1684 = vmatprep.subr.mxu0 0.0
    %1685 = vmatpush1.msra.mxu0 0.0
    %1686 = vmatprep.subr.mxu0 0.0
    %1687 = vmatpush1.msra.mxu0 0.0
    %1688 = vmatprep.subr.mxu0 0.0
    %1689 = vmatpush1.msra.mxu0 0.0
    %1690 = vmatprep.subr.mxu0 0.0
    %1691 = vmatpush1.msra.mxu0 0.0
    %1692 = vmatprep.subr.mxu0 0.0
    %1693 = vmatpush1.msra.mxu0 0.0
    %1694 = vmatprep.subr.mxu0 0.0
    %1695 = vmatpush1.msra.mxu0 0.0
    %1696 = vmatprep.subr.mxu0 0.0
    %1697 = vmatpush1.msra.mxu0 0.0
    %1698 = vmatprep.subr.mxu0 0.0
    %1699 = vmatpush1.msra.mxu0 0.0
    %1700 = vmatprep.subr.mxu0 0.0
    %1701 = vmatpush1.msra.mxu0 0.0
    %1702 = vmatprep.subr.mxu0 0.0
    %1703 = vmatpush1.msra.mxu0 0.0
    %1704 = vmatprep.subr.mxu0 0.0
    %1705 = vmatpush1.msra.mxu0 0.0
    %1706 = vmatprep.subr.mxu0 0.0
    %1707 = vmatpush1.msra.mxu0 0.0
    %1708 = vmatprep.subr.mxu0 0.0
    %1709 = vmatpush1.msra.mxu0 0.0
    %1710 = vmatprep.subr.mxu0 0.0
    %1711 = vmatpush1.msra.mxu0 0.0
    %1712 = vmatprep.subr.mxu0 0.0
    %1713 = vmatpush1.msra.mxu0 0.0
    %1714 = vmatprep.subr.mxu0 0.0
    %1715 = vmatpush1.msra.mxu0 0.0
    %1716 = vmatprep.subr.mxu0 0.0
    %1717 = vmatpush1.msra.mxu0 0.0
    %1718 = vmatprep.subr.mxu0 0.0
    %1719 = vmatpush1.msra.mxu0 0.0
    %1720 = vmatprep.subr.mxu0 0.0
    %1721 = vmatpush1.msra.mxu0 0.0
    %1722 = vmatprep.subr.mxu0 0.0
    %1723 = vmatpush1.msra.mxu0 0.0
    %1724 = vmatprep.subr.mxu0 0.0
    %1725 = vmatpush1.msra.mxu0 0.0
    %1726 = vmatprep.subr.mxu0 0.0
    %1727 = vmatpush1.msra.mxu0 0.0
    %1728 = vmatprep.subr.mxu0 0.0
    %1729 = vmatpush1.msra.mxu0 0.0
    %1730 = vmatprep.subr.mxu0 0.0
    %1731 = vmatpush1.msra.mxu0 0.0
    %1732 = vmatprep.subr.mxu0 0.0
    %1733 = vmatpush1.msra.mxu0 0.0
    %1734 = vmatprep.mubr.f32.mxu0 0.0
    %1735 = vmatmul.mubr.f32.gmra.mrb[0].mxu0 %v1413
    %v1736 = vpop.f32.mrb[0].mxu0
    %v1737 = vadd.f32 %v1668, %v1736
    %v1738 = vpop.f32.mrb[0].mxu0
    %1739 = vmatprep.mubr.f32.mxu0 0.0
    %1740 = vmatmul.mubr.f32.gmra.mrb[0].mxu0 %v1416
    %v1741 = vpop.f32.mrb[0].mxu0
    %v1742 = vadd.f32 %v1668, %v1741
    %v1743 = vpop.f32.mrb[0].mxu0
    %1744 = vdwg.mxu0
    %s1745 = scalar_lea.vmem %s6, 320
    %v1746 = vld [vmem:[%s1745] sm:$0xff]
    %v1747 = vld [vmem:[%s1745 + $0x8] sm:$0xff]
    %v1748 = vld [vmem:[%s1745 + $0x10] sm:$0xff]
    %v1749 = vld [vmem:[%s1745 + $0x18] sm:$0xff]
    %v1750 = vlaneseq
    %v1751 = vshrl.u32 %v1750, 7
    %v1752 = vsub.s32 0, %v1751
    %v1753 = vrot.slane %v1400, %v1752
    %1754 = vmatprep.subr.mxu0 0.0
    %1755 = vmatpush1.msra.mxu0 %v1746
    %1756 = vmatprep.subr.mxu0 0.0
    %1757 = vmatpush1.msra.mxu0 %v1747
    %1758 = vmatprep.subr.mxu0 0.0
    %1759 = vmatpush1.msra.mxu0 %v1748
    %1760 = vmatprep.subr.mxu0 0.0
    %1761 = vmatpush1.msra.mxu0 %v1749
    %1762 = vmatprep.subr.mxu0 0.0
    %1763 = vmatpush1.msra.mxu0 0.0
    %1764 = vmatprep.subr.mxu0 0.0
    %1765 = vmatpush1.msra.mxu0 0.0
    %1766 = vmatprep.subr.mxu0 0.0
    %1767 = vmatpush1.msra.mxu0 0.0
    %1768 = vmatprep.subr.mxu0 0.0
    %1769 = vmatpush1.msra.mxu0 0.0
    %1770 = vmatprep.subr.mxu0 0.0
    %1771 = vmatpush1.msra.mxu0 0.0
    %1772 = vmatprep.subr.mxu0 0.0
    %1773 = vmatpush1.msra.mxu0 0.0
    %1774 = vmatprep.subr.mxu0 0.0
    %1775 = vmatpush1.msra.mxu0 0.0
    %1776 = vmatprep.subr.mxu0 0.0
    %1777 = vmatpush1.msra.mxu0 0.0
    %1778 = vmatprep.subr.mxu0 0.0
    %1779 = vmatpush1.msra.mxu0 0.0
    %1780 = vmatprep.subr.mxu0 0.0
    %1781 = vmatpush1.msra.mxu0 0.0
    %1782 = vmatprep.subr.mxu0 0.0
    %1783 = vmatpush1.msra.mxu0 0.0
    %1784 = vmatprep.subr.mxu0 0.0
    %1785 = vmatpush1.msra.mxu0 0.0
    %1786 = vmatprep.subr.mxu0 0.0
    %1787 = vmatpush1.msra.mxu0 0.0
    %1788 = vmatprep.subr.mxu0 0.0
    %1789 = vmatpush1.msra.mxu0 0.0
    %1790 = vmatprep.subr.mxu0 0.0
    %1791 = vmatpush1.msra.mxu0 0.0
    %1792 = vmatprep.subr.mxu0 0.0
    %1793 = vmatpush1.msra.mxu0 0.0
    %1794 = vmatprep.subr.mxu0 0.0
    %1795 = vmatpush1.msra.mxu0 0.0
    %1796 = vmatprep.subr.mxu0 0.0
    %1797 = vmatpush1.msra.mxu0 0.0
    %1798 = vmatprep.subr.mxu0 0.0
    %1799 = vmatpush1.msra.mxu0 0.0
    %1800 = vmatprep.subr.mxu0 0.0
    %1801 = vmatpush1.msra.mxu0 0.0
    %1802 = vmatprep.subr.mxu0 0.0
    %1803 = vmatpush1.msra.mxu0 0.0
    %1804 = vmatprep.subr.mxu0 0.0
    %1805 = vmatpush1.msra.mxu0 0.0
    %1806 = vmatprep.subr.mxu0 0.0
    %1807 = vmatpush1.msra.mxu0 0.0
    %1808 = vmatprep.subr.mxu0 0.0
    %1809 = vmatpush1.msra.mxu0 0.0
    %1810 = vmatprep.subr.mxu0 0.0
    %1811 = vmatpush1.msra.mxu0 0.0
    %1812 = vmatprep.subr.mxu0 0.0
    %1813 = vmatpush1.msra.mxu0 0.0
    %1814 = vmatprep.subr.mxu0 0.0
    %1815 = vmatpush1.msra.mxu0 0.0
    %1816 = vmatprep.subr.mxu0 0.0
    %1817 = vmatpush1.msra.mxu0 0.0
    %1818 = vmatprep.mubr.f32.mxu0 0.0
    %1819 = vmatmul.mubr.f32.gmra.mrb[0].mxu0 %v1413
    %v1820 = vpop.f32.mrb[0].mxu0
    %v1821 = vadd.f32 %v1753, %v1820
    %v1822 = vpop.f32.mrb[0].mxu0
    %1823 = vmatprep.mubr.f32.mxu0 0.0
    %1824 = vmatmul.mubr.f32.gmra.mrb[0].mxu0 %v1416
    %v1825 = vpop.f32.mrb[0].mxu0
    %v1826 = vadd.f32 %v1753, %v1825
    %v1827 = vpop.f32.mrb[0].mxu0
    %1828 = vdwg.mxu0
    %s1829 = scalar_lea.vmem %s6, 352
    %v1830 = vld [vmem:[%s1829] sm:$0xff]
    %v1831 = vld [vmem:[%s1829 + $0x8] sm:$0xff]
    %v1832 = vld [vmem:[%s1829 + $0x10] sm:$0xff]
    %v1833 = vld [vmem:[%s1829 + $0x18] sm:$0xff]
    %1835 = vrot.lane.b32.xlu0 %v1753, 112
    %v1836 = vpop.permute.xlu0 %1835
    %1838 = vmatprep.subr.mxu0 0.0
    %1839 = vmatpush1.msra.mxu0 %v1830
    %1840 = vmatprep.subr.mxu0 0.0
    %1841 = vmatpush1.msra.mxu0 %v1831
    %1842 = vmatprep.subr.mxu0 0.0
    %1843 = vmatpush1.msra.mxu0 %v1832
    %1844 = vmatprep.subr.mxu0 0.0
    %1845 = vmatpush1.msra.mxu0 %v1833
    %1846 = vmatprep.subr.mxu0 0.0
    %1847 = vmatpush1.msra.mxu0 0.0
    %1848 = vmatprep.subr.mxu0 0.0
    %1849 = vmatpush1.msra.mxu0 0.0
    %1850 = vmatprep.subr.mxu0 0.0
    %1851 = vmatpush1.msra.mxu0 0.0
    %1852 = vmatprep.subr.mxu0 0.0
    %1853 = vmatpush1.msra.mxu0 0.0
    %1854 = vmatprep.subr.mxu0 0.0
    %1855 = vmatpush1.msra.mxu0 0.0
    %1856 = vmatprep.subr.mxu0 0.0
    %1857 = vmatpush1.msra.mxu0 0.0
    %1858 = vmatprep.subr.mxu0 0.0
    %1859 = vmatpush1.msra.mxu0 0.0
    %1860 = vmatprep.subr.mxu0 0.0
    %1861 = vmatpush1.msra.mxu0 0.0
    %1862 = vmatprep.subr.mxu0 0.0
    %1863 = vmatpush1.msra.mxu0 0.0
    %1864 = vmatprep.subr.mxu0 0.0
    %1865 = vmatpush1.msra.mxu0 0.0
    %1866 = vmatprep.subr.mxu0 0.0
    %1867 = vmatpush1.msra.mxu0 0.0
    %1868 = vmatprep.subr.mxu0 0.0
    %1869 = vmatpush1.msra.mxu0 0.0
    %1870 = vmatprep.subr.mxu0 0.0
    %1871 = vmatpush1.msra.mxu0 0.0
    %1872 = vmatprep.subr.mxu0 0.0
    %1873 = vmatpush1.msra.mxu0 0.0
    %1874 = vmatprep.subr.mxu0 0.0
    %1875 = vmatpush1.msra.mxu0 0.0
    %1876 = vmatprep.subr.mxu0 0.0
    %1877 = vmatpush1.msra.mxu0 0.0
    %1878 = vmatprep.subr.mxu0 0.0
    %1879 = vmatpush1.msra.mxu0 0.0
    %1880 = vmatprep.subr.mxu0 0.0
    %1881 = vmatpush1.msra.mxu0 0.0
    %1882 = vmatprep.subr.mxu0 0.0
    %1883 = vmatpush1.msra.mxu0 0.0
    %1884 = vmatprep.subr.mxu0 0.0
    %1885 = vmatpush1.msra.mxu0 0.0
    %1886 = vmatprep.subr.mxu0 0.0
    %1887 = vmatpush1.msra.mxu0 0.0
    %1888 = vmatprep.subr.mxu0 0.0
    %1889 = vmatpush1.msra.mxu0 0.0
    %1890 = vmatprep.subr.mxu0 0.0
    %1891 = vmatpush1.msra.mxu0 0.0
    %1892 = vmatprep.subr.mxu0 0.0
    %1893 = vmatpush1.msra.mxu0 0.0
    %1894 = vmatprep.subr.mxu0 0.0
    %1895 = vmatpush1.msra.mxu0 0.0
    %1896 = vmatprep.subr.mxu0 0.0
    %1897 = vmatpush1.msra.mxu0 0.0
    %1898 = vmatprep.subr.mxu0 0.0
    %1899 = vmatpush1.msra.mxu0 0.0
    %1900 = vmatprep.subr.mxu0 0.0
    %1901 = vmatpush1.msra.mxu0 0.0
    %1902 = vmatprep.mubr.f32.mxu0 0.0
    %1903 = vmatmul.mubr.f32.gmra.mrb[0].mxu0 %v1413
    %v1904 = vpop.f32.mrb[0].mxu0
    %v1905 = vadd.f32 %v1836, %v1904
    %v1906 = vpop.f32.mrb[0].mxu0
    %1907 = vmatprep.mubr.f32.mxu0 0.0
    %1908 = vmatmul.mubr.f32.gmra.mrb[0].mxu0 %v1416
    %v1909 = vpop.f32.mrb[0].mxu0
    %v1910 = vadd.f32 %v1836, %v1909
    %v1911 = vpop.f32.mrb[0].mxu0
    %1912 = vdwg.mxu0
    %v1914 = vsel %vm752, %v1485, 0
    %v1917 = vsel %vm752, %v1490, 0
    %v1920 = vsel %vm752, %v1569, 0
    %v1923 = vsel %vm752, %v1574, 0
    %v1926 = vsel %vm752, %v1653, 0
    %v1929 = vsel %vm752, %v1658, 0
    %v1932 = vsel %vm752, %v1737, 0
    %v1935 = vsel %vm752, %v1742, 0
    %1937 = vmatprep.subr.mxu0 0.0
    %1938 = vmatpush1.xpose.msra.mxu0 %v1926
    %1939 = vmatprep.subr.mxu0 0.0
    %1940 = vmatpush1.xpose.msra.mxu0 %v1929
    %1941 = vmatprep.subr.mxu0 0.0
    %1942 = vmatpush1.xpose.msra.mxu0 %v1932
    %1943 = vmatprep.subr.mxu0 0.0
    %1944 = vmatpush1.xpose.msra.mxu0 %v1935
    %1945 = vmatprep.subr.mxu0 0.0
    %1946 = vmatpush1.xpose.msra.mxu0 0.0
    %1947 = vmatprep.subr.mxu0 0.0
    %1948 = vmatpush1.xpose.msra.mxu0 0.0
    %1949 = vmatprep.subr.mxu0 0.0
    %1950 = vmatpush1.xpose.msra.mxu0 0.0
    %1951 = vmatprep.subr.mxu0 0.0
    %1952 = vmatpush1.xpose.msra.mxu0 0.0
    %1953 = vmatprep.subr.mxu0 0.0
    %1954 = vmatpush1.xpose.msra.mxu0 0.0
    %1955 = vmatprep.subr.mxu0 0.0
    %1956 = vmatpush1.xpose.msra.mxu0 0.0
    %1957 = vmatprep.subr.mxu0 0.0
    %1958 = vmatpush1.xpose.msra.mxu0 0.0
    %1959 = vmatprep.subr.mxu0 0.0
    %1960 = vmatpush1.xpose.msra.mxu0 0.0
    %1961 = vmatprep.subr.mxu0 0.0
    %1962 = vmatpush1.xpose.msra.mxu0 0.0
    %1963 = vmatprep.subr.mxu0 0.0
    %1964 = vmatpush1.xpose.msra.mxu0 0.0
    %1965 = vmatprep.subr.mxu0 0.0
    %1966 = vmatpush1.xpose.msra.mxu0 0.0
    %1967 = vmatprep.subr.mxu0 0.0
    %1968 = vmatpush1.xpose.msra.mxu0 0.0
    %1969 = vmatprep.subr.mxu0 0.0
    %1970 = vmatpush1.xpose.msra.mxu0 0.0
    %1971 = vmatprep.subr.mxu0 0.0
    %1972 = vmatpush1.xpose.msra.mxu0 0.0
    %1973 = vmatprep.subr.mxu0 0.0
    %1974 = vmatpush1.xpose.msra.mxu0 0.0
    %1975 = vmatprep.subr.mxu0 0.0
    %1976 = vmatpush1.xpose.msra.mxu0 0.0
    %1977 = vmatprep.subr.mxu0 0.0
    %1978 = vmatpush1.xpose.msra.mxu0 0.0
    %1979 = vmatprep.subr.mxu0 0.0
    %1980 = vmatpush1.xpose.msra.mxu0 0.0
    %1981 = vmatprep.subr.mxu0 0.0
    %1982 = vmatpush1.xpose.msra.mxu0 0.0
    %1983 = vmatprep.subr.mxu0 0.0
    %1984 = vmatpush1.xpose.msra.mxu0 0.0
    %1985 = vmatprep.subr.mxu0 0.0
    %1986 = vmatpush1.xpose.msra.mxu0 0.0
    %1987 = vmatprep.subr.mxu0 0.0
    %1988 = vmatpush1.xpose.msra.mxu0 0.0
    %1989 = vmatprep.subr.mxu0 0.0
    %1990 = vmatpush1.xpose.msra.mxu0 0.0
    %1991 = vmatprep.subr.mxu0 0.0
    %1992 = vmatpush1.xpose.msra.mxu0 0.0
    %1993 = vmatprep.subr.mxu0 0.0
    %1994 = vmatpush1.xpose.msra.mxu0 0.0
    %1995 = vmatprep.subr.mxu0 0.0
    %1996 = vmatpush1.xpose.msra.mxu0 0.0
    %1997 = vmatprep.subr.mxu0 0.0
    %1998 = vmatpush1.xpose.msra.mxu0 0.0
    %1999 = vmatprep.subr.mxu0 0.0
    %2000 = vmatpush1.xpose.msra.mxu0 0.0
    %2001 = vmatprep.mubr.f32.mxu0 0.0
    %2002 = vmatmul.mubr.f32.gmra.mrb[0].mxu0 %v1914
    %v2003 = vpop.f32.mrb[0].mxu0
    %v2004 = vadd.f32 0.0, %v2003
    %v2005 = vpop.f32.mrb[0].mxu0
    %2006 = vmatprep.mubr.f32.mxu0 0.0
    %2007 = vmatmul.mubr.f32.gmra.mrb[0].mxu0 %v1917
    %v2008 = vpop.f32.mrb[0].mxu0
    %v2009 = vadd.f32 0.0, %v2008
    %v2010 = vpop.f32.mrb[0].mxu0
    %2011 = vmatprep.mubr.f32.mxu0 0.0
    %2012 = vmatmul.mubr.f32.gmra.mrb[0].mxu0 %v1920
    %v2013 = vpop.f32.mrb[0].mxu0
    %v2014 = vadd.f32 0.0, %v2013
    %v2015 = vpop.f32.mrb[0].mxu0
    %2016 = vmatprep.mubr.f32.mxu0 0.0
    %2017 = vmatmul.mubr.f32.gmra.mrb[0].mxu0 %v1923
    %v2018 = vpop.f32.mrb[0].mxu0
    %v2019 = vadd.f32 0.0, %v2018
    %v2020 = vpop.f32.mrb[0].mxu0
    %2021 = vdwg.mxu0
    %v2022 = vmul.f32 %v2004, 0.25
    %v2023 = vmul.f32 %v2009, 0.25
    %v2024 = vmul.f32 %v2014, 0.25
    %v2025 = vmul.f32 %v2019, 0.25
    %v2026 = vadd.f32 %v2022, %v230
    %v2027 = vadd.f32 %v2023, %v231
    %v2028 = vadd.f32 %v2024, %v232
    %v2029 = vadd.f32 %v2025, %v233
    %v2030 = vsel %vm190, %v2026, -inf
    %2031 = vmax.xlane.f32.xlu0 %v2030
    %v2032 = vpop.xlane.xlu0 %2031
    %v2033 = vsel %vm190, %v2027, -inf
    %2034 = vmax.xlane.f32.xlu0 %v2033
    %v2035 = vpop.xlane.xlu0 %2034
    %v2036 = vsel %vm190, %v2028, -inf
    %2037 = vmax.xlane.f32.xlu0 %v2036
    %v2038 = vpop.xlane.xlu0 %2037
    %v2039 = vsel %vm190, %v2029, -inf
    %2040 = vmax.xlane.f32.xlu0 %v2039
    %v2041 = vpop.xlane.xlu0 %2040
    %v2042 = vsub.f32 %v2026, %v2032
    %v2043 = vsub.f32 %v2027, %v2035
    %v2044 = vsub.f32 %v2028, %v2038
    %v2045 = vsub.f32 %v2029, %v2041
    %v2046 = vmul.f32 %v2042, 1.442695
    %v2047 = vpow.pop %v2046
    %v2048 = vmul.f32 %v2043, 1.442695
    %v2049 = vpow.pop %v2048
    %v2050 = vmul.f32 %v2044, 1.442695
    %v2051 = vpow.pop %v2050
    %v2052 = vmul.f32 %v2045, 1.442695
    %v2053 = vpow.pop %v2052
    %v2054 = vsel %vm190, %v2047, 0.0
    %2055 = vadd.xlane.f32.xlu0 %v2054
    %v2056 = vpop.xlane.xlu0 %2055
    %v2057 = vsel %vm190, %v2049, 0.0
    %2058 = vadd.xlane.f32.xlu0 %v2057
    %v2059 = vpop.xlane.xlu0 %2058
    %v2060 = vsel %vm190, %v2051, 0.0
    %2061 = vadd.xlane.f32.xlu0 %v2060
    %v2062 = vpop.xlane.xlu0 %2061
    %v2063 = vsel %vm190, %v2053, 0.0
    %2064 = vadd.xlane.f32.xlu0 %v2063
    %v2065 = vpop.xlane.xlu0 %2064
    %v2066 = vrcp.pop %v2056
    %v2067 = vmul.f32 %v2047, %v2066
    %v2068 = vrcp.pop %v2059
    %v2069 = vmul.f32 %v2049, %v2068
    %v2070 = vrcp.pop %v2062
    %v2071 = vmul.f32 %v2051, %v2070
    %v2072 = vrcp.pop %v2065
    %v2073 = vmul.f32 %v2053, %v2072
    %v2075 = vsel %vm190, %v2067, 0
    %v2078 = vsel %vm190, %v2069, 0
    %v2081 = vsel %vm190, %v2071, 0
    %v2084 = vsel %vm190, %v2073, 0
    %2086 = vmatprep.subr.mxu0 0.0
    %2087 = vmatpush1.msra.mxu0 %v1821
    %2088 = vmatprep.subr.mxu0 0.0
    %2089 = vmatpush1.msra.mxu0 %v1826
    %2090 = vmatprep.subr.mxu0 0.0
    %2091 = vmatpush1.msra.mxu0 %v1905
    %2092 = vmatprep.subr.mxu0 0.0
    %2093 = vmatpush1.msra.mxu0 %v1910
    %2094 = vmatprep.subr.mxu0 0.0
    %2095 = vmatpush1.msra.mxu0 0.0
    %2096 = vmatprep.subr.mxu0 0.0
    %2097 = vmatpush1.msra.mxu0 0.0
    %2098 = vmatprep.subr.mxu0 0.0
    %2099 = vmatpush1.msra.mxu0 0.0
    %2100 = vmatprep.subr.mxu0 0.0
    %2101 = vmatpush1.msra.mxu0 0.0
    %2102 = vmatprep.subr.mxu0 0.0
    %2103 = vmatpush1.msra.mxu0 0.0
    %2104 = vmatprep.subr.mxu0 0.0
    %2105 = vmatpush1.msra.mxu0 0.0
    %2106 = vmatprep.subr.mxu0 0.0
    %2107 = vmatpush1.msra.mxu0 0.0
    %2108 = vmatprep.subr.mxu0 0.0
    %2109 = vmatpush1.msra.mxu0 0.0
    %2110 = vmatprep.subr.mxu0 0.0
    %2111 = vmatpush1.msra.mxu0 0.0
    %2112 = vmatprep.subr.mxu0 0.0
    %2113 = vmatpush1.msra.mxu0 0.0
    %2114 = vmatprep.subr.mxu0 0.0
    %2115 = vmatpush1.msra.mxu0 0.0
    %2116 = vmatprep.subr.mxu0 0.0
    %2117 = vmatpush1.msra.mxu0 0.0
    %2118 = vmatprep.subr.mxu0 0.0
    %2119 = vmatpush1.msra.mxu0 0.0
    %2120 = vmatprep.subr.mxu0 0.0
    %2121 = vmatpush1.msra.mxu0 0.0
    %2122 = vmatprep.subr.mxu0 0.0
    %2123 = vmatpush1.msra.mxu0 0.0
    %2124 = vmatprep.subr.mxu0 0.0
    %2125 = vmatpush1.msra.mxu0 0.0
    %2126 = vmatprep.subr.mxu0 0.0
    %2127 = vmatpush1.msra.mxu0 0.0
    %2128 = vmatprep.subr.mxu0 0.0
    %2129 = vmatpush1.msra.mxu0 0.0
    %2130 = vmatprep.subr.mxu0 0.0
    %2131 = vmatpush1.msra.mxu0 0.0
    %2132 = vmatprep.subr.mxu0 0.0
    %2133 = vmatpush1.msra.mxu0 0.0
    %2134 = vmatprep.subr.mxu0 0.0
    %2135 = vmatpush1.msra.mxu0 0.0
    %2136 = vmatprep.subr.mxu0 0.0
    %2137 = vmatpush1.msra.mxu0 0.0
    %2138 = vmatprep.subr.mxu0 0.0
    %2139 = vmatpush1.msra.mxu0 0.0
    %2140 = vmatprep.subr.mxu0 0.0
    %2141 = vmatpush1.msra.mxu0 0.0
    %2142 = vmatprep.subr.mxu0 0.0
    %2143 = vmatpush1.msra.mxu0 0.0
    %2144 = vmatprep.subr.mxu0 0.0
    %2145 = vmatpush1.msra.mxu0 0.0
    %2146 = vmatprep.subr.mxu0 0.0
    %2147 = vmatpush1.msra.mxu0 0.0
    %2148 = vmatprep.subr.mxu0 0.0
    %2149 = vmatpush1.msra.mxu0 0.0
    %2150 = vmatprep.mubr.f32.mxu0 0.0
    %2151 = vmatmul.mubr.f32.gmra.mrb[0].mxu0 %v2075
    %v2152 = vpop.f32.mrb[0].mxu0
    %v2153 = vadd.f32 0.0, %v2152
    %v2154 = vpop.f32.mrb[0].mxu0
    %2155 = vmatprep.mubr.f32.mxu0 0.0
    %2156 = vmatmul.mubr.f32.gmra.mrb[0].mxu0 %v2078
    %v2157 = vpop.f32.mrb[0].mxu0
    %v2158 = vadd.f32 0.0, %v2157
    %v2159 = vpop.f32.mrb[0].mxu0
    %2160 = vmatprep.mubr.f32.mxu0 0.0
    %2161 = vmatmul.mubr.f32.gmra.mrb[0].mxu0 %v2081
    %v2162 = vpop.f32.mrb[0].mxu0
    %v2163 = vadd.f32 0.0, %v2162
    %v2164 = vpop.f32.mrb[0].mxu0
    %2165 = vmatprep.mubr.f32.mxu0 0.0
    %2166 = vmatmul.mubr.f32.gmra.mrb[0].mxu0 %v2084
    %v2167 = vpop.f32.mrb[0].mxu0
    %v2168 = vadd.f32 0.0, %v2167
    %v2169 = vpop.f32.mrb[0].mxu0
    %2170 = vdwg.mxu0
    %2173 = vrot.lane.b32.xlu0 %v2163, 16
    %v2174 = vpop.permute.xlu0 %2173
    %2175 = vrot.lane.b32.xlu0 %v2168, 16
    %v2176 = vpop.permute.xlu0 %2175
    %v2179 = vsel %vm752, %v2153, %v2174
    %v2180 = vsel %vm752, %v2158, %v2176
    %s2181 = scalar_lea.vmem %s7, 32
    %v2182 = vld [vmem:[%s2181] sm:$0xff]
    %v2183 = vld [vmem:[%s2181 + $0x8] sm:$0xff]
    %v2184 = vld [vmem:[%s2181 + $0x10] sm:$0xff]
    %v2185 = vld [vmem:[%s2181 + $0x18] sm:$0xff]
    %v2186 = vlaneseq
    %v2187 = vshrl.u32 %v2186, 7
    %v2188 = vsub.s32 0, %v2187
    %v2189 = vrot.slane %v1401, %v2188
    %v2191 = vsel %vm190, %v2179, 0
    %v2194 = vsel %vm190, %v2180, 0
    %2196 = vmatprep.subr.mxu0 0.0
    %2197 = vmatpush1.msra.mxu0 %v2182
    %2198 = vmatprep.subr.mxu0 0.0
    %2199 = vmatpush1.msra.mxu0 %v2183
    %2200 = vmatprep.subr.mxu0 0.0
    %2201 = vmatpush1.msra.mxu0 %v2184
    %2202 = vmatprep.subr.mxu0 0.0
    %2203 = vmatpush1.msra.mxu0 %v2185
    %2204 = vmatprep.subr.mxu0 0.0
    %2205 = vmatpush1.msra.mxu0 0.0
    %2206 = vmatprep.subr.mxu0 0.0
    %2207 = vmatpush1.msra.mxu0 0.0
    %2208 = vmatprep.subr.mxu0 0.0
    %2209 = vmatpush1.msra.mxu0 0.0
    %2210 = vmatprep.subr.mxu0 0.0
    %2211 = vmatpush1.msra.mxu0 0.0
    %2212 = vmatprep.subr.mxu0 0.0
    %2213 = vmatpush1.msra.mxu0 0.0
    %2214 = vmatprep.subr.mxu0 0.0
    %2215 = vmatpush1.msra.mxu0 0.0
    %2216 = vmatprep.subr.mxu0 0.0
    %2217 = vmatpush1.msra.mxu0 0.0
    %2218 = vmatprep.subr.mxu0 0.0
    %2219 = vmatpush1.msra.mxu0 0.0
    %2220 = vmatprep.subr.mxu0 0.0
    %2221 = vmatpush1.msra.mxu0 0.0
    %2222 = vmatprep.subr.mxu0 0.0
    %2223 = vmatpush1.msra.mxu0 0.0
    %2224 = vmatprep.subr.mxu0 0.0
    %2225 = vmatpush1.msra.mxu0 0.0
    %2226 = vmatprep.subr.mxu0 0.0
    %2227 = vmatpush1.msra.mxu0 0.0
    %2228 = vmatprep.subr.mxu0 0.0
    %2229 = vmatpush1.msra.mxu0 0.0
    %2230 = vmatprep.subr.mxu0 0.0
    %2231 = vmatpush1.msra.mxu0 0.0
    %2232 = vmatprep.subr.mxu0 0.0
    %2233 = vmatpush1.msra.mxu0 0.0
    %2234 = vmatprep.subr.mxu0 0.0
    %2235 = vmatpush1.msra.mxu0 0.0
    %2236 = vmatprep.subr.mxu0 0.0
    %2237 = vmatpush1.msra.mxu0 0.0
    %2238 = vmatprep.subr.mxu0 0.0
    %2239 = vmatpush1.msra.mxu0 0.0
    %2240 = vmatprep.subr.mxu0 0.0
    %2241 = vmatpush1.msra.mxu0 0.0
    %2242 = vmatprep.subr.mxu0 0.0
    %2243 = vmatpush1.msra.mxu0 0.0
    %2244 = vmatprep.subr.mxu0 0.0
    %2245 = vmatpush1.msra.mxu0 0.0
    %2246 = vmatprep.subr.mxu0 0.0
    %2247 = vmatpush1.msra.mxu0 0.0
    %2248 = vmatprep.subr.mxu0 0.0
    %2249 = vmatpush1.msra.mxu0 0.0
    %2250 = vmatprep.subr.mxu0 0.0
    %2251 = vmatpush1.msra.mxu0 0.0
    %2252 = vmatprep.subr.mxu0 0.0
    %2253 = vmatpush1.msra.mxu0 0.0
    %2254 = vmatprep.subr.mxu0 0.0
    %2255 = vmatpush1.msra.mxu0 0.0
    %2256 = vmatprep.subr.mxu0 0.0
    %2257 = vmatpush1.msra.mxu0 0.0
    %2258 = vmatprep.subr.mxu0 0.0
    %2259 = vmatpush1.msra.mxu0 0.0
    %2260 = vmatprep.mubr.f32.mxu0 0.0
    %2261 = vmatmul.mubr.f32.gmra.mrb[0].mxu0 %v2191
    %v2262 = vpop.f32.mrb[0].mxu0
    %v2263 = vadd.f32 %v2189, %v2262
    %v2264 = vpop.f32.mrb[0].mxu0
    %2265 = vmatprep.mubr.f32.mxu0 0.0
    %2266 = vmatmul.mubr.f32.gmra.mrb[0].mxu0 %v2194
    %v2267 = vpop.f32.mrb[0].mxu0
    %v2268 = vadd.f32 %v2189, %v2267
    %v2269 = vpop.f32.mrb[0].mxu0
    %2270 = vdwg.mxu0
    %v2271 = vadd.f32 %v2263, %v1392
    %v2272 = vadd.f32 %v2268, %v1393
    %v2273 = vsel %vm190, %v2271, 0.0
    %2274 = vadd.xlane.f32.xlu0 %v2273
    %v2275 = vpop.xlane.xlu0 %2274
    %v2276 = vsel %vm190, %v2272, 0.0
    %2277 = vadd.xlane.f32.xlu0 %v2276
    %v2278 = vpop.xlane.xlu0 %2277
    %v2279 = vmul.f32 %v2275, %v197
    %v2280 = vmul.f32 %v2278, %v197
    %v2281 = vsub.f32 %v2271, %v2279
    %v2282 = vsub.f32 %v2272, %v2280
    %v2283 = vmul.f32 %v2281, %v2281
    %v2284 = vmul.f32 %v2282, %v2282
    %v2285 = vsel %vm190, %v2283, 0.0
    %2286 = vadd.xlane.f32.xlu0 %v2285
    %v2287 = vpop.xlane.xlu0 %2286
    %v2288 = vsel %vm190, %v2284, 0.0
    %2289 = vadd.xlane.f32.xlu0 %v2288
    %v2290 = vpop.xlane.xlu0 %2289
    %v2291 = vmul.f32 %v2287, %v197
    %v2292 = vmul.f32 %v2290, %v197
    %v2293 = vadd.f32 %v2291, 1e-12
    %v2294 = vadd.f32 %v2292, 1e-12
    %v2295 = vrsqrt.pop %v2293
    %v2296 = vrsqrt.pop %v2294
    %v2297 = vmul.f32 %v2281, %v2295
    %v2298 = vmul.f32 %v2282, %v2296
    %v2299 = vlaneseq
    %v2300 = vshrl.u32 %v2299, 7
    %v2301 = vsub.s32 0, %v2300
    %v2302 = vrot.slane %v1394, %v2301
    %v2303 = vmul.f32 %v2297, %v2302
    %v2304 = vmul.f32 %v2298, %v2302
    %v2305 = vlaneseq
    %v2306 = vshrl.u32 %v2305, 7
    %v2307 = vsub.s32 0, %v2306
    %v2308 = vrot.slane %v1395, %v2307
    %v2309 = vadd.f32 %v2303, %v2308
    %v2310 = vadd.f32 %v2304, %v2308
    %s2311 = scalar_lea.vmem %s8, 32
    %v2312 = vld [vmem:[%s2311] sm:$0xff]
    %v2313 = vld [vmem:[%s2311 + $0x8] sm:$0xff]
    %v2314 = vld [vmem:[%s2311 + $0x10] sm:$0xff]
    %v2315 = vld [vmem:[%s2311 + $0x18] sm:$0xff]
    %s2316 = scalar_lea.vmem %s9, 1
    %v2317 = vld [vmem:[%s2316] sm:$0x1]
    %v2319 = vlaneseq
    %v2320 = vshrl.u32 %v2319, 7
    %v2321 = vsub.s32 0, %v2320
    %v2322 = vrot.slane %v2317, %v2321
    %v2325 = vsel %vm190, %v2309, 0
    %v2328 = vsel %vm190, %v2310, 0
    %2330 = vmatprep.subr.mxu0 0.0
    %2331 = vmatpush1.msra.mxu0 %v2312
    %2332 = vmatprep.subr.mxu0 0.0
    %2333 = vmatpush1.msra.mxu0 %v2313
    %2334 = vmatprep.subr.mxu0 0.0
    %2335 = vmatpush1.msra.mxu0 %v2314
    %2336 = vmatprep.subr.mxu0 0.0
    %2337 = vmatpush1.msra.mxu0 %v2315
    %2338 = vmatprep.subr.mxu0 0.0
    %2339 = vmatpush1.msra.mxu0 0.0
    %2340 = vmatprep.subr.mxu0 0.0
    %2341 = vmatpush1.msra.mxu0 0.0
    %2342 = vmatprep.subr.mxu0 0.0
    %2343 = vmatpush1.msra.mxu0 0.0
    %2344 = vmatprep.subr.mxu0 0.0
    %2345 = vmatpush1.msra.mxu0 0.0
    %2346 = vmatprep.subr.mxu0 0.0
    %2347 = vmatpush1.msra.mxu0 0.0
    %2348 = vmatprep.subr.mxu0 0.0
    %2349 = vmatpush1.msra.mxu0 0.0
    %2350 = vmatprep.subr.mxu0 0.0
    %2351 = vmatpush1.msra.mxu0 0.0
    %2352 = vmatprep.subr.mxu0 0.0
    %2353 = vmatpush1.msra.mxu0 0.0
    %2354 = vmatprep.subr.mxu0 0.0
    %2355 = vmatpush1.msra.mxu0 0.0
    %2356 = vmatprep.subr.mxu0 0.0
    %2357 = vmatpush1.msra.mxu0 0.0
    %2358 = vmatprep.subr.mxu0 0.0
    %2359 = vmatpush1.msra.mxu0 0.0
    %2360 = vmatprep.subr.mxu0 0.0
    %2361 = vmatpush1.msra.mxu0 0.0
    %2362 = vmatprep.subr.mxu0 0.0
    %2363 = vmatpush1.msra.mxu0 0.0
    %2364 = vmatprep.subr.mxu0 0.0
    %2365 = vmatpush1.msra.mxu0 0.0
    %2366 = vmatprep.subr.mxu0 0.0
    %2367 = vmatpush1.msra.mxu0 0.0
    %2368 = vmatprep.subr.mxu0 0.0
    %2369 = vmatpush1.msra.mxu0 0.0
    %2370 = vmatprep.subr.mxu0 0.0
    %2371 = vmatpush1.msra.mxu0 0.0
    %2372 = vmatprep.subr.mxu0 0.0
    %2373 = vmatpush1.msra.mxu0 0.0
    %2374 = vmatprep.subr.mxu0 0.0
    %2375 = vmatpush1.msra.mxu0 0.0
    %2376 = vmatprep.subr.mxu0 0.0
    %2377 = vmatpush1.msra.mxu0 0.0
    %2378 = vmatprep.subr.mxu0 0.0
    %2379 = vmatpush1.msra.mxu0 0.0
    %2380 = vmatprep.subr.mxu0 0.0
    %2381 = vmatpush1.msra.mxu0 0.0
    %2382 = vmatprep.subr.mxu0 0.0
    %2383 = vmatpush1.msra.mxu0 0.0
    %2384 = vmatprep.subr.mxu0 0.0
    %2385 = vmatpush1.msra.mxu0 0.0
    %2386 = vmatprep.subr.mxu0 0.0
    %2387 = vmatpush1.msra.mxu0 0.0
    %2388 = vmatprep.subr.mxu0 0.0
    %2389 = vmatpush1.msra.mxu0 0.0
    %2390 = vmatprep.subr.mxu0 0.0
    %2391 = vmatpush1.msra.mxu0 0.0
    %2392 = vmatprep.subr.mxu0 0.0
    %2393 = vmatpush1.msra.mxu0 0.0
    %2394 = vmatprep.mubr.f32.mxu0 0.0
    %2395 = vmatmul.mubr.f32.gmra.mrb[0].mxu0 %v2325
    %v2396 = vpop.f32.mrb[0].mxu0
    %v2397 = vadd.f32 %v2322, %v2396
    %v2398 = vpop.f32.mrb[0].mxu0
    %2399 = vmatprep.mubr.f32.mxu0 0.0
    %2400 = vmatmul.mubr.f32.gmra.mrb[0].mxu0 %v2328
    %v2401 = vpop.f32.mrb[0].mxu0
    %v2402 = vadd.f32 %v2322, %v2401
    %v2403 = vpop.f32.mrb[0].mxu0
    %2404 = vdwg.mxu0
    %v2405 = vmul.f32 %v2397, 0.5
    %v2406 = vmul.f32 %v2402, 0.5
    %v2407 = vmul.f32 %v2397, 0.044715
    %v2408 = vmul.f32 %v2402, 0.044715
    %v2409 = vmul.f32 %v2407, %v2397
    %v2410 = vmul.f32 %v2408, %v2402
    %v2411 = vmul.f32 %v2409, %v2397
    %v2412 = vmul.f32 %v2410, %v2402
    %v2413 = vadd.f32 %v2397, %v2411
    %v2414 = vadd.f32 %v2402, %v2412
    %v2415 = vmul.f32 %v2413, 0.7978846
    %v2416 = vmul.f32 %v2414, 0.7978846
    %v2417 = vtanh.pop %v2415
    %v2418 = vtanh.pop %v2416
    %v2419 = vadd.f32 %v2417, 1.0
    %v2420 = vadd.f32 %v2418, 1.0
    %v2421 = vmul.f32 %v2405, %v2419
    %v2422 = vmul.f32 %v2406, %v2420
    %s2423 = scalar_lea.vmem %s10, 64
    %v2424 = vld [vmem:[%s2423] sm:$0xff]
    %v2425 = vld [vmem:[%s2423 + $0x8] sm:$0xff]
    %v2426 = vld [vmem:[%s2423 + $0x10] sm:$0xff]
    %v2427 = vld [vmem:[%s2423 + $0x18] sm:$0xff]
    %v2428 = vld [vmem:[%s2423 + $0x20] sm:$0xff]
    %v2429 = vld [vmem:[%s2423 + $0x28] sm:$0xff]
    %v2430 = vld [vmem:[%s2423 + $0x30] sm:$0xff]
    %v2431 = vld [vmem:[%s2423 + $0x38] sm:$0xff]
    %v2432 = vlaneseq
    %v2433 = vshrl.u32 %v2432, 7
    %v2434 = vsub.s32 0, %v2433
    %v2435 = vrot.slane %v1402, %v2434
    %v2437 = vsel %vm1272, %v2421, 0
    %v2440 = vsel %vm1272, %v2422, 0
    %2442 = vmatprep.subr.mxu0 0.0
    %2443 = vmatpush1.msra.mxu0 %v2424
    %2444 = vmatprep.subr.mxu0 0.0
    %2445 = vmatpush1.msra.mxu0 %v2425
    %2446 = vmatprep.subr.mxu0 0.0
    %2447 = vmatpush1.msra.mxu0 %v2426
    %2448 = vmatprep.subr.mxu0 0.0
    %2449 = vmatpush1.msra.mxu0 %v2427
    %2450 = vmatprep.subr.mxu0 0.0
    %2451 = vmatpush1.msra.mxu0 %v2428
    %2452 = vmatprep.subr.mxu0 0.0
    %2453 = vmatpush1.msra.mxu0 %v2429
    %2454 = vmatprep.subr.mxu0 0.0
    %2455 = vmatpush1.msra.mxu0 %v2430
    %2456 = vmatprep.subr.mxu0 0.0
    %2457 = vmatpush1.msra.mxu0 %v2431
    %2458 = vmatprep.subr.mxu0 0.0
    %2459 = vmatpush1.msra.mxu0 0.0
    %2460 = vmatprep.subr.mxu0 0.0
    %2461 = vmatpush1.msra.mxu0 0.0
    %2462 = vmatprep.subr.mxu0 0.0
    %2463 = vmatpush1.msra.mxu0 0.0
    %2464 = vmatprep.subr.mxu0 0.0
    %2465 = vmatpush1.msra.mxu0 0.0
    %2466 = vmatprep.subr.mxu0 0.0
    %2467 = vmatpush1.msra.mxu0 0.0
    %2468 = vmatprep.subr.mxu0 0.0
    %2469 = vmatpush1.msra.mxu0 0.0
    %2470 = vmatprep.subr.mxu0 0.0
    %2471 = vmatpush1.msra.mxu0 0.0
    %2472 = vmatprep.subr.mxu0 0.0
    %2473 = vmatpush1.msra.mxu0 0.0
    %2474 = vmatprep.subr.mxu0 0.0
    %2475 = vmatpush1.msra.mxu0 0.0
    %2476 = vmatprep.subr.mxu0 0.0
    %2477 = vmatpush1.msra.mxu0 0.0
    %2478 = vmatprep.subr.mxu0 0.0
    %2479 = vmatpush1.msra.mxu0 0.0
    %2480 = vmatprep.subr.mxu0 0.0
    %2481 = vmatpush1.msra.mxu0 0.0
    %2482 = vmatprep.subr.mxu0 0.0
    %2483 = vmatpush1.msra.mxu0 0.0
    %2484 = vmatprep.subr.mxu0 0.0
    %2485 = vmatpush1.msra.mxu0 0.0
    %2486 = vmatprep.subr.mxu0 0.0
    %2487 = vmatpush1.msra.mxu0 0.0
    %2488 = vmatprep.subr.mxu0 0.0
    %2489 = vmatpush1.msra.mxu0 0.0
    %2490 = vmatprep.subr.mxu0 0.0
    %2491 = vmatpush1.msra.mxu0 0.0
    %2492 = vmatprep.subr.mxu0 0.0
    %2493 = vmatpush1.msra.mxu0 0.0
    %2494 = vmatprep.subr.mxu0 0.0
    %2495 = vmatpush1.msra.mxu0 0.0
    %2496 = vmatprep.subr.mxu0 0.0
    %2497 = vmatpush1.msra.mxu0 0.0
    %2498 = vmatprep.subr.mxu0 0.0
    %2499 = vmatpush1.msra.mxu0 0.0
    %2500 = vmatprep.subr.mxu0 0.0
    %2501 = vmatpush1.msra.mxu0 0.0
    %2502 = vmatprep.subr.mxu0 0.0
    %2503 = vmatpush1.msra.mxu0 0.0
    %2504 = vmatprep.subr.mxu0 0.0
    %2505 = vmatpush1.msra.mxu0 0.0
    %2506 = vmatprep.mubr.f32.mxu0 0.0
    %2507 = vmatmul.mubr.f32.gmra.mrb[0].mxu0 %v2437
    %v2508 = vpop.f32.mrb[0].mxu0
    %v2509 = vadd.f32 %v2435, %v2508
    %v2510 = vpop.f32.mrb[0].mxu0
    %2511 = vmatprep.mubr.f32.mxu0 0.0
    %2512 = vmatmul.mubr.f32.gmra.mrb[0].mxu0 %v2440
    %v2513 = vpop.f32.mrb[0].mxu0
    %v2514 = vadd.f32 %v2435, %v2513
    %v2515 = vpop.f32.mrb[0].mxu0
    %2516 = vdwg.mxu0
    %v2517 = vadd.f32 %v2509, %v2309
    %v2518 = vadd.f32 %v2514, %v2310
    %v2519 = vsel %vm190, %v2517, 0.0
    %2520 = vadd.xlane.f32.xlu0 %v2519
    %v2521 = vpop.xlane.xlu0 %2520
    %v2522 = vsel %vm190, %v2518, 0.0
    %2523 = vadd.xlane.f32.xlu0 %v2522
    %v2524 = vpop.xlane.xlu0 %2523
    %v2525 = vmul.f32 %v2521, %v197
    %v2526 = vmul.f32 %v2524, %v197
    %v2527 = vsub.f32 %v2517, %v2525
    %v2528 = vsub.f32 %v2518, %v2526
    %v2529 = vmul.f32 %v2527, %v2527
    %v2530 = vmul.f32 %v2528, %v2528
    %v2531 = vsel %vm190, %v2529, 0.0
    %2532 = vadd.xlane.f32.xlu0 %v2531
    %v2533 = vpop.xlane.xlu0 %2532
    %v2534 = vsel %vm190, %v2530, 0.0
    %2535 = vadd.xlane.f32.xlu0 %v2534
    %v2536 = vpop.xlane.xlu0 %2535
    %v2537 = vmul.f32 %v2533, %v197
    %v2538 = vmul.f32 %v2536, %v197
    %v2539 = vadd.f32 %v2537, 1e-12
    %v2540 = vadd.f32 %v2538, 1e-12
    %v2541 = vrsqrt.pop %v2539
    %v2542 = vrsqrt.pop %v2540
    %v2543 = vmul.f32 %v2527, %v2541
    %v2544 = vmul.f32 %v2528, %v2542
    %v2545 = vlaneseq
    %v2546 = vshrl.u32 %v2545, 7
    %v2547 = vsub.s32 0, %v2546
    %v2548 = vrot.slane %v1396, %v2547
    %v2549 = vmul.f32 %v2543, %v2548
    %v2550 = vmul.f32 %v2544, %v2548
    %v2551 = vlaneseq
    %v2552 = vshrl.u32 %v2551, 7
    %v2553 = vsub.s32 0, %v2552
    %v2554 = vrot.slane %v1397, %v2553
    %v2555 = vadd.f32 %v2549, %v2554
    %v2556 = vadd.f32 %v2550, %v2554
    %v2557 = vlaneseq
    %v2558 = vshrl.u32 %v2557, 7
    %v2559 = vmul.u32 %v2558, 8
    %vm2560 = vcmp.eq.s32.totalorder %v55, %v2559
    %v2561 = vsel %vm2560, 1, 0
    %v2562 = vcvt.s32.f32 %v2561
    %v2564 = vsel %vm752, %v2562, 0
    %2566 = vmatprep.subr.mxu0 0.0
    %2567 = vmatpush1.msra.mxu0 %v2555
    %2568 = vmatprep.subr.mxu0 0.0
    %2569 = vmatpush1.msra.mxu0 %v2556
    %2570 = vmatprep.subr.mxu0 0.0
    %2571 = vmatpush1.msra.mxu0 0.0
    %2572 = vmatprep.subr.mxu0 0.0
    %2573 = vmatpush1.msra.mxu0 0.0
    %2574 = vmatprep.subr.mxu0 0.0
    %2575 = vmatpush1.msra.mxu0 0.0
    %2576 = vmatprep.subr.mxu0 0.0
    %2577 = vmatpush1.msra.mxu0 0.0
    %2578 = vmatprep.subr.mxu0 0.0
    %2579 = vmatpush1.msra.mxu0 0.0
    %2580 = vmatprep.subr.mxu0 0.0
    %2581 = vmatpush1.msra.mxu0 0.0
    %2582 = vmatprep.subr.mxu0 0.0
    %2583 = vmatpush1.msra.mxu0 0.0
    %2584 = vmatprep.subr.mxu0 0.0
    %2585 = vmatpush1.msra.mxu0 0.0
    %2586 = vmatprep.subr.mxu0 0.0
    %2587 = vmatpush1.msra.mxu0 0.0
    %2588 = vmatprep.subr.mxu0 0.0
    %2589 = vmatpush1.msra.mxu0 0.0
    %2590 = vmatprep.subr.mxu0 0.0
    %2591 = vmatpush1.msra.mxu0 0.0
    %2592 = vmatprep.subr.mxu0 0.0
    %2593 = vmatpush1.msra.mxu0 0.0
    %2594 = vmatprep.subr.mxu0 0.0
    %2595 = vmatpush1.msra.mxu0 0.0
    %2596 = vmatprep.subr.mxu0 0.0
    %2597 = vmatpush1.msra.mxu0 0.0
    %2598 = vmatprep.subr.mxu0 0.0
    %2599 = vmatpush1.msra.mxu0 0.0
    %2600 = vmatprep.subr.mxu0 0.0
    %2601 = vmatpush1.msra.mxu0 0.0
    %2602 = vmatprep.subr.mxu0 0.0
    %2603 = vmatpush1.msra.mxu0 0.0
    %2604 = vmatprep.subr.mxu0 0.0
    %2605 = vmatpush1.msra.mxu0 0.0
    %2606 = vmatprep.subr.mxu0 0.0
    %2607 = vmatpush1.msra.mxu0 0.0
    %2608 = vmatprep.subr.mxu0 0.0
    %2609 = vmatpush1.msra.mxu0 0.0
    %2610 = vmatprep.subr.mxu0 0.0
    %2611 = vmatpush1.msra.mxu0 0.0
    %2612 = vmatprep.subr.mxu0 0.0
    %2613 = vmatpush1.msra.mxu0 0.0
    %2614 = vmatprep.subr.mxu0 0.0
    %2615 = vmatpush1.msra.mxu0 0.0
    %2616 = vmatprep.subr.mxu0 0.0
    %2617 = vmatpush1.msra.mxu0 0.0
    %2618 = vmatprep.subr.mxu0 0.0
    %2619 = vmatpush1.msra.mxu0 0.0
    %2620 = vmatprep.subr.mxu0 0.0
    %2621 = vmatpush1.msra.mxu0 0.0
    %2622 = vmatprep.subr.mxu0 0.0
    %2623 = vmatpush1.msra.mxu0 0.0
    %2624 = vmatprep.subr.mxu0 0.0
    %2625 = vmatpush1.msra.mxu0 0.0
    %2626 = vmatprep.subr.mxu0 0.0
    %2627 = vmatpush1.msra.mxu0 0.0
    %2628 = vmatprep.subr.mxu0 0.0
    %2629 = vmatpush1.msra.mxu0 0.0
    %2630 = vmatprep.mubr.f32.mxu0 0.0
    %2631 = vmatmul.mubr.f32.gmra.mrb[0].mxu0 %v2564
    %v2632 = vpop.f32.mrb[0].mxu0
    %v2633 = vadd.f32 0.0, %v2632
    %v2634 = vpop.f32.mrb[0].mxu0
    %2635 = vdwg.mxu0
    %s2636 = scalar_lea.vmem %s7, 64
    %v2637 = vld [vmem:[%s2636] sm:$0xff]
    %v2638 = vld [vmem:[%s2636 + $0x8] sm:$0xff]
    %v2639 = vld [vmem:[%s2636 + $0x10] sm:$0xff]
    %v2640 = vld [vmem:[%s2636 + $0x18] sm:$0xff]
    %v2641 = vld [vmem:[%s5 + $0x14] sm:$0x1]
    %v2642 = vlaneseq
    %v2643 = vshrl.u32 %v2642, 7
    %v2644 = vsub.s32 0, %v2643
    %v2645 = vrot.slane %v2641, %v2644
    %v2647 = vsel %vm190, %v2633, 0
    %2649 = vmatprep.subr.mxu0 0.0
    %2650 = vmatpush1.msra.mxu0 %v2637
    %2651 = vmatprep.subr.mxu0 0.0
    %2652 = vmatpush1.msra.mxu0 %v2638
    %2653 = vmatprep.subr.mxu0 0.0
    %2654 = vmatpush1.msra.mxu0 %v2639
    %2655 = vmatprep.subr.mxu0 0.0
    %2656 = vmatpush1.msra.mxu0 %v2640
    %2657 = vmatprep.subr.mxu0 0.0
    %2658 = vmatpush1.msra.mxu0 0.0
    %2659 = vmatprep.subr.mxu0 0.0
    %2660 = vmatpush1.msra.mxu0 0.0
    %2661 = vmatprep.subr.mxu0 0.0
    %2662 = vmatpush1.msra.mxu0 0.0
    %2663 = vmatprep.subr.mxu0 0.0
    %2664 = vmatpush1.msra.mxu0 0.0
    %2665 = vmatprep.subr.mxu0 0.0
    %2666 = vmatpush1.msra.mxu0 0.0
    %2667 = vmatprep.subr.mxu0 0.0
    %2668 = vmatpush1.msra.mxu0 0.0
    %2669 = vmatprep.subr.mxu0 0.0
    %2670 = vmatpush1.msra.mxu0 0.0
    %2671 = vmatprep.subr.mxu0 0.0
    %2672 = vmatpush1.msra.mxu0 0.0
    %2673 = vmatprep.subr.mxu0 0.0
    %2674 = vmatpush1.msra.mxu0 0.0
    %2675 = vmatprep.subr.mxu0 0.0
    %2676 = vmatpush1.msra.mxu0 0.0
    %2677 = vmatprep.subr.mxu0 0.0
    %2678 = vmatpush1.msra.mxu0 0.0
    %2679 = vmatprep.subr.mxu0 0.0
    %2680 = vmatpush1.msra.mxu0 0.0
    %2681 = vmatprep.subr.mxu0 0.0
    %2682 = vmatpush1.msra.mxu0 0.0
    %2683 = vmatprep.subr.mxu0 0.0
    %2684 = vmatpush1.msra.mxu0 0.0
    %2685 = vmatprep.subr.mxu0 0.0
    %2686 = vmatpush1.msra.mxu0 0.0
    %2687 = vmatprep.subr.mxu0 0.0
    %2688 = vmatpush1.msra.mxu0 0.0
    %2689 = vmatprep.subr.mxu0 0.0
    %2690 = vmatpush1.msra.mxu0 0.0
    %2691 = vmatprep.subr.mxu0 0.0
    %2692 = vmatpush1.msra.mxu0 0.0
    %2693 = vmatprep.subr.mxu0 0.0
    %2694 = vmatpush1.msra.mxu0 0.0
    %2695 = vmatprep.subr.mxu0 0.0
    %2696 = vmatpush1.msra.mxu0 0.0
    %2697 = vmatprep.subr.mxu0 0.0
    %2698 = vmatpush1.msra.mxu0 0.0
    %2699 = vmatprep.subr.mxu0 0.0
    %2700 = vmatpush1.msra.mxu0 0.0
    %2701 = vmatprep.subr.mxu0 0.0
    %2702 = vmatpush1.msra.mxu0 0.0
    %2703 = vmatprep.subr.mxu0 0.0
    %2704 = vmatpush1.msra.mxu0 0.0
    %2705 = vmatprep.subr.mxu0 0.0
    %2706 = vmatpush1.msra.mxu0 0.0
    %2707 = vmatprep.subr.mxu0 0.0
    %2708 = vmatpush1.msra.mxu0 0.0
    %2709 = vmatprep.subr.mxu0 0.0
    %2710 = vmatpush1.msra.mxu0 0.0
    %2711 = vmatprep.subr.mxu0 0.0
    %2712 = vmatpush1.msra.mxu0 0.0
    %2713 = vmatprep.mubr.f32.mxu0 0.0
    %2714 = vmatmul.mubr.f32.gmra.mrb[0].mxu0 %v2647
    %v2715 = vpop.f32.mrb[0].mxu0
    %v2716 = vadd.f32 %v2645, %v2715
    %v2717 = vpop.f32.mrb[0].mxu0
    %2718 = vdwg.mxu0
    %v2719 = vtanh.pop %v2716
    %v2720 = vld [vmem:[%s11] sm:$0xff]
    %v2721 = vld [vmem:[%s11 + $0x8] sm:$0xff]
    %v2722 = vld [vmem:[%s11 + $0x10] sm:$0xff]
    %v2723 = vld [vmem:[%s11 + $0x18] sm:$0xff]
    %v2724 = vld [vmem:[%s12] sm:$0x1]
    %v2726 = vlaneseq
    %v2727 = vshrl.u32 %v2726, 7
    %v2728 = vsub.s32 0, %v2727
    %v2729 = vrot.slane %v2724, %v2728
    %v2732 = vsel %vm190, %v2555, 0
    %v2735 = vsel %vm190, %v2556, 0
    %2737 = vmatprep.subr.mxu0 0.0
    %2738 = vmatpush1.msra.mxu0 %v2720
    %2739 = vmatprep.subr.mxu0 0.0
    %2740 = vmatpush1.msra.mxu0 %v2721
    %2741 = vmatprep.subr.mxu0 0.0
    %2742 = vmatpush1.msra.mxu0 %v2722
    %2743 = vmatprep.subr.mxu0 0.0
    %2744 = vmatpush1.msra.mxu0 %v2723
    %2745 = vmatprep.subr.mxu0 0.0
    %2746 = vmatpush1.msra.mxu0 0.0
    %2747 = vmatprep.subr.mxu0 0.0
    %2748 = vmatpush1.msra.mxu0 0.0
    %2749 = vmatprep.subr.mxu0 0.0
    %2750 = vmatpush1.msra.mxu0 0.0
    %2751 = vmatprep.subr.mxu0 0.0
    %2752 = vmatpush1.msra.mxu0 0.0
    %2753 = vmatprep.subr.mxu0 0.0
    %2754 = vmatpush1.msra.mxu0 0.0
    %2755 = vmatprep.subr.mxu0 0.0
    %2756 = vmatpush1.msra.mxu0 0.0
    %2757 = vmatprep.subr.mxu0 0.0
    %2758 = vmatpush1.msra.mxu0 0.0
    %2759 = vmatprep.subr.mxu0 0.0
    %2760 = vmatpush1.msra.mxu0 0.0
    %2761 = vmatprep.subr.mxu0 0.0
    %2762 = vmatpush1.msra.mxu0 0.0
    %2763 = vmatprep.subr.mxu0 0.0
    %2764 = vmatpush1.msra.mxu0 0.0
    %2765 = vmatprep.subr.mxu0 0.0
    %2766 = vmatpush1.msra.mxu0 0.0
    %2767 = vmatprep.subr.mxu0 0.0
    %2768 = vmatpush1.msra.mxu0 0.0
    %2769 = vmatprep.subr.mxu0 0.0
    %2770 = vmatpush1.msra.mxu0 0.0
    %2771 = vmatprep.subr.mxu0 0.0
    %2772 = vmatpush1.msra.mxu0 0.0
    %2773 = vmatprep.subr.mxu0 0.0
    %2774 = vmatpush1.msra.mxu0 0.0
    %2775 = vmatprep.subr.mxu0 0.0
    %2776 = vmatpush1.msra.mxu0 0.0
    %2777 = vmatprep.subr.mxu0 0.0
    %2778 = vmatpush1.msra.mxu0 0.0
    %2779 = vmatprep.subr.mxu0 0.0
    %2780 = vmatpush1.msra.mxu0 0.0
    %2781 = vmatprep.subr.mxu0 0.0
    %2782 = vmatpush1.msra.mxu0 0.0
    %2783 = vmatprep.subr.mxu0 0.0
    %2784 = vmatpush1.msra.mxu0 0.0
    %2785 = vmatprep.subr.mxu0 0.0
    %2786 = vmatpush1.msra.mxu0 0.0
    %2787 = vmatprep.subr.mxu0 0.0
    %2788 = vmatpush1.msra.mxu0 0.0
    %2789 = vmatprep.subr.mxu0 0.0
    %2790 = vmatpush1.msra.mxu0 0.0
    %2791 = vmatprep.subr.mxu0 0.0
    %2792 = vmatpush1.msra.mxu0 0.0
    %2793 = vmatprep.subr.mxu0 0.0
    %2794 = vmatpush1.msra.mxu0 0.0
    %2795 = vmatprep.subr.mxu0 0.0
    %2796 = vmatpush1.msra.mxu0 0.0
    %2797 = vmatprep.subr.mxu0 0.0
    %2798 = vmatpush1.msra.mxu0 0.0
    %2799 = vmatprep.subr.mxu0 0.0
    %2800 = vmatpush1.msra.mxu0 0.0
    %2801 = vmatprep.mubr.f32.mxu0 0.0
    %2802 = vmatmul.mubr.f32.gmra.mrb[0].mxu0 %v2732
    %v2803 = vpop.f32.mrb[0].mxu0
    %v2804 = vadd.f32 %v2729, %v2803
    %v2805 = vpop.f32.mrb[0].mxu0
    %2806 = vmatprep.mubr.f32.mxu0 0.0
    %2807 = vmatmul.mubr.f32.gmra.mrb[0].mxu0 %v2735
    %v2808 = vpop.f32.mrb[0].mxu0
    %v2809 = vadd.f32 %v2729, %v2808
    %v2810 = vpop.f32.mrb[0].mxu0
    %2811 = vdwg.mxu0
    %s2812 = scalar_lea.vmem %s11, 32
    %v2813 = vld [vmem:[%s2812] sm:$0xff]
    %v2814 = vld [vmem:[%s2812 + $0x8] sm:$0xff]
    %v2815 = vld [vmem:[%s2812 + $0x10] sm:$0xff]
    %v2816 = vld [vmem:[%s2812 + $0x18] sm:$0xff]
    %s2817 = scalar_lea.vmem %s12, 1
    %v2818 = vld [vmem:[%s2817] sm:$0x1]
    %v2820 = vlaneseq
    %v2821 = vshrl.u32 %v2820, 7
    %v2822 = vsub.s32 0, %v2821
    %v2823 = vrot.slane %v2818, %v2822
    %v2826 = vsel %vm190, %v2719, 0
    %2828 = vmatprep.subr.mxu0 0.0
    %2829 = vmatpush1.msra.mxu0 %v2813
    %2830 = vmatprep.subr.mxu0 0.0
    %2831 = vmatpush1.msra.mxu0 %v2814
    %2832 = vmatprep.subr.mxu0 0.0
    %2833 = vmatpush1.msra.mxu0 %v2815
    %2834 = vmatprep.subr.mxu0 0.0
    %2835 = vmatpush1.msra.mxu0 %v2816
    %2836 = vmatprep.subr.mxu0 0.0
    %2837 = vmatpush1.msra.mxu0 0.0
    %2838 = vmatprep.subr.mxu0 0.0
    %2839 = vmatpush1.msra.mxu0 0.0
    %2840 = vmatprep.subr.mxu0 0.0
    %2841 = vmatpush1.msra.mxu0 0.0
    %2842 = vmatprep.subr.mxu0 0.0
    %2843 = vmatpush1.msra.mxu0 0.0
    %2844 = vmatprep.subr.mxu0 0.0
    %2845 = vmatpush1.msra.mxu0 0.0
    %2846 = vmatprep.subr.mxu0 0.0
    %2847 = vmatpush1.msra.mxu0 0.0
    %2848 = vmatprep.subr.mxu0 0.0
    %2849 = vmatpush1.msra.mxu0 0.0
    %2850 = vmatprep.subr.mxu0 0.0
    %2851 = vmatpush1.msra.mxu0 0.0
    %2852 = vmatprep.subr.mxu0 0.0
    %2853 = vmatpush1.msra.mxu0 0.0
    %2854 = vmatprep.subr.mxu0 0.0
    %2855 = vmatpush1.msra.mxu0 0.0
    %2856 = vmatprep.subr.mxu0 0.0
    %2857 = vmatpush1.msra.mxu0 0.0
    %2858 = vmatprep.subr.mxu0 0.0
    %2859 = vmatpush1.msra.mxu0 0.0
    %2860 = vmatprep.subr.mxu0 0.0
    %2861 = vmatpush1.msra.mxu0 0.0
    %2862 = vmatprep.subr.mxu0 0.0
    %2863 = vmatpush1.msra.mxu0 0.0
    %2864 = vmatprep.subr.mxu0 0.0
    %2865 = vmatpush1.msra.mxu0 0.0
    %2866 = vmatprep.subr.mxu0 0.0
    %2867 = vmatpush1.msra.mxu0 0.0
    %2868 = vmatprep.subr.mxu0 0.0
    %2869 = vmatpush1.msra.mxu0 0.0
    %2870 = vmatprep.subr.mxu0 0.0
    %2871 = vmatpush1.msra.mxu0 0.0
    %2872 = vmatprep.subr.mxu0 0.0
    %2873 = vmatpush1.msra.mxu0 0.0
    %2874 = vmatprep.subr.mxu0 0.0
    %2875 = vmatpush1.msra.mxu0 0.0
    %2876 = vmatprep.subr.mxu0 0.0
    %2877 = vmatpush1.msra.mxu0 0.0
    %2878 = vmatprep.subr.mxu0 0.0
    %2879 = vmatpush1.msra.mxu0 0.0
    %2880 = vmatprep.subr.mxu0 0.0
    %2881 = vmatpush1.msra.mxu0 0.0
    %2882 = vmatprep.subr.mxu0 0.0
    %2883 = vmatpush1.msra.mxu0 0.0
    %2884 = vmatprep.subr.mxu0 0.0
    %2885 = vmatpush1.msra.mxu0 0.0
    %2886 = vmatprep.subr.mxu0 0.0
    %2887 = vmatpush1.msra.mxu0 0.0
    %2888 = vmatprep.subr.mxu0 0.0
    %2889 = vmatpush1.msra.mxu0 0.0
    %2890 = vmatprep.subr.mxu0 0.0
    %2891 = vmatpush1.msra.mxu0 0.0
    %2892 = vmatprep.mubr.f32.mxu0 0.0
    %2893 = vmatmul.mubr.f32.gmra.mrb[0].mxu0 %v2826
    %v2894 = vpop.f32.mrb[0].mxu0
    %v2895 = vadd.f32 %v2823, %v2894
    %v2896 = vpop.f32.mrb[0].mxu0
    %2897 = vdwg.mxu0
    %2898 = vst [vmem:[#allocation2] sm:$0xff] %v2804
    %2899 = vst [vmem:[#allocation2 + $0x8] sm:$0xff] %v2809
    %2900 = vst [vmem:[#allocation5] sm:$0x3] %v2895
    %2901 = vmax.xlane.f32.xlu0 %v2804
    %v2902 = vpop.xlane.xlu0 %2901
    %2903 = vmax.xlane.f32.xlu0 %v2809
    %v2904 = vpop.xlane.xlu0 %2903
    %v2905 = vsub.f32 %v2804, %v2902
    %v2906 = vsub.f32 %v2809, %v2904
    %v2907 = vmul.f32 %v2905, 1.442695
    %v2908 = vpow.pop %v2907
    %v2909 = vmul.f32 %v2906, 1.442695
    %v2910 = vpow.pop %v2909
    %2911 = vadd.xlane.f32.xlu0 %v2908
    %v2912 = vpop.xlane.xlu0 %2911
    %2913 = vadd.xlane.f32.xlu0 %v2910
    %v2914 = vpop.xlane.xlu0 %2913
    %v2915 = vlog2.pop %v2912
    %v2916 = vmul.f32 %v2915, 0.6931472
    %v2917 = vlog2.pop %v2914
    %v2918 = vmul.f32 %v2917, 0.6931472
    %v2919 = vadd.f32 %v2916, %v2902
    %v2920 = vadd.f32 %v2918, %v2904
    %2921 = vset.pattern.permute.xlu0 2
    %2922 = vperm.xlu0 %2921, %v50
    %v2923 = vpop.permute.xlu0 %2922
    %2924 = vset.pattern.permute.xlu0 2
    %2925 = vperm.xlu0 %2924, %v51
    %v2926 = vpop.permute.xlu0 %2925
    %vm2927 = vcmp.eq.s32.totalorder %v55, %v2923
    %vm2928 = vcmp.eq.s32.totalorder %v55, %v2926
    %v2929 = vsel %vm2927, %v2804, 0.0
    %v2930 = vsel %vm2928, %v2809, 0.0
    %2931 = vadd.xlane.f32.xlu0 %v2929
    %v2932 = vpop.xlane.xlu0 %2931
    %2933 = vadd.xlane.f32.xlu0 %v2930
    %v2934 = vpop.xlane.xlu0 %2933
    %vm2935 = vcmp.ge.s32.totalorder %v50, 0
    %vm2936 = vcmp.ge.s32.totalorder %v51, 0
    %v2937 = vsel %vm2935, 1, 0
    %v2938 = vsel %vm2936, 1, 0
    %v2939 = vcvt.s32.f32 %v2937
    %v2940 = vcvt.s32.f32 %v2938
    %v2941 = vsub.f32 %v2919, %v2932
    %v2942 = vsub.f32 %v2920, %v2934
    %v2943 = vmul.f32 %v2941, %v2939
    %v2944 = vmul.f32 %v2942, %v2940
    %2947 = vrot.lane.b32.xlu0 %v2943, 126
    %v2948 = vpop.permute.xlu0 %2947
    %2949 = vrot.lane.b32.xlu0 %v2944, 126
    %v2950 = vpop.permute.xlu0 %2949
    %vm2953 = vcmask 7168
    %v2954 = vsel %vm2953, %v2948, 0.0
    %v2955 = vsel %vm2953, %v2950, 0.0
    %v2956 = vadd.f32 %v2954, %v2955
    %2957 = vadd.xlane.f32.xlu0 %v2956
    %v2958 = vpop.xlane.xlu0 %2957
    %v2959 = vrot.slane %v2958, 4
    %v2960 = vadd.f32 %v2958, %v2959
    %v2961 = vrot.slane %v2960, 2
    %v2962 = vadd.f32 %v2960, %v2961
    %v2963 = vrot.slane %v2962, 1
    %v2964 = vadd.f32 %v2962, %v2963
    %s2965 = vtos %v2964
    %2968 = vrot.lane.b32.xlu0 %v2939, 126
    %v2969 = vpop.permute.xlu0 %2968
    %2970 = vrot.lane.b32.xlu0 %v2940, 126
    %v2971 = vpop.permute.xlu0 %2970
    %v2974 = vsel %vm2953, %v2969, 0.0
    %v2975 = vsel %vm2953, %v2971, 0.0
    %v2976 = vadd.f32 %v2974, %v2975
    %2977 = vadd.xlane.f32.xlu0 %v2976
    %v2978 = vpop.xlane.xlu0 %2977
    %v2979 = vrot.slane %v2978, 4
    %v2980 = vadd.f32 %v2978, %v2979
    %v2981 = vrot.slane %v2980, 2
    %v2982 = vadd.f32 %v2980, %v2981
    %v2983 = vrot.slane %v2982, 1
    %v2984 = vadd.f32 %v2982, %v2983
    %s2985 = vtos %v2984
    %s2986 = smax.f32 %s2985, 1.0
    %v2987 = vstv %s2986
    %v2988 = vrcp.pop %v2987
    %s2989 = vtos %v2988
    %s2990 = smul.f32 %s2965, %s2989
    %v2991 = vld [vmem:[%s1] sm:$0x3]
    %vm2992 = vcmask 1041408
    %v2993 = vsel %vm2992, %v2895, -inf
    %2994 = vmax.xlane.f32.xlu0 %v2993
    %v2995 = vpop.xlane.xlu0 %2994
    %v2996 = vsub.f32 %v2895, %v2995
    %v2997 = vmul.f32 %v2996, 1.442695
    %v2998 = vpow.pop %v2997
    %v2999 = vsel %vm2992, %v2998, 0.0
    %3000 = vadd.xlane.f32.xlu0 %v2999
    %v3001 = vpop.xlane.xlu0 %3000
    %v3002 = vlog2.pop %v3001
    %v3003 = vmul.f32 %v3002, 0.6931472
    %v3004 = vadd.f32 %v3003, %v2995
    %3005 = vset.pattern.permute.xlu0 0
    %3006 = vperm.xlu0 %3005, %v2991
    %v3007 = vpop.permute.xlu0 %3006
    %vm3008 = vcmp.eq.s32.totalorder %v55, %v3007
    %v3009 = vsel %vm3008, %v2895, 0.0
    %v3010 = vsel %vm2992, %v3009, 0.0
    %3011 = vadd.xlane.f32.xlu0 %v3010
    %v3012 = vpop.xlane.xlu0 %3011
    %vm3013 = vcmp.ge.s32.totalorder %v2991, 0
    %v3014 = vsel %vm3013, 1, 0
    %v3015 = vcvt.s32.f32 %v3014
    %v3016 = vsub.f32 %v3004, %v3012
    %v3017 = vmul.f32 %v3016, %v3015
    %vm3018 = vcmask 1024
    %v3019 = vsel %vm3018, %v3017, 0.0
    %3020 = vadd.xlane.f32.xlu0 %v3019
    %v3021 = vpop.xlane.xlu0 %3020
    %v3022 = vrot.slane %v3021, 4
    %v3023 = vadd.f32 %v3021, %v3022
    %v3024 = vrot.slane %v3023, 2
    %v3025 = vadd.f32 %v3023, %v3024
    %v3026 = vrot.slane %v3025, 1
    %v3027 = vadd.f32 %v3025, %v3026
    %s3028 = vtos %v3027
    %v3029 = vsel %vm3018, %v3015, 0.0
    %3030 = vadd.xlane.f32.xlu0 %v3029
    %v3031 = vpop.xlane.xlu0 %3030
    %v3032 = vrot.slane %v3031, 4
    %v3033 = vadd.f32 %v3031, %v3032
    %v3034 = vrot.slane %v3033, 2
    %v3035 = vadd.f32 %v3033, %v3034
    %v3036 = vrot.slane %v3035, 1
    %v3037 = vadd.f32 %v3035, %v3036
    %s3038 = vtos %v3037
    %s3039 = smax.f32 %s3038, 1.0
    %v3040 = vstv %s3039
    %v3041 = vrcp.pop %v3040
    %s3042 = vtos %v3041
    %s3043 = smul.f32 %s3028, %s3042
    %s3044 = sadd.f32 %s2990, %s3043
    %s3045 = scalar_lea.smem [#allocation7], 0
    %3046 = sst [smem:[%s3045]] %s3044
    // Predicated region
    $region54: #{ehr_bert_pretrain.1} parent=1 // pred_check
      _
    $region55: #{ehr_bert_pretrain.1} parent=1 // pred_check_branch
      %3048 = sbr.rel (0) target = $region57
    $region56: #{ehr_bert_pretrain.1} parent=1 // pred_region
      %s3050 = ssub.s32 256, 256
      %3051 = vsyncadd [#allocation3], %s3050
      %s3052 = sshll.u32 [#allocation2], 4
      %s3053 = int_to_ptr.vmem [resolvable:$true] %s3052
      %3058 = dma.vmem_to_hbm [thread:$0]  %s3053, 256, %s13, [#allocation3], 128, 128, 8
    $region57: #{ehr_bert_pretrain.1} parent=1 // pred_fallthru
      _
    // Predicated region
    $region58: #{ehr_bert_pretrain.1} parent=1 // pred_check
      _
    $region59: #{ehr_bert_pretrain.1} parent=1 // pred_check_branch
      %3060 = sbr.rel (0) target = $region61
    $region60: #{ehr_bert_pretrain.1} parent=1 // pred_region
      %s3062 = ssub.s32 32, 32
      %3063 = vsyncadd [#allocation6], %s3062
      %s3065 = sshll.u32 [#allocation5], 4
      %s3066 = int_to_ptr.vmem [resolvable:$true] %s3065
      %3068 = dma.vmem_to_hbm [thread:$0]  %s3066, 32, %s14, [#allocation6]
    $region61: #{ehr_bert_pretrain.1} parent=1 // pred_fallthru
      _
    // Predicated region
    $region62: #{ehr_bert_pretrain.1} parent=1 // pred_check
      _
    $region63: #{ehr_bert_pretrain.1} parent=1 // pred_check_branch
      %3070 = sbr.rel (0) target = $region65
    $region64: #{ehr_bert_pretrain.1} parent=1 // pred_region
      %s3072 = ssub.s32 16, 16
      %3073 = vsyncadd [#allocation4], %s3072
      %3076 = dma.smem_to_hbm [#allocation7], 16, %s15, [#allocation4]
    $region65: #{ehr_bert_pretrain.1} parent=1 // pred_fallthru
      _
    // Predicated region
    $region66: #{ehr_bert_pretrain.1} parent=1 // pred_check
      _
    $region67: #{ehr_bert_pretrain.1} parent=1 // pred_check_branch
      %3078 = sbr.rel (0) target = $region69
    $region68: #{ehr_bert_pretrain.1} parent=1 // pred_region
      %3079 = dma.done [#allocation3], 256
    $region69: #{ehr_bert_pretrain.1} parent=1 // pred_fallthru
      _
    // Predicated region
    $region70: #{ehr_bert_pretrain.1} parent=1 // pred_check
      _
    $region71: #{ehr_bert_pretrain.1} parent=1 // pred_check_branch
      %3081 = sbr.rel (0) target = $region73
    $region72: #{ehr_bert_pretrain.1} parent=1 // pred_region
      %3082 = dma.done [#allocation6], 32
    $region73: #{ehr_bert_pretrain.1} parent=1 // pred_fallthru
      _
    // Predicated region
    $region74: #{ehr_bert_pretrain.1} parent=1 // pred_check
      _
    $region75: #{ehr_bert_pretrain.1} parent=1 // pred_check_branch
      %3084 = sbr.rel (0) target = $region77
    $region76: #{ehr_bert_pretrain.1} parent=1 // pred_region
      %3085 = dma.done [#allocation4], 16
    $region77: #{ehr_bert_pretrain.1} parent=1 // pred_fallthru
      _
    %3086 = sfence
    %3087 = vsyncpa [#allocation3], 1
    %3088 = vsyncpa [#allocation6], 1
    %3089 = vsyncpa [#allocation4], 1

</llo_original>
